<compile_context>
chip_gen: v6e
topology: v6e:2x2x1
jax: 0.10.0
libtpu: 0.0.40
codegen_flags: <defaults>
</compile_context>

<pallas_src>
import numpy as np
import jax
import jax.numpy as jnp
from jax import lax
from jax.experimental import pallas as pl
from jax.experimental.pallas import tpu as pltpu

N_X = 2                 # RLC states: [v_C, i_L]
N_U = 1                 # input voltage
N_FEAT = 64             # hidden width of the neural state-space model
LANES = 128             # lane width of every vector row used in the kernel
GROUP = 8               # inner unroll / aligned uproj tile height
ROWS = 8                # 128-step lane-dense output rows per grid invocation
CHUNK = ROWS * LANES    # 1024 time steps per grid invocation


def rlc_ss_kernel(u_ref, w1x_ref, w1u_ref, b1_ref, w2_ref,
                  y_ref, uproj_ref, xstate_ref):
    c = pl.program_id(0)

    @pl.when(c == 0)
    def _init():
        xstate_ref[...] = jnp.zeros_like(xstate_ref)        # x_0 = 0 (lane-replicated)

    # Hoist the input half of the first linear layer out of the recurrence:
    #   uproj[t] = u_t * W1_u + b1   -> (CHUNK, LANES); one chunk-level broadcast-mul,
    # completely off the per-step critical path.  Lane 64 of b1 is 1.0 (and lane 64 of
    # W1_u is 0), so h's lane 64 is always 1.0 -> the lane reduce against W2 (whose lane
    # 64 holds b2) folds the output bias in for free.
    u_col = u_ref[0]                                        # (CHUNK, 1)  (lane-sparse, but
    uproj_ref[...] = u_col * w1u_ref[...] + b1_ref[...]     #  read once per 1024 steps)

    # Per-state lane-dense weight rows (static sublane slices, done once per chunk).
    w1x0 = w1x_ref[0:1, :]                                  # (1, LANES)
    w1x1 = w1x_ref[1:2, :]
    w2_0 = w2_ref[0:1, :]
    w2_1 = w2_ref[1:2, :]

    lane = lax.broadcasted_iota(jnp.int32, (1, LANES), 1)

    # Lane-replicated carried state (all 128 lanes hold the scalar).
    x0 = xstate_ref[0:1, :]
    x1 = xstate_ref[1:2, :]

    groups_per_row = LANES // GROUP                          # 16

    for r in range(ROWS):                                    # static: one dense store / row
        base = r * LANES

        def group_body(g, carry, base=base):
            x0, x1, y_row = carry
            g_start = pl.multiple_of(base + g * GROUP, GROUP)
            up_g = uproj_ref[pl.ds(g_start, GROUP), :]       # one aligned (8,128) load
            for i in range(GROUP):                           # static 8-step unroll
                # y[t] = x_t[0] (before the update): x0 is already 128 lanes wide,
                # so this is a single cmp + select (no broadcast, no masked store).
                y_row = jnp.where(lane == g * GROUP + i, x0, y_row)
                # h = relu(x0*W1_x0 + x1*W1_x1 + uproj[t])        — VPU only
                h = jnp.maximum(x0 * w1x0 + x1 * w1x1 + up_g[i:i + 1, :], 0.0)
                # dx_j = <h, W2_j> (+ b2_j via the bias lane), replicated over lanes.
                # The two reduce->broadcast chains are independent (2 XLUs overlap them).
                dx0 = jnp.broadcast_to(
                    jnp.sum(h * w2_0, axis=1, keepdims=True), (1, LANES))
                dx1 = jnp.broadcast_to(
                    jnp.sum(h * w2_1, axis=1, keepdims=True), (1, LANES))
                x0 = x0 + dx0
                x1 = x1 + dx1
            return x0, x1, y_row

        y0 = jnp.zeros((1, LANES), jnp.float32)
        x0, x1, y_row = lax.fori_loop(0, groups_per_row, group_body, (x0, x1, y0))
        y_ref[0, r:r + 1, :] = y_row                         # full 128-lane unmasked store

    # Carry the state to the next time chunk.  NOTE: zero-padded tail steps keep
    # evolving this state past n_steps; harmless because only y[:n_steps] is returned.
    xstate_ref[0:1, :] = x0
    xstate_ref[1:2, :] = x1


def state_space_wrapper_forward(u_in, W1, b1, W2, b2):
    """Pallas version of StateSpaceWrapper.forward: y_out = x_sim[:, [0]]."""
    n_steps = u_in.shape[0]
    n_chunks = int(pl.cdiv(n_steps, CHUNK))
    n_pad = n_chunks * CHUNK

    # Zero-pad the input to a multiple of CHUNK; padded steps only produce y values
    # past n_steps, which are sliced away below (y[k] depends only on u[0..k-1]).
    u_flat = jnp.asarray(u_in, jnp.float32).reshape(n_steps)
    u_blocks = jnp.pad(u_flat, (0, n_pad - n_steps)).reshape(n_chunks, CHUNK, 1)

    W1 = jnp.asarray(W1, jnp.float32)
    b1 = jnp.asarray(b1, jnp.float32)
    W2 = jnp.asarray(W2, jnp.float32)
    b2 = jnp.asarray(b2, jnp.float32)

    # Lane-dense per-state weight rows, zero-padded from 64 to 128 lanes.
    # Lane N_FEAT (=64) is the "bias lane": b1 gets 1.0 there (so h[64] == 1 always)
    # and each W2 row gets b2[j] there, folding the output bias into the lane reduce.
    w1x_pad = jnp.zeros((N_X, LANES), jnp.float32).at[:, :N_FEAT].set(W1[:, :N_X].T)
    w1u_pad = jnp.zeros((1, LANES), jnp.float32).at[:, :N_FEAT].set(W1[:, N_X:].T)
    b1_pad = (jnp.zeros((1, LANES), jnp.float32)
              .at[0, :N_FEAT].set(b1)
              .at[0, N_FEAT].set(1.0))
    w2_pad = (jnp.zeros((N_X, LANES), jnp.float32)
              .at[:, :N_FEAT].set(W2)
              .at[:, N_FEAT].set(b2))

    y_blocks = pl.pallas_call(
        rlc_ss_kernel,
        out_shape=jax.ShapeDtypeStruct((n_chunks, ROWS, LANES), jnp.float32),
        grid_spec=pltpu.PrefetchScalarGridSpec(
            num_scalar_prefetch=0,
            grid=(n_chunks,),
            in_specs=[
                pl.BlockSpec((1, CHUNK, 1), lambda c: (c, 0, 0)),     # u (time chunk)
                pl.BlockSpec((N_X, LANES), lambda c: (0, 0)),         # W1_x rows (padded)
                pl.BlockSpec((1, LANES), lambda c: (0, 0)),           # W1_u row (padded)
                pl.BlockSpec((1, LANES), lambda c: (0, 0)),           # b1 (+ bias lane)
                pl.BlockSpec((N_X, LANES), lambda c: (0, 0)),         # W2 rows (+ b2 lane)
            ],
            out_specs=pl.BlockSpec((1, ROWS, LANES), lambda c: (c, 0, 0)),
            scratch_shapes=[
                pltpu.VMEM((CHUNK, LANES), jnp.float32),   # hoisted uproj for the chunk
                pltpu.VMEM((N_X, LANES), jnp.float32),     # lane-replicated carried state
            ],
        ),
        compiler_params=pltpu.CompilerParams(
            dimension_semantics=("arbitrary",)),   # sequential recurrence across chunks
    )(u_blocks, w1x_pad, w1u_pad, b1_pad, w2_pad)

    return y_blocks.reshape(n_pad, 1)[:n_steps]


def reference_forward(u_in, W1, b1, W2, b2):
    """Pure-JAX reference (mirrors the PyTorch module semantics)."""
    W1 = jnp.asarray(W1, jnp.float32)
    b1 = jnp.asarray(b1, jnp.float32)
    W2 = jnp.asarray(W2, jnp.float32)
    b2 = jnp.asarray(b2, jnp.float32)

    def step_fn(x, u_k):
        xu = jnp.concatenate([x, u_k[None, :]], axis=1)   # (1, n_x + n_u)
        h = jnp.maximum(xu @ W1.T + b1, 0.0)
        dx = h @ W2.T + b2
        return x + dx, x[0, 0]

    x0 = jnp.zeros((1, N_X), dtype=jnp.float32)
    _, ys = lax.scan(step_fn, x0, jnp.asarray(u_in, jnp.float32))
    return ys[:, None]                                    # (N, 1)


if __name__ == "__main__":
    key = jax.random.PRNGKey(0)
    k_u, k_u2, k_w1, k_b1, k_w2, k_b2 = jax.random.split(key, 6)

    # Shapes from NeuralStateSpaceModel: Linear(n_x+n_u=3, 64) -> ReLU -> Linear(64, 2).
    W1 = 0.1 * jax.random.normal(k_w1, (N_FEAT, N_X + N_U), dtype=jnp.float32)
    b1 = 0.01 * jax.random.normal(k_b1, (N_FEAT,), dtype=jnp.float32)
    W2 = 0.002 * jax.random.normal(k_w2, (N_X, N_FEAT), dtype=jnp.float32)
    b2 = 0.001 * jax.random.normal(k_b2, (N_X,), dtype=jnp.float32)

    # Primary small test (seq = 8): single time chunk.
    N = 8
    u_in = jax.random.normal(k_u, (N, N_U), dtype=jnp.float32)
    y = jax.block_until_ready(state_space_wrapper_forward(u_in, W1, b1, W2, b2))
    y_ref = jax.block_until_ready(reference_forward(u_in, W1, b1, W2, b2))
    assert y.shape == (N, 1) and y.dtype == jnp.float32
    np.testing.assert_allclose(np.asarray(y), np.asarray(y_ref), rtol=1e-4, atol=1e-5)

    # Secondary check: multiple time chunks (exercises the cross-chunk state carry).
    N2 = 2200
    u_in2 = jax.random.normal(k_u2, (N2, N_U), dtype=jnp.float32)
    y2 = jax.block_until_ready(state_space_wrapper_forward(u_in2, W1, b1, W2, b2))
    y2_ref = jax.block_until_ready(reference_forward(u_in2, W1, b1, W2, b2))
    assert y2.shape == (N2, 1)
    np.testing.assert_allclose(np.asarray(y2), np.asarray(y2_ref), rtol=5e-4, atol=5e-5)

    print("KERNEL_OK")
</pallas_src>

<mosaic_0001>
module attributes {stable_mosaic.version = 11 : i64} {
  func.func @rlc_ss_kernel(%arg0: i32, %arg1: memref<1x1024x1xf32, #tpu.memory_space<vmem>>, %arg2: memref<2x128xf32, #tpu.memory_space<vmem>>, %arg3: memref<1x128xf32, #tpu.memory_space<vmem>>, %arg4: memref<1x128xf32, #tpu.memory_space<vmem>>, %arg5: memref<2x128xf32, #tpu.memory_space<vmem>>, %arg6: memref<1x8x128xf32, #tpu.memory_space<vmem>>, %arg7: memref<1024x128xf32, #tpu.memory_space<vmem>>, %arg8: memref<2x128xf32, #tpu.memory_space<vmem>>) attributes {dimension_semantics = [#tpu.dimension_semantics<arbitrary>], iteration_bounds = array<i64: 1>, scalar_prefetch = 0 : i64, scratch_operands = 2 : i64, tpu.core_type = #tpu.core_type<tc>, window_params = [{transform_indices = @transform_0, window_bounds = array<i64: 1, 1024, 1>}, {pipeline_mode = #tpu.pipeline_mode<synchronous>, transform_indices = @transform_1, window_bounds = array<i64: 2, 128>}, {pipeline_mode = #tpu.pipeline_mode<synchronous>, transform_indices = @transform_2, window_bounds = array<i64: 1, 128>}, {pipeline_mode = #tpu.pipeline_mode<synchronous>, transform_indices = @transform_3, window_bounds = array<i64: 1, 128>}, {pipeline_mode = #tpu.pipeline_mode<synchronous>, transform_indices = @transform_4, window_bounds = array<i64: 2, 128>}, {transform_indices = @transform_5, window_bounds = array<i64: 1, 8, 128>}]} {
    %c0_i32 = arith.constant 0 : i32
    %0 = arith.cmpi eq, %arg0, %c0_i32 : i32
    %1 = arith.extui %0 : i1 to i32
    %c0_i32_0 = arith.constant 0 : i32
    %2 = arith.cmpi ne, %1, %c0_i32_0 : i32
    scf.if %2 {
      %cst_79 = arith.constant 0.000000e+00 : f32
      %70 = vector.broadcast %cst_79 : f32 to vector<2x128xf32>
      %c0_80 = arith.constant 0 : index
      %c0_81 = arith.constant 0 : index
      %71 = vector.load %arg8[%c0_80, %c0_81] : memref<2x128xf32, #tpu.memory_space<vmem>>, vector<2x128xf32>
      tpu.vector_store %arg8[%c0_80, %c0_81], %70 {strides = array<i32>} : memref<2x128xf32, #tpu.memory_space<vmem>>, vector<2x128xf32>,
    } else {
    }
    %c0 = arith.constant 0 : index
    %c0_1 = arith.constant 0 : index
    %c0_2 = arith.constant 0 : index
    %3 = vector.load %arg1[%c0, %c0_1, %c0_2] : memref<1x1024x1xf32, #tpu.memory_space<vmem>>, vector<1x1024x1xf32>
    %4 = vector.shape_cast %3 : vector<1x1024x1xf32> to vector<1024x1xf32>
    %c0_3 = arith.constant 0 : index
    %c0_4 = arith.constant 0 : index
    %5 = vector.load %arg3[%c0_3, %c0_4] : memref<1x128xf32, #tpu.memory_space<vmem>>, vector<1x128xf32>
    %6 = vector.broadcast %4 : vector<1024x1xf32> to vector<1024x128xf32>
    %7 = vector.broadcast %5 : vector<1x128xf32> to vector<1024x128xf32>
    %8 = arith.mulf %6, %7 : vector<1024x128xf32>
    %c0_5 = arith.constant 0 : index
    %c0_6 = arith.constant 0 : index
    %9 = vector.load %arg4[%c0_5, %c0_6] : memref<1x128xf32, #tpu.memory_space<vmem>>, vector<1x128xf32>
    %10 = vector.broadcast %9 : vector<1x128xf32> to vector<1024x128xf32>
    %11 = arith.addf %8, %10 : vector<1024x128xf32>
    %c0_7 = arith.constant 0 : index
    %c0_8 = arith.constant 0 : index
    %12 = vector.load %arg7[%c0_7, %c0_8] : memref<1024x128xf32, #tpu.memory_space<vmem>>, vector<1024x128xf32>
    tpu.vector_store %arg7[%c0_7, %c0_8], %11 {strides = array<i32>} : memref<1024x128xf32, #tpu.memory_space<vmem>>, vector<1024x128xf32>,
    %c0_9 = arith.constant 0 : index
    %c0_10 = arith.constant 0 : index
    %13 = vector.load %arg2[%c0_9, %c0_10] : memref<2x128xf32, #tpu.memory_space<vmem>>, vector<1x128xf32>
    %c1 = arith.constant 1 : index
    %c0_11 = arith.constant 0 : index
    %14 = vector.load %arg2[%c1, %c0_11] : memref<2x128xf32, #tpu.memory_space<vmem>>, vector<1x128xf32>
    %c0_12 = arith.constant 0 : index
    %c0_13 = arith.constant 0 : index
    %15 = vector.load %arg5[%c0_12, %c0_13] : memref<2x128xf32, #tpu.memory_space<vmem>>, vector<1x128xf32>
    %c1_14 = arith.constant 1 : index
    %c0_15 = arith.constant 0 : index
    %16 = vector.load %arg5[%c1_14, %c0_15] : memref<2x128xf32, #tpu.memory_space<vmem>>, vector<1x128xf32>
    %17 = tpu.iota {dimensions = array<i32: 1>} : vector<1x128xi32>
    %c0_16 = arith.constant 0 : index
    %c0_17 = arith.constant 0 : index
    %18 = vector.load %arg8[%c0_16, %c0_17] : memref<2x128xf32, #tpu.memory_space<vmem>>, vector<1x128xf32>
    %c1_18 = arith.constant 1 : index
    %c0_19 = arith.constant 0 : index
    %19 = vector.load %arg8[%c1_18, %c0_19] : memref<2x128xf32, #tpu.memory_space<vmem>>, vector<1x128xf32>
    %cst = arith.constant 0.000000e+00 : f32
    %20 = vector.broadcast %cst : f32 to vector<1x128xf32>
    %c0_i32_20 = arith.constant 0 : i32
    %c16_i32 = arith.constant 16 : i32
    %21 = arith.addi %c0_i32_20, %c16_i32 : i32
    %c1_i32 = arith.constant 1 : i32
    %22:3 = scf.for %arg9 = %c0_i32_20 to %21 step %c1_i32 iter_args(%arg10 = %18, %arg11 = %19, %arg12 = %20) -> (vector<1x128xf32>, vector<1x128xf32>, vector<1x128xf32>)  : i32 {
      %c8_i32 = arith.constant 8 : i32
      %70 = arith.muli %arg9, %c8_i32 : i32
      %c0_i32_79 = arith.constant 0 : i32
      %71 = arith.addi %c0_i32_79, %70 : i32
      %72 = tpu.assume_multiple %71, 8 : i32
      %73 = arith.index_cast %72 : i32 to index
      %c0_80 = arith.constant 0 : index
      %74 = vector.load %arg7[%73, %c0_80] : memref<1024x128xf32, #tpu.memory_space<vmem>>, vector<8x128xf32>
      %c8_i32_81 = arith.constant 8 : i32
      %75 = arith.muli %arg9, %c8_i32_81 : i32
      %c0_i32_82 = arith.constant 0 : i32
      %76 = arith.addi %75, %c0_i32_82 : i32
      %77 = vector.broadcast %76 : i32 to vector<1x128xi32>
      %78 = arith.cmpi eq, %17, %77 : vector<1x128xi32>
      %79 = arith.select %78, %arg10, %arg12 : vector<1x128xi1>, vector<1x128xf32>
      %80 = arith.mulf %arg10, %13 : vector<1x128xf32>
      %81 = arith.mulf %arg11, %14 : vector<1x128xf32>
      %82 = arith.addf %80, %81 : vector<1x128xf32>
      %83 = vector.extract_strided_slice %74 {offsets = [0, 0], sizes = [1, 128], strides = [1, 1]} : vector<8x128xf32> to vector<1x128xf32>
      %84 = arith.addf %82, %83 : vector<1x128xf32>
      %cst_83 = arith.constant 0.000000e+00 : f32
      %85 = vector.broadcast %cst_83 : f32 to vector<1x128xf32>
      %86 = arith.maximumf %84, %85 : vector<1x128xf32>
      %87 = arith.mulf %86, %15 : vector<1x128xf32>
      %cst_84 = arith.constant dense<0.000000e+00> : vector<1xf32>
      %88 = vector.multi_reduction <add>, %87, %cst_84 [1] : vector<1x128xf32> to vector<1xf32>
      %89 = vector.shape_cast %88 : vector<1xf32> to vector<1x1xf32>
      %90 = vector.shape_cast %89 : vector<1x1xf32> to vector<1x1xf32>
      %91 = vector.broadcast %90 : vector<1x1xf32> to vector<1x128xf32>
      %92 = arith.mulf %86, %16 : vector<1x128xf32>
      %cst_85 = arith.constant dense<0.000000e+00> : vector<1xf32>
      %93 = vector.multi_reduction <add>, %92, %cst_85 [1] : vector<1x128xf32> to vector<1xf32>
      %94 = vector.shape_cast %93 : vector<1xf32> to vector<1x1xf32>
      %95 = vector.shape_cast %94 : vector<1x1xf32> to vector<1x1xf32>
      %96 = vector.broadcast %95 : vector<1x1xf32> to vector<1x128xf32>
      %97 = arith.addf %arg10, %91 : vector<1x128xf32>
      %98 = arith.addf %arg11, %96 : vector<1x128xf32>
      %c8_i32_86 = arith.constant 8 : i32
      %99 = arith.muli %arg9, %c8_i32_86 : i32
      %c1_i32_87 = arith.constant 1 : i32
      %100 = arith.addi %99, %c1_i32_87 : i32
      %101 = vector.broadcast %100 : i32 to vector<1x128xi32>
      %102 = arith.cmpi eq, %17, %101 : vector<1x128xi32>
      %103 = arith.select %102, %97, %79 : vector<1x128xi1>, vector<1x128xf32>
      %104 = arith.mulf %97, %13 : vector<1x128xf32>
      %105 = arith.mulf %98, %14 : vector<1x128xf32>
      %106 = arith.addf %104, %105 : vector<1x128xf32>
      %107 = vector.extract_strided_slice %74 {offsets = [1, 0], sizes = [1, 128], strides = [1, 1]} : vector<8x128xf32> to vector<1x128xf32>
      %108 = arith.addf %106, %107 : vector<1x128xf32>
      %cst_88 = arith.constant 0.000000e+00 : f32
      %109 = vector.broadcast %cst_88 : f32 to vector<1x128xf32>
      %110 = arith.maximumf %108, %109 : vector<1x128xf32>
      %111 = arith.mulf %110, %15 : vector<1x128xf32>
      %cst_89 = arith.constant dense<0.000000e+00> : vector<1xf32>
      %112 = vector.multi_reduction <add>, %111, %cst_89 [1] : vector<1x128xf32> to vector<1xf32>
      %113 = vector.shape_cast %112 : vector<1xf32> to vector<1x1xf32>
      %114 = vector.shape_cast %113 : vector<1x1xf32> to vector<1x1xf32>
      %115 = vector.broadcast %114 : vector<1x1xf32> to vector<1x128xf32>
      %116 = arith.mulf %110, %16 : vector<1x128xf32>
      %cst_90 = arith.constant dense<0.000000e+00> : vector<1xf32>
      %117 = vector.multi_reduction <add>, %116, %cst_90 [1] : vector<1x128xf32> to vector<1xf32>
      %118 = vector.shape_cast %117 : vector<1xf32> to vector<1x1xf32>
      %119 = vector.shape_cast %118 : vector<1x1xf32> to vector<1x1xf32>
      %120 = vector.broadcast %119 : vector<1x1xf32> to vector<1x128xf32>
      %121 = arith.addf %97, %115 : vector<1x128xf32>
      %122 = arith.addf %98, %120 : vector<1x128xf32>
      %c8_i32_91 = arith.constant 8 : i32
      %123 = arith.muli %arg9, %c8_i32_91 : i32
      %c2_i32 = arith.constant 2 : i32
      %124 = arith.addi %123, %c2_i32 : i32
      %125 = vector.broadcast %124 : i32 to vector<1x128xi32>
      %126 = arith.cmpi eq, %17, %125 : vector<1x128xi32>
      %127 = arith.select %126, %121, %103 : vector<1x128xi1>, vector<1x128xf32>
      %128 = arith.mulf %121, %13 : vector<1x128xf32>
      %129 = arith.mulf %122, %14 : vector<1x128xf32>
      %130 = arith.addf %128, %129 : vector<1x128xf32>
      %131 = vector.extract_strided_slice %74 {offsets = [2, 0], sizes = [1, 128], strides = [1, 1]} : vector<8x128xf32> to vector<1x128xf32>
      %132 = arith.addf %130, %131 : vector<1x128xf32>
      %cst_92 = arith.constant 0.000000e+00 : f32
      %133 = vector.broadcast %cst_92 : f32 to vector<1x128xf32>
      %134 = arith.maximumf %132, %133 : vector<1x128xf32>
      %135 = arith.mulf %134, %15 : vector<1x128xf32>
      %cst_93 = arith.constant dense<0.000000e+00> : vector<1xf32>
      %136 = vector.multi_reduction <add>, %135, %cst_93 [1] : vector<1x128xf32> to vector<1xf32>
      %137 = vector.shape_cast %136 : vector<1xf32> to vector<1x1xf32>
      %138 = vector.shape_cast %137 : vector<1x1xf32> to vector<1x1xf32>
      %139 = vector.broadcast %138 : vector<1x1xf32> to vector<1x128xf32>
      %140 = arith.mulf %134, %16 : vector<1x128xf32>
      %cst_94 = arith.constant dense<0.000000e+00> : vector<1xf32>
      %141 = vector.multi_reduction <add>, %140, %cst_94 [1] : vector<1x128xf32> to vector<1xf32>
      %142 = vector.shape_cast %141 : vector<1xf32> to vector<1x1xf32>
      %143 = vector.shape_cast %142 : vector<1x1xf32> to vector<1x1xf32>
      %144 = vector.broadcast %143 : vector<1x1xf32> to vector<1x128xf32>
      %145 = arith.addf %121, %139 : vector<1x128xf32>
      %146 = arith.addf %122, %144 : vector<1x128xf32>
      %c8_i32_95 = arith.constant 8 : i32
      %147 = arith.muli %arg9, %c8_i32_95 : i32
      %c3_i32 = arith.constant 3 : i32
      %148 = arith.addi %147, %c3_i32 : i32
      %149 = vector.broadcast %148 : i32 to vector<1x128xi32>
      %150 = arith.cmpi eq, %17, %149 : vector<1x128xi32>
      %151 = arith.select %150, %145, %127 : vector<1x128xi1>, vector<1x128xf32>
      %152 = arith.mulf %145, %13 : vector<1x128xf32>
      %153 = arith.mulf %146, %14 : vector<1x128xf32>
      %154 = arith.addf %152, %153 : vector<1x128xf32>
      %155 = vector.extract_strided_slice %74 {offsets = [3, 0], sizes = [1, 128], strides = [1, 1]} : vector<8x128xf32> to vector<1x128xf32>
      %156 = arith.addf %154, %155 : vector<1x128xf32>
      %cst_96 = arith.constant 0.000000e+00 : f32
      %157 = vector.broadcast %cst_96 : f32 to vector<1x128xf32>
      %158 = arith.maximumf %156, %157 : vector<1x128xf32>
      %159 = arith.mulf %158, %15 : vector<1x128xf32>
      %cst_97 = arith.constant dense<0.000000e+00> : vector<1xf32>
      %160 = vector.multi_reduction <add>, %159, %cst_97 [1] : vector<1x128xf32> to vector<1xf32>
      %161 = vector.shape_cast %160 : vector<1xf32> to vector<1x1xf32>
      %162 = vector.shape_cast %161 : vector<1x1xf32> to vector<1x1xf32>
      %163 = vector.broadcast %162 : vector<1x1xf32> to vector<1x128xf32>
      %164 = arith.mulf %158, %16 : vector<1x128xf32>
      %cst_98 = arith.constant dense<0.000000e+00> : vector<1xf32>
      %165 = vector.multi_reduction <add>, %164, %cst_98 [1] : vector<1x128xf32> to vector<1xf32>
      %166 = vector.shape_cast %165 : vector<1xf32> to vector<1x1xf32>
      %167 = vector.shape_cast %166 : vector<1x1xf32> to vector<1x1xf32>
      %168 = vector.broadcast %167 : vector<1x1xf32> to vector<1x128xf32>
      %169 = arith.addf %145, %163 : vector<1x128xf32>
      %170 = arith.addf %146, %168 : vector<1x128xf32>
      %c8_i32_99 = arith.constant 8 : i32
      %171 = arith.muli %arg9, %c8_i32_99 : i32
      %c4_i32 = arith.constant 4 : i32
      %172 = arith.addi %171, %c4_i32 : i32
      %173 = vector.broadcast %172 : i32 to vector<1x128xi32>
      %174 = arith.cmpi eq, %17, %173 : vector<1x128xi32>
      %175 = arith.select %174, %169, %151 : vector<1x128xi1>, vector<1x128xf32>
      %176 = arith.mulf %169, %13 : vector<1x128xf32>
      %177 = arith.mulf %170, %14 : vector<1x128xf32>
      %178 = arith.addf %176, %177 : vector<1x128xf32>
      %179 = vector.extract_strided_slice %74 {offsets = [4, 0], sizes = [1, 128], strides = [1, 1]} : vector<8x128xf32> to vector<1x128xf32>
      %180 = arith.addf %178, %179 : vector<1x128xf32>
      %cst_100 = arith.constant 0.000000e+00 : f32
      %181 = vector.broadcast %cst_100 : f32 to vector<1x128xf32>
      %182 = arith.maximumf %180, %181 : vector<1x128xf32>
      %183 = arith.mulf %182, %15 : vector<1x128xf32>
      %cst_101 = arith.constant dense<0.000000e+00> : vector<1xf32>
      %184 = vector.multi_reduction <add>, %183, %cst_101 [1] : vector<1x128xf32> to vector<1xf32>
      %185 = vector.shape_cast %184 : vector<1xf32> to vector<1x1xf32>
      %186 = vector.shape_cast %185 : vector<1x1xf32> to vector<1x1xf32>
      %187 = vector.broadcast %186 : vector<1x1xf32> to vector<1x128xf32>
      %188 = arith.mulf %182, %16 : vector<1x128xf32>
      %cst_102 = arith.constant dense<0.000000e+00> : vector<1xf32>
      %189 = vector.multi_reduction <add>, %188, %cst_102 [1] : vector<1x128xf32> to vector<1xf32>
      %190 = vector.shape_cast %189 : vector<1xf32> to vector<1x1xf32>
      %191 = vector.shape_cast %190 : vector<1x1xf32> to vector<1x1xf32>
      %192 = vector.broadcast %191 : vector<1x1xf32> to vector<1x128xf32>
      %193 = arith.addf %169, %187 : vector<1x128xf32>
      %194 = arith.addf %170, %192 : vector<1x128xf32>
      %c8_i32_103 = arith.constant 8 : i32
      %195 = arith.muli %arg9, %c8_i32_103 : i32
      %c5_i32 = arith.constant 5 : i32
      %196 = arith.addi %195, %c5_i32 : i32
      %197 = vector.broadcast %196 : i32 to vector<1x128xi32>
      %198 = arith.cmpi eq, %17, %197 : vector<1x128xi32>
      %199 = arith.select %198, %193, %175 : vector<1x128xi1>, vector<1x128xf32>
      %200 = arith.mulf %193, %13 : vector<1x128xf32>
      %201 = arith.mulf %194, %14 : vector<1x128xf32>
      %202 = arith.addf %200, %201 : vector<1x128xf32>
      %203 = vector.extract_strided_slice %74 {offsets = [5, 0], sizes = [1, 128], strides = [1, 1]} : vector<8x128xf32> to vector<1x128xf32>
      %204 = arith.addf %202, %203 : vector<1x128xf32>
      %cst_104 = arith.constant 0.000000e+00 : f32
      %205 = vector.broadcast %cst_104 : f32 to vector<1x128xf32>
      %206 = arith.maximumf %204, %205 : vector<1x128xf32>
      %207 = arith.mulf %206, %15 : vector<1x128xf32>
      %cst_105 = arith.constant dense<0.000000e+00> : vector<1xf32>
      %208 = vector.multi_reduction <add>, %207, %cst_105 [1] : vector<1x128xf32> to vector<1xf32>
      %209 = vector.shape_cast %208 : vector<1xf32> to vector<1x1xf32>
      %210 = vector.shape_cast %209 : vector<1x1xf32> to vector<1x1xf32>
      %211 = vector.broadcast %210 : vector<1x1xf32> to vector<1x128xf32>
      %212 = arith.mulf %206, %16 : vector<1x128xf32>
      %cst_106 = arith.constant dense<0.000000e+00> : vector<1xf32>
      %213 = vector.multi_reduction <add>, %212, %cst_106 [1] : vector<1x128xf32> to vector<1xf32>
      %214 = vector.shape_cast %213 : vector<1xf32> to vector<1x1xf32>
      %215 = vector.shape_cast %214 : vector<1x1xf32> to vector<1x1xf32>
      %216 = vector.broadcast %215 : vector<1x1xf32> to vector<1x128xf32>
      %217 = arith.addf %193, %211 : vector<1x128xf32>
      %218 = arith.addf %194, %216 : vector<1x128xf32>
      %c8_i32_107 = arith.constant 8 : i32
      %219 = arith.muli %arg9, %c8_i32_107 : i32
      %c6_i32 = arith.constant 6 : i32
      %220 = arith.addi %219, %c6_i32 : i32
      %221 = vector.broadcast %220 : i32 to vector<1x128xi32>
      %222 = arith.cmpi eq, %17, %221 : vector<1x128xi32>
      %223 = arith.select %222, %217, %199 : vector<1x128xi1>, vector<1x128xf32>
      %224 = arith.mulf %217, %13 : vector<1x128xf32>
      %225 = arith.mulf %218, %14 : vector<1x128xf32>
      %226 = arith.addf %224, %225 : vector<1x128xf32>
      %227 = vector.extract_strided_slice %74 {offsets = [6, 0], sizes = [1, 128], strides = [1, 1]} : vector<8x128xf32> to vector<1x128xf32>
      %228 = arith.addf %226, %227 : vector<1x128xf32>
      %cst_108 = arith.constant 0.000000e+00 : f32
      %229 = vector.broadcast %cst_108 : f32 to vector<1x128xf32>
      %230 = arith.maximumf %228, %229 : vector<1x128xf32>
      %231 = arith.mulf %230, %15 : vector<1x128xf32>
      %cst_109 = arith.constant dense<0.000000e+00> : vector<1xf32>
      %232 = vector.multi_reduction <add>, %231, %cst_109 [1] : vector<1x128xf32> to vector<1xf32>
      %233 = vector.shape_cast %232 : vector<1xf32> to vector<1x1xf32>
      %234 = vector.shape_cast %233 : vector<1x1xf32> to vector<1x1xf32>
      %235 = vector.broadcast %234 : vector<1x1xf32> to vector<1x128xf32>
      %236 = arith.mulf %230, %16 : vector<1x128xf32>
      %cst_110 = arith.constant dense<0.000000e+00> : vector<1xf32>
      %237 = vector.multi_reduction <add>, %236, %cst_110 [1] : vector<1x128xf32> to vector<1xf32>
      %238 = vector.shape_cast %237 : vector<1xf32> to vector<1x1xf32>
      %239 = vector.shape_cast %238 : vector<1x1xf32> to vector<1x1xf32>
      %240 = vector.broadcast %239 : vector<1x1xf32> to vector<1x128xf32>
      %241 = arith.addf %217, %235 : vector<1x128xf32>
      %242 = arith.addf %218, %240 : vector<1x128xf32>
      %c8_i32_111 = arith.constant 8 : i32
      %243 = arith.muli %arg9, %c8_i32_111 : i32
      %c7_i32 = arith.constant 7 : i32
      %244 = arith.addi %243, %c7_i32 : i32
      %245 = vector.broadcast %244 : i32 to vector<1x128xi32>
      %246 = arith.cmpi eq, %17, %245 : vector<1x128xi32>
      %247 = arith.select %246, %241, %223 : vector<1x128xi1>, vector<1x128xf32>
      %248 = arith.mulf %241, %13 : vector<1x128xf32>
      %249 = arith.mulf %242, %14 : vector<1x128xf32>
      %250 = arith.addf %248, %249 : vector<1x128xf32>
      %251 = vector.extract_strided_slice %74 {offsets = [7, 0], sizes = [1, 128], strides = [1, 1]} : vector<8x128xf32> to vector<1x128xf32>
      %252 = arith.addf %250, %251 : vector<1x128xf32>
      %cst_112 = arith.constant 0.000000e+00 : f32
      %253 = vector.broadcast %cst_112 : f32 to vector<1x128xf32>
      %254 = arith.maximumf %252, %253 : vector<1x128xf32>
      %255 = arith.mulf %254, %15 : vector<1x128xf32>
      %cst_113 = arith.constant dense<0.000000e+00> : vector<1xf32>
      %256 = vector.multi_reduction <add>, %255, %cst_113 [1] : vector<1x128xf32> to vector<1xf32>
      %257 = vector.shape_cast %256 : vector<1xf32> to vector<1x1xf32>
      %258 = vector.shape_cast %257 : vector<1x1xf32> to vector<1x1xf32>
      %259 = vector.broadcast %258 : vector<1x1xf32> to vector<1x128xf32>
      %260 = arith.mulf %254, %16 : vector<1x128xf32>
      %cst_114 = arith.constant dense<0.000000e+00> : vector<1xf32>
      %261 = vector.multi_reduction <add>, %260, %cst_114 [1] : vector<1x128xf32> to vector<1xf32>
      %262 = vector.shape_cast %261 : vector<1xf32> to vector<1x1xf32>
      %263 = vector.shape_cast %262 : vector<1x1xf32> to vector<1x1xf32>
      %264 = vector.broadcast %263 : vector<1x1xf32> to vector<1x128xf32>
      %265 = arith.addf %241, %259 : vector<1x128xf32>
      %266 = arith.addf %242, %264 : vector<1x128xf32>
      scf.yield %265, %266, %247 : vector<1x128xf32>, vector<1x128xf32>, vector<1x128xf32>
    }
    %c16_i32_21 = arith.constant 16 : i32
    %c0_22 = arith.constant 0 : index
    %c0_23 = arith.constant 0 : index
    %c0_24 = arith.constant 0 : index
    %23 = vector.load %arg6[%c0_22, %c0_23, %c0_24] : memref<1x8x128xf32, #tpu.memory_space<vmem>>, vector<1x1x128xf32>
    %24 = vector.shape_cast %23 : vector<1x1x128xf32> to vector<1x128xf32>
    %25 = vector.shape_cast %22#2 : vector<1x128xf32> to vector<1x1x128xf32>
    tpu.vector_store %arg6[%c0_22, %c0_23, %c0_24], %25 {strides = array<i32>} : memref<1x8x128xf32, #tpu.memory_space<vmem>>, vector<1x1x128xf32>,
    %cst_25 = arith.constant 0.000000e+00 : f32
    %26 = vector.broadcast %cst_25 : f32 to vector<1x128xf32>
    %c0_i32_26 = arith.constant 0 : i32
    %c16_i32_27 = arith.constant 16 : i32
    %27 = arith.addi %c0_i32_26, %c16_i32_27 : i32
    %c1_i32_28 = arith.constant 1 : i32
    %28:3 = scf.for %arg9 = %c0_i32_26 to %27 step %c1_i32_28 iter_args(%arg10 = %22#0, %arg11 = %22#1, %arg12 = %26) -> (vector<1x128xf32>, vector<1x128xf32>, vector<1x128xf32>)  : i32 {
      %c8_i32 = arith.constant 8 : i32
      %70 = arith.muli %arg9, %c8_i32 : i32
      %c128_i32 = arith.constant 128 : i32
      %71 = arith.addi %c128_i32, %70 : i32
      %72 = tpu.assume_multiple %71, 8 : i32
      %73 = arith.index_cast %72 : i32 to index
      %c0_79 = arith.constant 0 : index
      %74 = vector.load %arg7[%73, %c0_79] : memref<1024x128xf32, #tpu.memory_space<vmem>>, vector<8x128xf32>
      %c8_i32_80 = arith.constant 8 : i32
      %75 = arith.muli %arg9, %c8_i32_80 : i32
      %c0_i32_81 = arith.constant 0 : i32
      %76 = arith.addi %75, %c0_i32_81 : i32
      %77 = vector.broadcast %76 : i32 to vector<1x128xi32>
      %78 = arith.cmpi eq, %17, %77 : vector<1x128xi32>
      %79 = arith.select %78, %arg10, %arg12 : vector<1x128xi1>, vector<1x128xf32>
      %80 = arith.mulf %arg10, %13 : vector<1x128xf32>
      %81 = arith.mulf %arg11, %14 : vector<1x128xf32>
      %82 = arith.addf %80, %81 : vector<1x128xf32>
      %83 = vector.extract_strided_slice %74 {offsets = [0, 0], sizes = [1, 128], strides = [1, 1]} : vector<8x128xf32> to vector<1x128xf32>
      %84 = arith.addf %82, %83 : vector<1x128xf32>
      %cst_82 = arith.constant 0.000000e+00 : f32
      %85 = vector.broadcast %cst_82 : f32 to vector<1x128xf32>
      %86 = arith.maximumf %84, %85 : vector<1x128xf32>
      %87 = arith.mulf %86, %15 : vector<1x128xf32>
      %cst_83 = arith.constant dense<0.000000e+00> : vector<1xf32>
      %88 = vector.multi_reduction <add>, %87, %cst_83 [1] : vector<1x128xf32> to vector<1xf32>
      %89 = vector.shape_cast %88 : vector<1xf32> to vector<1x1xf32>
      %90 = vector.shape_cast %89 : vector<1x1xf32> to vector<1x1xf32>
      %91 = vector.broadcast %90 : vector<1x1xf32> to vector<1x128xf32>
      %92 = arith.mulf %86, %16 : vector<1x128xf32>
      %cst_84 = arith.constant dense<0.000000e+00> : vector<1xf32>
      %93 = vector.multi_reduction <add>, %92, %cst_84 [1] : vector<1x128xf32> to vector<1xf32>
      %94 = vector.shape_cast %93 : vector<1xf32> to vector<1x1xf32>
      %95 = vector.shape_cast %94 : vector<1x1xf32> to vector<1x1xf32>
      %96 = vector.broadcast %95 : vector<1x1xf32> to vector<1x128xf32>
      %97 = arith.addf %arg10, %91 : vector<1x128xf32>
      %98 = arith.addf %arg11, %96 : vector<1x128xf32>
      %c8_i32_85 = arith.constant 8 : i32
      %99 = arith.muli %arg9, %c8_i32_85 : i32
      %c1_i32_86 = arith.constant 1 : i32
      %100 = arith.addi %99, %c1_i32_86 : i32
      %101 = vector.broadcast %100 : i32 to vector<1x128xi32>
      %102 = arith.cmpi eq, %17, %101 : vector<1x128xi32>
      %103 = arith.select %102, %97, %79 : vector<1x128xi1>, vector<1x128xf32>
      %104 = arith.mulf %97, %13 : vector<1x128xf32>
      %105 = arith.mulf %98, %14 : vector<1x128xf32>
      %106 = arith.addf %104, %105 : vector<1x128xf32>
      %107 = vector.extract_strided_slice %74 {offsets = [1, 0], sizes = [1, 128], strides = [1, 1]} : vector<8x128xf32> to vector<1x128xf32>
      %108 = arith.addf %106, %107 : vector<1x128xf32>
      %cst_87 = arith.constant 0.000000e+00 : f32
      %109 = vector.broadcast %cst_87 : f32 to vector<1x128xf32>
      %110 = arith.maximumf %108, %109 : vector<1x128xf32>
      %111 = arith.mulf %110, %15 : vector<1x128xf32>
      %cst_88 = arith.constant dense<0.000000e+00> : vector<1xf32>
      %112 = vector.multi_reduction <add>, %111, %cst_88 [1] : vector<1x128xf32> to vector<1xf32>
      %113 = vector.shape_cast %112 : vector<1xf32> to vector<1x1xf32>
      %114 = vector.shape_cast %113 : vector<1x1xf32> to vector<1x1xf32>
      %115 = vector.broadcast %114 : vector<1x1xf32> to vector<1x128xf32>
      %116 = arith.mulf %110, %16 : vector<1x128xf32>
      %cst_89 = arith.constant dense<0.000000e+00> : vector<1xf32>
      %117 = vector.multi_reduction <add>, %116, %cst_89 [1] : vector<1x128xf32> to vector<1xf32>
      %118 = vector.shape_cast %117 : vector<1xf32> to vector<1x1xf32>
      %119 = vector.shape_cast %118 : vector<1x1xf32> to vector<1x1xf32>
      %120 = vector.broadcast %119 : vector<1x1xf32> to vector<1x128xf32>
      %121 = arith.addf %97, %115 : vector<1x128xf32>
      %122 = arith.addf %98, %120 : vector<1x128xf32>
      %c8_i32_90 = arith.constant 8 : i32
      %123 = arith.muli %arg9, %c8_i32_90 : i32
      %c2_i32 = arith.constant 2 : i32
      %124 = arith.addi %123, %c2_i32 : i32
      %125 = vector.broadcast %124 : i32 to vector<1x128xi32>
      %126 = arith.cmpi eq, %17, %125 : vector<1x128xi32>
      %127 = arith.select %126, %121, %103 : vector<1x128xi1>, vector<1x128xf32>
      %128 = arith.mulf %121, %13 : vector<1x128xf32>
      %129 = arith.mulf %122, %14 : vector<1x128xf32>
      %130 = arith.addf %128, %129 : vector<1x128xf32>
      %131 = vector.extract_strided_slice %74 {offsets = [2, 0], sizes = [1, 128], strides = [1, 1]} : vector<8x128xf32> to vector<1x128xf32>
      %132 = arith.addf %130, %131 : vector<1x128xf32>
      %cst_91 = arith.constant 0.000000e+00 : f32
      %133 = vector.broadcast %cst_91 : f32 to vector<1x128xf32>
      %134 = arith.maximumf %132, %133 : vector<1x128xf32>
      %135 = arith.mulf %134, %15 : vector<1x128xf32>
      %cst_92 = arith.constant dense<0.000000e+00> : vector<1xf32>
      %136 = vector.multi_reduction <add>, %135, %cst_92 [1] : vector<1x128xf32> to vector<1xf32>
      %137 = vector.shape_cast %136 : vector<1xf32> to vector<1x1xf32>
      %138 = vector.shape_cast %137 : vector<1x1xf32> to vector<1x1xf32>
      %139 = vector.broadcast %138 : vector<1x1xf32> to vector<1x128xf32>
      %140 = arith.mulf %134, %16 : vector<1x128xf32>
      %cst_93 = arith.constant dense<0.000000e+00> : vector<1xf32>
      %141 = vector.multi_reduction <add>, %140, %cst_93 [1] : vector<1x128xf32> to vector<1xf32>
      %142 = vector.shape_cast %141 : vector<1xf32> to vector<1x1xf32>
      %143 = vector.shape_cast %142 : vector<1x1xf32> to vector<1x1xf32>
      %144 = vector.broadcast %143 : vector<1x1xf32> to vector<1x128xf32>
      %145 = arith.addf %121, %139 : vector<1x128xf32>
      %146 = arith.addf %122, %144 : vector<1x128xf32>
      %c8_i32_94 = arith.constant 8 : i32
      %147 = arith.muli %arg9, %c8_i32_94 : i32
      %c3_i32 = arith.constant 3 : i32
      %148 = arith.addi %147, %c3_i32 : i32
      %149 = vector.broadcast %148 : i32 to vector<1x128xi32>
      %150 = arith.cmpi eq, %17, %149 : vector<1x128xi32>
      %151 = arith.select %150, %145, %127 : vector<1x128xi1>, vector<1x128xf32>
      %152 = arith.mulf %145, %13 : vector<1x128xf32>
      %153 = arith.mulf %146, %14 : vector<1x128xf32>
      %154 = arith.addf %152, %153 : vector<1x128xf32>
      %155 = vector.extract_strided_slice %74 {offsets = [3, 0], sizes = [1, 128], strides = [1, 1]} : vector<8x128xf32> to vector<1x128xf32>
      %156 = arith.addf %154, %155 : vector<1x128xf32>
      %cst_95 = arith.constant 0.000000e+00 : f32
      %157 = vector.broadcast %cst_95 : f32 to vector<1x128xf32>
      %158 = arith.maximumf %156, %157 : vector<1x128xf32>
      %159 = arith.mulf %158, %15 : vector<1x128xf32>
      %cst_96 = arith.constant dense<0.000000e+00> : vector<1xf32>
      %160 = vector.multi_reduction <add>, %159, %cst_96 [1] : vector<1x128xf32> to vector<1xf32>
      %161 = vector.shape_cast %160 : vector<1xf32> to vector<1x1xf32>
      %162 = vector.shape_cast %161 : vector<1x1xf32> to vector<1x1xf32>
      %163 = vector.broadcast %162 : vector<1x1xf32> to vector<1x128xf32>
      %164 = arith.mulf %158, %16 : vector<1x128xf32>
      %cst_97 = arith.constant dense<0.000000e+00> : vector<1xf32>
      %165 = vector.multi_reduction <add>, %164, %cst_97 [1] : vector<1x128xf32> to vector<1xf32>
      %166 = vector.shape_cast %165 : vector<1xf32> to vector<1x1xf32>
      %167 = vector.shape_cast %166 : vector<1x1xf32> to vector<1x1xf32>
      %168 = vector.broadcast %167 : vector<1x1xf32> to vector<1x128xf32>
      %169 = arith.addf %145, %163 : vector<1x128xf32>
      %170 = arith.addf %146, %168 : vector<1x128xf32>
      %c8_i32_98 = arith.constant 8 : i32
      %171 = arith.muli %arg9, %c8_i32_98 : i32
      %c4_i32 = arith.constant 4 : i32
      %172 = arith.addi %171, %c4_i32 : i32
      %173 = vector.broadcast %172 : i32 to vector<1x128xi32>
      %174 = arith.cmpi eq, %17, %173 : vector<1x128xi32>
      %175 = arith.select %174, %169, %151 : vector<1x128xi1>, vector<1x128xf32>
      %176 = arith.mulf %169, %13 : vector<1x128xf32>
      %177 = arith.mulf %170, %14 : vector<1x128xf32>
      %178 = arith.addf %176, %177 : vector<1x128xf32>
      %179 = vector.extract_strided_slice %74 {offsets = [4, 0], sizes = [1, 128], strides = [1, 1]} : vector<8x128xf32> to vector<1x128xf32>
      %180 = arith.addf %178, %179 : vector<1x128xf32>
      %cst_99 = arith.constant 0.000000e+00 : f32
      %181 = vector.broadcast %cst_99 : f32 to vector<1x128xf32>
      %182 = arith.maximumf %180, %181 : vector<1x128xf32>
      %183 = arith.mulf %182, %15 : vector<1x128xf32>
      %cst_100 = arith.constant dense<0.000000e+00> : vector<1xf32>
      %184 = vector.multi_reduction <add>, %183, %cst_100 [1] : vector<1x128xf32> to vector<1xf32>
      %185 = vector.shape_cast %184 : vector<1xf32> to vector<1x1xf32>
      %186 = vector.shape_cast %185 : vector<1x1xf32> to vector<1x1xf32>
      %187 = vector.broadcast %186 : vector<1x1xf32> to vector<1x128xf32>
      %188 = arith.mulf %182, %16 : vector<1x128xf32>
      %cst_101 = arith.constant dense<0.000000e+00> : vector<1xf32>
      %189 = vector.multi_reduction <add>, %188, %cst_101 [1] : vector<1x128xf32> to vector<1xf32>
      %190 = vector.shape_cast %189 : vector<1xf32> to vector<1x1xf32>
      %191 = vector.shape_cast %190 : vector<1x1xf32> to vector<1x1xf32>
      %192 = vector.broadcast %191 : vector<1x1xf32> to vector<1x128xf32>
      %193 = arith.addf %169, %187 : vector<1x128xf32>
      %194 = arith.addf %170, %192 : vector<1x128xf32>
      %c8_i32_102 = arith.constant 8 : i32
      %195 = arith.muli %arg9, %c8_i32_102 : i32
      %c5_i32 = arith.constant 5 : i32
      %196 = arith.addi %195, %c5_i32 : i32
      %197 = vector.broadcast %196 : i32 to vector<1x128xi32>
      %198 = arith.cmpi eq, %17, %197 : vector<1x128xi32>
      %199 = arith.select %198, %193, %175 : vector<1x128xi1>, vector<1x128xf32>
      %200 = arith.mulf %193, %13 : vector<1x128xf32>
      %201 = arith.mulf %194, %14 : vector<1x128xf32>
      %202 = arith.addf %200, %201 : vector<1x128xf32>
      %203 = vector.extract_strided_slice %74 {offsets = [5, 0], sizes = [1, 128], strides = [1, 1]} : vector<8x128xf32> to vector<1x128xf32>
      %204 = arith.addf %202, %203 : vector<1x128xf32>
      %cst_103 = arith.constant 0.000000e+00 : f32
      %205 = vector.broadcast %cst_103 : f32 to vector<1x128xf32>
      %206 = arith.maximumf %204, %205 : vector<1x128xf32>
      %207 = arith.mulf %206, %15 : vector<1x128xf32>
      %cst_104 = arith.constant dense<0.000000e+00> : vector<1xf32>
      %208 = vector.multi_reduction <add>, %207, %cst_104 [1] : vector<1x128xf32> to vector<1xf32>
      %209 = vector.shape_cast %208 : vector<1xf32> to vector<1x1xf32>
      %210 = vector.shape_cast %209 : vector<1x1xf32> to vector<1x1xf32>
      %211 = vector.broadcast %210 : vector<1x1xf32> to vector<1x128xf32>
      %212 = arith.mulf %206, %16 : vector<1x128xf32>
      %cst_105 = arith.constant dense<0.000000e+00> : vector<1xf32>
      %213 = vector.multi_reduction <add>, %212, %cst_105 [1] : vector<1x128xf32> to vector<1xf32>
      %214 = vector.shape_cast %213 : vector<1xf32> to vector<1x1xf32>
      %215 = vector.shape_cast %214 : vector<1x1xf32> to vector<1x1xf32>
      %216 = vector.broadcast %215 : vector<1x1xf32> to vector<1x128xf32>
      %217 = arith.addf %193, %211 : vector<1x128xf32>
      %218 = arith.addf %194, %216 : vector<1x128xf32>
      %c8_i32_106 = arith.constant 8 : i32
      %219 = arith.muli %arg9, %c8_i32_106 : i32
      %c6_i32 = arith.constant 6 : i32
      %220 = arith.addi %219, %c6_i32 : i32
      %221 = vector.broadcast %220 : i32 to vector<1x128xi32>
      %222 = arith.cmpi eq, %17, %221 : vector<1x128xi32>
      %223 = arith.select %222, %217, %199 : vector<1x128xi1>, vector<1x128xf32>
      %224 = arith.mulf %217, %13 : vector<1x128xf32>
      %225 = arith.mulf %218, %14 : vector<1x128xf32>
      %226 = arith.addf %224, %225 : vector<1x128xf32>
      %227 = vector.extract_strided_slice %74 {offsets = [6, 0], sizes = [1, 128], strides = [1, 1]} : vector<8x128xf32> to vector<1x128xf32>
      %228 = arith.addf %226, %227 : vector<1x128xf32>
      %cst_107 = arith.constant 0.000000e+00 : f32
      %229 = vector.broadcast %cst_107 : f32 to vector<1x128xf32>
      %230 = arith.maximumf %228, %229 : vector<1x128xf32>
      %231 = arith.mulf %230, %15 : vector<1x128xf32>
      %cst_108 = arith.constant dense<0.000000e+00> : vector<1xf32>
      %232 = vector.multi_reduction <add>, %231, %cst_108 [1] : vector<1x128xf32> to vector<1xf32>
      %233 = vector.shape_cast %232 : vector<1xf32> to vector<1x1xf32>
      %234 = vector.shape_cast %233 : vector<1x1xf32> to vector<1x1xf32>
      %235 = vector.broadcast %234 : vector<1x1xf32> to vector<1x128xf32>
      %236 = arith.mulf %230, %16 : vector<1x128xf32>
      %cst_109 = arith.constant dense<0.000000e+00> : vector<1xf32>
      %237 = vector.multi_reduction <add>, %236, %cst_109 [1] : vector<1x128xf32> to vector<1xf32>
      %238 = vector.shape_cast %237 : vector<1xf32> to vector<1x1xf32>
      %239 = vector.shape_cast %238 : vector<1x1xf32> to vector<1x1xf32>
      %240 = vector.broadcast %239 : vector<1x1xf32> to vector<1x128xf32>
      %241 = arith.addf %217, %235 : vector<1x128xf32>
      %242 = arith.addf %218, %240 : vector<1x128xf32>
      %c8_i32_110 = arith.constant 8 : i32
      %243 = arith.muli %arg9, %c8_i32_110 : i32
      %c7_i32 = arith.constant 7 : i32
      %244 = arith.addi %243, %c7_i32 : i32
      %245 = vector.broadcast %244 : i32 to vector<1x128xi32>
      %246 = arith.cmpi eq, %17, %245 : vector<1x128xi32>
      %247 = arith.select %246, %241, %223 : vector<1x128xi1>, vector<1x128xf32>
      %248 = arith.mulf %241, %13 : vector<1x128xf32>
      %249 = arith.mulf %242, %14 : vector<1x128xf32>
      %250 = arith.addf %248, %249 : vector<1x128xf32>
      %251 = vector.extract_strided_slice %74 {offsets = [7, 0], sizes = [1, 128], strides = [1, 1]} : vector<8x128xf32> to vector<1x128xf32>
      %252 = arith.addf %250, %251 : vector<1x128xf32>
      %cst_111 = arith.constant 0.000000e+00 : f32
      %253 = vector.broadcast %cst_111 : f32 to vector<1x128xf32>
      %254 = arith.maximumf %252, %253 : vector<1x128xf32>
      %255 = arith.mulf %254, %15 : vector<1x128xf32>
      %cst_112 = arith.constant dense<0.000000e+00> : vector<1xf32>
      %256 = vector.multi_reduction <add>, %255, %cst_112 [1] : vector<1x128xf32> to vector<1xf32>
      %257 = vector.shape_cast %256 : vector<1xf32> to vector<1x1xf32>
      %258 = vector.shape_cast %257 : vector<1x1xf32> to vector<1x1xf32>
      %259 = vector.broadcast %258 : vector<1x1xf32> to vector<1x128xf32>
      %260 = arith.mulf %254, %16 : vector<1x128xf32>
      %cst_113 = arith.constant dense<0.000000e+00> : vector<1xf32>
      %261 = vector.multi_reduction <add>, %260, %cst_113 [1] : vector<1x128xf32> to vector<1xf32>
      %262 = vector.shape_cast %261 : vector<1xf32> to vector<1x1xf32>
      %263 = vector.shape_cast %262 : vector<1x1xf32> to vector<1x1xf32>
      %264 = vector.broadcast %263 : vector<1x1xf32> to vector<1x128xf32>
      %265 = arith.addf %241, %259 : vector<1x128xf32>
      %266 = arith.addf %242, %264 : vector<1x128xf32>
      scf.yield %265, %266, %247 : vector<1x128xf32>, vector<1x128xf32>, vector<1x128xf32>
    }
    %c16_i32_29 = arith.constant 16 : i32
    %c0_30 = arith.constant 0 : index
    %c1_31 = arith.constant 1 : index
    %c0_32 = arith.constant 0 : index
    %29 = vector.load %arg6[%c0_30, %c1_31, %c0_32] : memref<1x8x128xf32, #tpu.memory_space<vmem>>, vector<1x1x128xf32>
    %30 = vector.shape_cast %29 : vector<1x1x128xf32> to vector<1x128xf32>
    %31 = vector.shape_cast %28#2 : vector<1x128xf32> to vector<1x1x128xf32>
    tpu.vector_store %arg6[%c0_30, %c1_31, %c0_32], %31 {strides = array<i32>} : memref<1x8x128xf32, #tpu.memory_space<vmem>>, vector<1x1x128xf32>,
    %cst_33 = arith.constant 0.000000e+00 : f32
    %32 = vector.broadcast %cst_33 : f32 to vector<1x128xf32>
    %c0_i32_34 = arith.constant 0 : i32
    %c16_i32_35 = arith.constant 16 : i32
    %33 = arith.addi %c0_i32_34, %c16_i32_35 : i32
    %c1_i32_36 = arith.constant 1 : i32
    %34:3 = scf.for %arg9 = %c0_i32_34 to %33 step %c1_i32_36 iter_args(%arg10 = %28#0, %arg11 = %28#1, %arg12 = %32) -> (vector<1x128xf32>, vector<1x128xf32>, vector<1x128xf32>)  : i32 {
      %c8_i32 = arith.constant 8 : i32
      %70 = arith.muli %arg9, %c8_i32 : i32
      %c256_i32 = arith.constant 256 : i32
      %71 = arith.addi %c256_i32, %70 : i32
      %72 = tpu.assume_multiple %71, 8 : i32
      %73 = arith.index_cast %72 : i32 to index
      %c0_79 = arith.constant 0 : index
      %74 = vector.load %arg7[%73, %c0_79] : memref<1024x128xf32, #tpu.memory_space<vmem>>, vector<8x128xf32>
      %c8_i32_80 = arith.constant 8 : i32
      %75 = arith.muli %arg9, %c8_i32_80 : i32
      %c0_i32_81 = arith.constant 0 : i32
      %76 = arith.addi %75, %c0_i32_81 : i32
      %77 = vector.broadcast %76 : i32 to vector<1x128xi32>
      %78 = arith.cmpi eq, %17, %77 : vector<1x128xi32>
      %79 = arith.select %78, %arg10, %arg12 : vector<1x128xi1>, vector<1x128xf32>
      %80 = arith.mulf %arg10, %13 : vector<1x128xf32>
      %81 = arith.mulf %arg11, %14 : vector<1x128xf32>
      %82 = arith.addf %80, %81 : vector<1x128xf32>
      %83 = vector.extract_strided_slice %74 {offsets = [0, 0], sizes = [1, 128], strides = [1, 1]} : vector<8x128xf32> to vector<1x128xf32>
      %84 = arith.addf %82, %83 : vector<1x128xf32>
      %cst_82 = arith.constant 0.000000e+00 : f32
      %85 = vector.broadcast %cst_82 : f32 to vector<1x128xf32>
      %86 = arith.maximumf %84, %85 : vector<1x128xf32>
      %87 = arith.mulf %86, %15 : vector<1x128xf32>
      %cst_83 = arith.constant dense<0.000000e+00> : vector<1xf32>
      %88 = vector.multi_reduction <add>, %87, %cst_83 [1] : vector<1x128xf32> to vector<1xf32>
      %89 = vector.shape_cast %88 : vector<1xf32> to vector<1x1xf32>
      %90 = vector.shape_cast %89 : vector<1x1xf32> to vector<1x1xf32>
      %91 = vector.broadcast %90 : vector<1x1xf32> to vector<1x128xf32>
      %92 = arith.mulf %86, %16 : vector<1x128xf32>
      %cst_84 = arith.constant dense<0.000000e+00> : vector<1xf32>
      %93 = vector.multi_reduction <add>, %92, %cst_84 [1] : vector<1x128xf32> to vector<1xf32>
      %94 = vector.shape_cast %93 : vector<1xf32> to vector<1x1xf32>
      %95 = vector.shape_cast %94 : vector<1x1xf32> to vector<1x1xf32>
      %96 = vector.broadcast %95 : vector<1x1xf32> to vector<1x128xf32>
      %97 = arith.addf %arg10, %91 : vector<1x128xf32>
      %98 = arith.addf %arg11, %96 : vector<1x128xf32>
      %c8_i32_85 = arith.constant 8 : i32
      %99 = arith.muli %arg9, %c8_i32_85 : i32
      %c1_i32_86 = arith.constant 1 : i32
      %100 = arith.addi %99, %c1_i32_86 : i32
      %101 = vector.broadcast %100 : i32 to vector<1x128xi32>
      %102 = arith.cmpi eq, %17, %101 : vector<1x128xi32>
      %103 = arith.select %102, %97, %79 : vector<1x128xi1>, vector<1x128xf32>
      %104 = arith.mulf %97, %13 : vector<1x128xf32>
      %105 = arith.mulf %98, %14 : vector<1x128xf32>
      %106 = arith.addf %104, %105 : vector<1x128xf32>
      %107 = vector.extract_strided_slice %74 {offsets = [1, 0], sizes = [1, 128], strides = [1, 1]} : vector<8x128xf32> to vector<1x128xf32>
      %108 = arith.addf %106, %107 : vector<1x128xf32>
      %cst_87 = arith.constant 0.000000e+00 : f32
      %109 = vector.broadcast %cst_87 : f32 to vector<1x128xf32>
      %110 = arith.maximumf %108, %109 : vector<1x128xf32>
      %111 = arith.mulf %110, %15 : vector<1x128xf32>
      %cst_88 = arith.constant dense<0.000000e+00> : vector<1xf32>
      %112 = vector.multi_reduction <add>, %111, %cst_88 [1] : vector<1x128xf32> to vector<1xf32>
      %113 = vector.shape_cast %112 : vector<1xf32> to vector<1x1xf32>
      %114 = vector.shape_cast %113 : vector<1x1xf32> to vector<1x1xf32>
      %115 = vector.broadcast %114 : vector<1x1xf32> to vector<1x128xf32>
      %116 = arith.mulf %110, %16 : vector<1x128xf32>
      %cst_89 = arith.constant dense<0.000000e+00> : vector<1xf32>
      %117 = vector.multi_reduction <add>, %116, %cst_89 [1] : vector<1x128xf32> to vector<1xf32>
      %118 = vector.shape_cast %117 : vector<1xf32> to vector<1x1xf32>
      %119 = vector.shape_cast %118 : vector<1x1xf32> to vector<1x1xf32>
      %120 = vector.broadcast %119 : vector<1x1xf32> to vector<1x128xf32>
      %121 = arith.addf %97, %115 : vector<1x128xf32>
      %122 = arith.addf %98, %120 : vector<1x128xf32>
      %c8_i32_90 = arith.constant 8 : i32
      %123 = arith.muli %arg9, %c8_i32_90 : i32
      %c2_i32 = arith.constant 2 : i32
      %124 = arith.addi %123, %c2_i32 : i32
      %125 = vector.broadcast %124 : i32 to vector<1x128xi32>
      %126 = arith.cmpi eq, %17, %125 : vector<1x128xi32>
      %127 = arith.select %126, %121, %103 : vector<1x128xi1>, vector<1x128xf32>
      %128 = arith.mulf %121, %13 : vector<1x128xf32>
      %129 = arith.mulf %122, %14 : vector<1x128xf32>
      %130 = arith.addf %128, %129 : vector<1x128xf32>
      %131 = vector.extract_strided_slice %74 {offsets = [2, 0], sizes = [1, 128], strides = [1, 1]} : vector<8x128xf32> to vector<1x128xf32>
      %132 = arith.addf %130, %131 : vector<1x128xf32>
      %cst_91 = arith.constant 0.000000e+00 : f32
      %133 = vector.broadcast %cst_91 : f32 to vector<1x128xf32>
      %134 = arith.maximumf %132, %133 : vector<1x128xf32>
      %135 = arith.mulf %134, %15 : vector<1x128xf32>
      %cst_92 = arith.constant dense<0.000000e+00> : vector<1xf32>
      %136 = vector.multi_reduction <add>, %135, %cst_92 [1] : vector<1x128xf32> to vector<1xf32>
      %137 = vector.shape_cast %136 : vector<1xf32> to vector<1x1xf32>
      %138 = vector.shape_cast %137 : vector<1x1xf32> to vector<1x1xf32>
      %139 = vector.broadcast %138 : vector<1x1xf32> to vector<1x128xf32>
      %140 = arith.mulf %134, %16 : vector<1x128xf32>
      %cst_93 = arith.constant dense<0.000000e+00> : vector<1xf32>
      %141 = vector.multi_reduction <add>, %140, %cst_93 [1] : vector<1x128xf32> to vector<1xf32>
      %142 = vector.shape_cast %141 : vector<1xf32> to vector<1x1xf32>
      %143 = vector.shape_cast %142 : vector<1x1xf32> to vector<1x1xf32>
      %144 = vector.broadcast %143 : vector<1x1xf32> to vector<1x128xf32>
      %145 = arith.addf %121, %139 : vector<1x128xf32>
      %146 = arith.addf %122, %144 : vector<1x128xf32>
      %c8_i32_94 = arith.constant 8 : i32
      %147 = arith.muli %arg9, %c8_i32_94 : i32
      %c3_i32 = arith.constant 3 : i32
      %148 = arith.addi %147, %c3_i32 : i32
      %149 = vector.broadcast %148 : i32 to vector<1x128xi32>
      %150 = arith.cmpi eq, %17, %149 : vector<1x128xi32>
      %151 = arith.select %150, %145, %127 : vector<1x128xi1>, vector<1x128xf32>
      %152 = arith.mulf %145, %13 : vector<1x128xf32>
      %153 = arith.mulf %146, %14 : vector<1x128xf32>
      %154 = arith.addf %152, %153 : vector<1x128xf32>
      %155 = vector.extract_strided_slice %74 {offsets = [3, 0], sizes = [1, 128], strides = [1, 1]} : vector<8x128xf32> to vector<1x128xf32>
      %156 = arith.addf %154, %155 : vector<1x128xf32>
      %cst_95 = arith.constant 0.000000e+00 : f32
      %157 = vector.broadcast %cst_95 : f32 to vector<1x128xf32>
      %158 = arith.maximumf %156, %157 : vector<1x128xf32>
      %159 = arith.mulf %158, %15 : vector<1x128xf32>
      %cst_96 = arith.constant dense<0.000000e+00> : vector<1xf32>
      %160 = vector.multi_reduction <add>, %159, %cst_96 [1] : vector<1x128xf32> to vector<1xf32>
      %161 = vector.shape_cast %160 : vector<1xf32> to vector<1x1xf32>
      %162 = vector.shape_cast %161 : vector<1x1xf32> to vector<1x1xf32>
      %163 = vector.broadcast %162 : vector<1x1xf32> to vector<1x128xf32>
      %164 = arith.mulf %158, %16 : vector<1x128xf32>
      %cst_97 = arith.constant dense<0.000000e+00> : vector<1xf32>
      %165 = vector.multi_reduction <add>, %164, %cst_97 [1] : vector<1x128xf32> to vector<1xf32>
      %166 = vector.shape_cast %165 : vector<1xf32> to vector<1x1xf32>
      %167 = vector.shape_cast %166 : vector<1x1xf32> to vector<1x1xf32>
      %168 = vector.broadcast %167 : vector<1x1xf32> to vector<1x128xf32>
      %169 = arith.addf %145, %163 : vector<1x128xf32>
      %170 = arith.addf %146, %168 : vector<1x128xf32>
      %c8_i32_98 = arith.constant 8 : i32
      %171 = arith.muli %arg9, %c8_i32_98 : i32
      %c4_i32 = arith.constant 4 : i32
      %172 = arith.addi %171, %c4_i32 : i32
      %173 = vector.broadcast %172 : i32 to vector<1x128xi32>
      %174 = arith.cmpi eq, %17, %173 : vector<1x128xi32>
      %175 = arith.select %174, %169, %151 : vector<1x128xi1>, vector<1x128xf32>
      %176 = arith.mulf %169, %13 : vector<1x128xf32>
      %177 = arith.mulf %170, %14 : vector<1x128xf32>
      %178 = arith.addf %176, %177 : vector<1x128xf32>
      %179 = vector.extract_strided_slice %74 {offsets = [4, 0], sizes = [1, 128], strides = [1, 1]} : vector<8x128xf32> to vector<1x128xf32>
      %180 = arith.addf %178, %179 : vector<1x128xf32>
      %cst_99 = arith.constant 0.000000e+00 : f32
      %181 = vector.broadcast %cst_99 : f32 to vector<1x128xf32>
      %182 = arith.maximumf %180, %181 : vector<1x128xf32>
      %183 = arith.mulf %182, %15 : vector<1x128xf32>
      %cst_100 = arith.constant dense<0.000000e+00> : vector<1xf32>
      %184 = vector.multi_reduction <add>, %183, %cst_100 [1] : vector<1x128xf32> to vector<1xf32>
      %185 = vector.shape_cast %184 : vector<1xf32> to vector<1x1xf32>
      %186 = vector.shape_cast %185 : vector<1x1xf32> to vector<1x1xf32>
      %187 = vector.broadcast %186 : vector<1x1xf32> to vector<1x128xf32>
      %188 = arith.mulf %182, %16 : vector<1x128xf32>
      %cst_101 = arith.constant dense<0.000000e+00> : vector<1xf32>
      %189 = vector.multi_reduction <add>, %188, %cst_101 [1] : vector<1x128xf32> to vector<1xf32>
      %190 = vector.shape_cast %189 : vector<1xf32> to vector<1x1xf32>
      %191 = vector.shape_cast %190 : vector<1x1xf32> to vector<1x1xf32>
      %192 = vector.broadcast %191 : vector<1x1xf32> to vector<1x128xf32>
      %193 = arith.addf %169, %187 : vector<1x128xf32>
      %194 = arith.addf %170, %192 : vector<1x128xf32>
      %c8_i32_102 = arith.constant 8 : i32
      %195 = arith.muli %arg9, %c8_i32_102 : i32
      %c5_i32 = arith.constant 5 : i32
      %196 = arith.addi %195, %c5_i32 : i32
      %197 = vector.broadcast %196 : i32 to vector<1x128xi32>
      %198 = arith.cmpi eq, %17, %197 : vector<1x128xi32>
      %199 = arith.select %198, %193, %175 : vector<1x128xi1>, vector<1x128xf32>
      %200 = arith.mulf %193, %13 : vector<1x128xf32>
      %201 = arith.mulf %194, %14 : vector<1x128xf32>
      %202 = arith.addf %200, %201 : vector<1x128xf32>
      %203 = vector.extract_strided_slice %74 {offsets = [5, 0], sizes = [1, 128], strides = [1, 1]} : vector<8x128xf32> to vector<1x128xf32>
      %204 = arith.addf %202, %203 : vector<1x128xf32>
      %cst_103 = arith.constant 0.000000e+00 : f32
      %205 = vector.broadcast %cst_103 : f32 to vector<1x128xf32>
      %206 = arith.maximumf %204, %205 : vector<1x128xf32>
      %207 = arith.mulf %206, %15 : vector<1x128xf32>
      %cst_104 = arith.constant dense<0.000000e+00> : vector<1xf32>
      %208 = vector.multi_reduction <add>, %207, %cst_104 [1] : vector<1x128xf32> to vector<1xf32>
      %209 = vector.shape_cast %208 : vector<1xf32> to vector<1x1xf32>
      %210 = vector.shape_cast %209 : vector<1x1xf32> to vector<1x1xf32>
      %211 = vector.broadcast %210 : vector<1x1xf32> to vector<1x128xf32>
      %212 = arith.mulf %206, %16 : vector<1x128xf32>
      %cst_105 = arith.constant dense<0.000000e+00> : vector<1xf32>
      %213 = vector.multi_reduction <add>, %212, %cst_105 [1] : vector<1x128xf32> to vector<1xf32>
      %214 = vector.shape_cast %213 : vector<1xf32> to vector<1x1xf32>
      %215 = vector.shape_cast %214 : vector<1x1xf32> to vector<1x1xf32>
      %216 = vector.broadcast %215 : vector<1x1xf32> to vector<1x128xf32>
      %217 = arith.addf %193, %211 : vector<1x128xf32>
      %218 = arith.addf %194, %216 : vector<1x128xf32>
      %c8_i32_106 = arith.constant 8 : i32
      %219 = arith.muli %arg9, %c8_i32_106 : i32
      %c6_i32 = arith.constant 6 : i32
      %220 = arith.addi %219, %c6_i32 : i32
      %221 = vector.broadcast %220 : i32 to vector<1x128xi32>
      %222 = arith.cmpi eq, %17, %221 : vector<1x128xi32>
      %223 = arith.select %222, %217, %199 : vector<1x128xi1>, vector<1x128xf32>
      %224 = arith.mulf %217, %13 : vector<1x128xf32>
      %225 = arith.mulf %218, %14 : vector<1x128xf32>
      %226 = arith.addf %224, %225 : vector<1x128xf32>
      %227 = vector.extract_strided_slice %74 {offsets = [6, 0], sizes = [1, 128], strides = [1, 1]} : vector<8x128xf32> to vector<1x128xf32>
      %228 = arith.addf %226, %227 : vector<1x128xf32>
      %cst_107 = arith.constant 0.000000e+00 : f32
      %229 = vector.broadcast %cst_107 : f32 to vector<1x128xf32>
      %230 = arith.maximumf %228, %229 : vector<1x128xf32>
      %231 = arith.mulf %230, %15 : vector<1x128xf32>
      %cst_108 = arith.constant dense<0.000000e+00> : vector<1xf32>
      %232 = vector.multi_reduction <add>, %231, %cst_108 [1] : vector<1x128xf32> to vector<1xf32>
      %233 = vector.shape_cast %232 : vector<1xf32> to vector<1x1xf32>
      %234 = vector.shape_cast %233 : vector<1x1xf32> to vector<1x1xf32>
      %235 = vector.broadcast %234 : vector<1x1xf32> to vector<1x128xf32>
      %236 = arith.mulf %230, %16 : vector<1x128xf32>
      %cst_109 = arith.constant dense<0.000000e+00> : vector<1xf32>
      %237 = vector.multi_reduction <add>, %236, %cst_109 [1] : vector<1x128xf32> to vector<1xf32>
      %238 = vector.shape_cast %237 : vector<1xf32> to vector<1x1xf32>
      %239 = vector.shape_cast %238 : vector<1x1xf32> to vector<1x1xf32>
      %240 = vector.broadcast %239 : vector<1x1xf32> to vector<1x128xf32>
      %241 = arith.addf %217, %235 : vector<1x128xf32>
      %242 = arith.addf %218, %240 : vector<1x128xf32>
      %c8_i32_110 = arith.constant 8 : i32
      %243 = arith.muli %arg9, %c8_i32_110 : i32
      %c7_i32 = arith.constant 7 : i32
      %244 = arith.addi %243, %c7_i32 : i32
      %245 = vector.broadcast %244 : i32 to vector<1x128xi32>
      %246 = arith.cmpi eq, %17, %245 : vector<1x128xi32>
      %247 = arith.select %246, %241, %223 : vector<1x128xi1>, vector<1x128xf32>
      %248 = arith.mulf %241, %13 : vector<1x128xf32>
      %249 = arith.mulf %242, %14 : vector<1x128xf32>
      %250 = arith.addf %248, %249 : vector<1x128xf32>
      %251 = vector.extract_strided_slice %74 {offsets = [7, 0], sizes = [1, 128], strides = [1, 1]} : vector<8x128xf32> to vector<1x128xf32>
      %252 = arith.addf %250, %251 : vector<1x128xf32>
      %cst_111 = arith.constant 0.000000e+00 : f32
      %253 = vector.broadcast %cst_111 : f32 to vector<1x128xf32>
      %254 = arith.maximumf %252, %253 : vector<1x128xf32>
      %255 = arith.mulf %254, %15 : vector<1x128xf32>
      %cst_112 = arith.constant dense<0.000000e+00> : vector<1xf32>
      %256 = vector.multi_reduction <add>, %255, %cst_112 [1] : vector<1x128xf32> to vector<1xf32>
      %257 = vector.shape_cast %256 : vector<1xf32> to vector<1x1xf32>
      %258 = vector.shape_cast %257 : vector<1x1xf32> to vector<1x1xf32>
      %259 = vector.broadcast %258 : vector<1x1xf32> to vector<1x128xf32>
      %260 = arith.mulf %254, %16 : vector<1x128xf32>
      %cst_113 = arith.constant dense<0.000000e+00> : vector<1xf32>
      %261 = vector.multi_reduction <add>, %260, %cst_113 [1] : vector<1x128xf32> to vector<1xf32>
      %262 = vector.shape_cast %261 : vector<1xf32> to vector<1x1xf32>
      %263 = vector.shape_cast %262 : vector<1x1xf32> to vector<1x1xf32>
      %264 = vector.broadcast %263 : vector<1x1xf32> to vector<1x128xf32>
      %265 = arith.addf %241, %259 : vector<1x128xf32>
      %266 = arith.addf %242, %264 : vector<1x128xf32>
      scf.yield %265, %266, %247 : vector<1x128xf32>, vector<1x128xf32>, vector<1x128xf32>
    }
    %c16_i32_37 = arith.constant 16 : i32
    %c0_38 = arith.constant 0 : index
    %c2 = arith.constant 2 : index
    %c0_39 = arith.constant 0 : index
    %35 = vector.load %arg6[%c0_38, %c2, %c0_39] : memref<1x8x128xf32, #tpu.memory_space<vmem>>, vector<1x1x128xf32>
    %36 = vector.shape_cast %35 : vector<1x1x128xf32> to vector<1x128xf32>
    %37 = vector.shape_cast %34#2 : vector<1x128xf32> to vector<1x1x128xf32>
    tpu.vector_store %arg6[%c0_38, %c2, %c0_39], %37 {strides = array<i32>} : memref<1x8x128xf32, #tpu.memory_space<vmem>>, vector<1x1x128xf32>,
    %cst_40 = arith.constant 0.000000e+00 : f32
    %38 = vector.broadcast %cst_40 : f32 to vector<1x128xf32>
    %c0_i32_41 = arith.constant 0 : i32
    %c16_i32_42 = arith.constant 16 : i32
    %39 = arith.addi %c0_i32_41, %c16_i32_42 : i32
    %c1_i32_43 = arith.constant 1 : i32
    %40:3 = scf.for %arg9 = %c0_i32_41 to %39 step %c1_i32_43 iter_args(%arg10 = %34#0, %arg11 = %34#1, %arg12 = %38) -> (vector<1x128xf32>, vector<1x128xf32>, vector<1x128xf32>)  : i32 {
      %c8_i32 = arith.constant 8 : i32
      %70 = arith.muli %arg9, %c8_i32 : i32
      %c384_i32 = arith.constant 384 : i32
      %71 = arith.addi %c384_i32, %70 : i32
      %72 = tpu.assume_multiple %71, 8 : i32
      %73 = arith.index_cast %72 : i32 to index
      %c0_79 = arith.constant 0 : index
      %74 = vector.load %arg7[%73, %c0_79] : memref<1024x128xf32, #tpu.memory_space<vmem>>, vector<8x128xf32>
      %c8_i32_80 = arith.constant 8 : i32
      %75 = arith.muli %arg9, %c8_i32_80 : i32
      %c0_i32_81 = arith.constant 0 : i32
      %76 = arith.addi %75, %c0_i32_81 : i32
      %77 = vector.broadcast %76 : i32 to vector<1x128xi32>
      %78 = arith.cmpi eq, %17, %77 : vector<1x128xi32>
      %79 = arith.select %78, %arg10, %arg12 : vector<1x128xi1>, vector<1x128xf32>
      %80 = arith.mulf %arg10, %13 : vector<1x128xf32>
      %81 = arith.mulf %arg11, %14 : vector<1x128xf32>
      %82 = arith.addf %80, %81 : vector<1x128xf32>
      %83 = vector.extract_strided_slice %74 {offsets = [0, 0], sizes = [1, 128], strides = [1, 1]} : vector<8x128xf32> to vector<1x128xf32>
      %84 = arith.addf %82, %83 : vector<1x128xf32>
      %cst_82 = arith.constant 0.000000e+00 : f32
      %85 = vector.broadcast %cst_82 : f32 to vector<1x128xf32>
      %86 = arith.maximumf %84, %85 : vector<1x128xf32>
      %87 = arith.mulf %86, %15 : vector<1x128xf32>
      %cst_83 = arith.constant dense<0.000000e+00> : vector<1xf32>
      %88 = vector.multi_reduction <add>, %87, %cst_83 [1] : vector<1x128xf32> to vector<1xf32>
      %89 = vector.shape_cast %88 : vector<1xf32> to vector<1x1xf32>
      %90 = vector.shape_cast %89 : vector<1x1xf32> to vector<1x1xf32>
      %91 = vector.broadcast %90 : vector<1x1xf32> to vector<1x128xf32>
      %92 = arith.mulf %86, %16 : vector<1x128xf32>
      %cst_84 = arith.constant dense<0.000000e+00> : vector<1xf32>
      %93 = vector.multi_reduction <add>, %92, %cst_84 [1] : vector<1x128xf32> to vector<1xf32>
      %94 = vector.shape_cast %93 : vector<1xf32> to vector<1x1xf32>
      %95 = vector.shape_cast %94 : vector<1x1xf32> to vector<1x1xf32>
      %96 = vector.broadcast %95 : vector<1x1xf32> to vector<1x128xf32>
      %97 = arith.addf %arg10, %91 : vector<1x128xf32>
      %98 = arith.addf %arg11, %96 : vector<1x128xf32>
      %c8_i32_85 = arith.constant 8 : i32
      %99 = arith.muli %arg9, %c8_i32_85 : i32
      %c1_i32_86 = arith.constant 1 : i32
      %100 = arith.addi %99, %c1_i32_86 : i32
      %101 = vector.broadcast %100 : i32 to vector<1x128xi32>
      %102 = arith.cmpi eq, %17, %101 : vector<1x128xi32>
      %103 = arith.select %102, %97, %79 : vector<1x128xi1>, vector<1x128xf32>
      %104 = arith.mulf %97, %13 : vector<1x128xf32>
      %105 = arith.mulf %98, %14 : vector<1x128xf32>
      %106 = arith.addf %104, %105 : vector<1x128xf32>
      %107 = vector.extract_strided_slice %74 {offsets = [1, 0], sizes = [1, 128], strides = [1, 1]} : vector<8x128xf32> to vector<1x128xf32>
      %108 = arith.addf %106, %107 : vector<1x128xf32>
      %cst_87 = arith.constant 0.000000e+00 : f32
      %109 = vector.broadcast %cst_87 : f32 to vector<1x128xf32>
      %110 = arith.maximumf %108, %109 : vector<1x128xf32>
      %111 = arith.mulf %110, %15 : vector<1x128xf32>
      %cst_88 = arith.constant dense<0.000000e+00> : vector<1xf32>
      %112 = vector.multi_reduction <add>, %111, %cst_88 [1] : vector<1x128xf32> to vector<1xf32>
      %113 = vector.shape_cast %112 : vector<1xf32> to vector<1x1xf32>
      %114 = vector.shape_cast %113 : vector<1x1xf32> to vector<1x1xf32>
      %115 = vector.broadcast %114 : vector<1x1xf32> to vector<1x128xf32>
      %116 = arith.mulf %110, %16 : vector<1x128xf32>
      %cst_89 = arith.constant dense<0.000000e+00> : vector<1xf32>
      %117 = vector.multi_reduction <add>, %116, %cst_89 [1] : vector<1x128xf32> to vector<1xf32>
      %118 = vector.shape_cast %117 : vector<1xf32> to vector<1x1xf32>
      %119 = vector.shape_cast %118 : vector<1x1xf32> to vector<1x1xf32>
      %120 = vector.broadcast %119 : vector<1x1xf32> to vector<1x128xf32>
      %121 = arith.addf %97, %115 : vector<1x128xf32>
      %122 = arith.addf %98, %120 : vector<1x128xf32>
      %c8_i32_90 = arith.constant 8 : i32
      %123 = arith.muli %arg9, %c8_i32_90 : i32
      %c2_i32 = arith.constant 2 : i32
      %124 = arith.addi %123, %c2_i32 : i32
      %125 = vector.broadcast %124 : i32 to vector<1x128xi32>
      %126 = arith.cmpi eq, %17, %125 : vector<1x128xi32>
      %127 = arith.select %126, %121, %103 : vector<1x128xi1>, vector<1x128xf32>
      %128 = arith.mulf %121, %13 : vector<1x128xf32>
      %129 = arith.mulf %122, %14 : vector<1x128xf32>
      %130 = arith.addf %128, %129 : vector<1x128xf32>
      %131 = vector.extract_strided_slice %74 {offsets = [2, 0], sizes = [1, 128], strides = [1, 1]} : vector<8x128xf32> to vector<1x128xf32>
      %132 = arith.addf %130, %131 : vector<1x128xf32>
      %cst_91 = arith.constant 0.000000e+00 : f32
      %133 = vector.broadcast %cst_91 : f32 to vector<1x128xf32>
      %134 = arith.maximumf %132, %133 : vector<1x128xf32>
      %135 = arith.mulf %134, %15 : vector<1x128xf32>
      %cst_92 = arith.constant dense<0.000000e+00> : vector<1xf32>
      %136 = vector.multi_reduction <add>, %135, %cst_92 [1] : vector<1x128xf32> to vector<1xf32>
      %137 = vector.shape_cast %136 : vector<1xf32> to vector<1x1xf32>
      %138 = vector.shape_cast %137 : vector<1x1xf32> to vector<1x1xf32>
      %139 = vector.broadcast %138 : vector<1x1xf32> to vector<1x128xf32>
      %140 = arith.mulf %134, %16 : vector<1x128xf32>
      %cst_93 = arith.constant dense<0.000000e+00> : vector<1xf32>
      %141 = vector.multi_reduction <add>, %140, %cst_93 [1] : vector<1x128xf32> to vector<1xf32>
      %142 = vector.shape_cast %141 : vector<1xf32> to vector<1x1xf32>
      %143 = vector.shape_cast %142 : vector<1x1xf32> to vector<1x1xf32>
      %144 = vector.broadcast %143 : vector<1x1xf32> to vector<1x128xf32>
      %145 = arith.addf %121, %139 : vector<1x128xf32>
      %146 = arith.addf %122, %144 : vector<1x128xf32>
      %c8_i32_94 = arith.constant 8 : i32
      %147 = arith.muli %arg9, %c8_i32_94 : i32
      %c3_i32 = arith.constant 3 : i32
      %148 = arith.addi %147, %c3_i32 : i32
      %149 = vector.broadcast %148 : i32 to vector<1x128xi32>
      %150 = arith.cmpi eq, %17, %149 : vector<1x128xi32>
      %151 = arith.select %150, %145, %127 : vector<1x128xi1>, vector<1x128xf32>
      %152 = arith.mulf %145, %13 : vector<1x128xf32>
      %153 = arith.mulf %146, %14 : vector<1x128xf32>
      %154 = arith.addf %152, %153 : vector<1x128xf32>
      %155 = vector.extract_strided_slice %74 {offsets = [3, 0], sizes = [1, 128], strides = [1, 1]} : vector<8x128xf32> to vector<1x128xf32>
      %156 = arith.addf %154, %155 : vector<1x128xf32>
      %cst_95 = arith.constant 0.000000e+00 : f32
      %157 = vector.broadcast %cst_95 : f32 to vector<1x128xf32>
      %158 = arith.maximumf %156, %157 : vector<1x128xf32>
      %159 = arith.mulf %158, %15 : vector<1x128xf32>
      %cst_96 = arith.constant dense<0.000000e+00> : vector<1xf32>
      %160 = vector.multi_reduction <add>, %159, %cst_96 [1] : vector<1x128xf32> to vector<1xf32>
      %161 = vector.shape_cast %160 : vector<1xf32> to vector<1x1xf32>
      %162 = vector.shape_cast %161 : vector<1x1xf32> to vector<1x1xf32>
      %163 = vector.broadcast %162 : vector<1x1xf32> to vector<1x128xf32>
      %164 = arith.mulf %158, %16 : vector<1x128xf32>
      %cst_97 = arith.constant dense<0.000000e+00> : vector<1xf32>
      %165 = vector.multi_reduction <add>, %164, %cst_97 [1] : vector<1x128xf32> to vector<1xf32>
      %166 = vector.shape_cast %165 : vector<1xf32> to vector<1x1xf32>
      %167 = vector.shape_cast %166 : vector<1x1xf32> to vector<1x1xf32>
      %168 = vector.broadcast %167 : vector<1x1xf32> to vector<1x128xf32>
      %169 = arith.addf %145, %163 : vector<1x128xf32>
      %170 = arith.addf %146, %168 : vector<1x128xf32>
      %c8_i32_98 = arith.constant 8 : i32
      %171 = arith.muli %arg9, %c8_i32_98 : i32
      %c4_i32 = arith.constant 4 : i32
      %172 = arith.addi %171, %c4_i32 : i32
      %173 = vector.broadcast %172 : i32 to vector<1x128xi32>
      %174 = arith.cmpi eq, %17, %173 : vector<1x128xi32>
      %175 = arith.select %174, %169, %151 : vector<1x128xi1>, vector<1x128xf32>
      %176 = arith.mulf %169, %13 : vector<1x128xf32>
      %177 = arith.mulf %170, %14 : vector<1x128xf32>
      %178 = arith.addf %176, %177 : vector<1x128xf32>
      %179 = vector.extract_strided_slice %74 {offsets = [4, 0], sizes = [1, 128], strides = [1, 1]} : vector<8x128xf32> to vector<1x128xf32>
      %180 = arith.addf %178, %179 : vector<1x128xf32>
      %cst_99 = arith.constant 0.000000e+00 : f32
      %181 = vector.broadcast %cst_99 : f32 to vector<1x128xf32>
      %182 = arith.maximumf %180, %181 : vector<1x128xf32>
      %183 = arith.mulf %182, %15 : vector<1x128xf32>
      %cst_100 = arith.constant dense<0.000000e+00> : vector<1xf32>
      %184 = vector.multi_reduction <add>, %183, %cst_100 [1] : vector<1x128xf32> to vector<1xf32>
      %185 = vector.shape_cast %184 : vector<1xf32> to vector<1x1xf32>
      %186 = vector.shape_cast %185 : vector<1x1xf32> to vector<1x1xf32>
      %187 = vector.broadcast %186 : vector<1x1xf32> to vector<1x128xf32>
      %188 = arith.mulf %182, %16 : vector<1x128xf32>
      %cst_101 = arith.constant dense<0.000000e+00> : vector<1xf32>
      %189 = vector.multi_reduction <add>, %188, %cst_101 [1] : vector<1x128xf32> to vector<1xf32>
      %190 = vector.shape_cast %189 : vector<1xf32> to vector<1x1xf32>
      %191 = vector.shape_cast %190 : vector<1x1xf32> to vector<1x1xf32>
      %192 = vector.broadcast %191 : vector<1x1xf32> to vector<1x128xf32>
      %193 = arith.addf %169, %187 : vector<1x128xf32>
      %194 = arith.addf %170, %192 : vector<1x128xf32>
      %c8_i32_102 = arith.constant 8 : i32
      %195 = arith.muli %arg9, %c8_i32_102 : i32
      %c5_i32 = arith.constant 5 : i32
      %196 = arith.addi %195, %c5_i32 : i32
      %197 = vector.broadcast %196 : i32 to vector<1x128xi32>
      %198 = arith.cmpi eq, %17, %197 : vector<1x128xi32>
      %199 = arith.select %198, %193, %175 : vector<1x128xi1>, vector<1x128xf32>
      %200 = arith.mulf %193, %13 : vector<1x128xf32>
      %201 = arith.mulf %194, %14 : vector<1x128xf32>
      %202 = arith.addf %200, %201 : vector<1x128xf32>
      %203 = vector.extract_strided_slice %74 {offsets = [5, 0], sizes = [1, 128], strides = [1, 1]} : vector<8x128xf32> to vector<1x128xf32>
      %204 = arith.addf %202, %203 : vector<1x128xf32>
      %cst_103 = arith.constant 0.000000e+00 : f32
      %205 = vector.broadcast %cst_103 : f32 to vector<1x128xf32>
      %206 = arith.maximumf %204, %205 : vector<1x128xf32>
      %207 = arith.mulf %206, %15 : vector<1x128xf32>
      %cst_104 = arith.constant dense<0.000000e+00> : vector<1xf32>
      %208 = vector.multi_reduction <add>, %207, %cst_104 [1] : vector<1x128xf32> to vector<1xf32>
      %209 = vector.shape_cast %208 : vector<1xf32> to vector<1x1xf32>
      %210 = vector.shape_cast %209 : vector<1x1xf32> to vector<1x1xf32>
      %211 = vector.broadcast %210 : vector<1x1xf32> to vector<1x128xf32>
      %212 = arith.mulf %206, %16 : vector<1x128xf32>
      %cst_105 = arith.constant dense<0.000000e+00> : vector<1xf32>
      %213 = vector.multi_reduction <add>, %212, %cst_105 [1] : vector<1x128xf32> to vector<1xf32>
      %214 = vector.shape_cast %213 : vector<1xf32> to vector<1x1xf32>
      %215 = vector.shape_cast %214 : vector<1x1xf32> to vector<1x1xf32>
      %216 = vector.broadcast %215 : vector<1x1xf32> to vector<1x128xf32>
      %217 = arith.addf %193, %211 : vector<1x128xf32>
      %218 = arith.addf %194, %216 : vector<1x128xf32>
      %c8_i32_106 = arith.constant 8 : i32
      %219 = arith.muli %arg9, %c8_i32_106 : i32
      %c6_i32 = arith.constant 6 : i32
      %220 = arith.addi %219, %c6_i32 : i32
      %221 = vector.broadcast %220 : i32 to vector<1x128xi32>
      %222 = arith.cmpi eq, %17, %221 : vector<1x128xi32>
      %223 = arith.select %222, %217, %199 : vector<1x128xi1>, vector<1x128xf32>
      %224 = arith.mulf %217, %13 : vector<1x128xf32>
      %225 = arith.mulf %218, %14 : vector<1x128xf32>
      %226 = arith.addf %224, %225 : vector<1x128xf32>
      %227 = vector.extract_strided_slice %74 {offsets = [6, 0], sizes = [1, 128], strides = [1, 1]} : vector<8x128xf32> to vector<1x128xf32>
      %228 = arith.addf %226, %227 : vector<1x128xf32>
      %cst_107 = arith.constant 0.000000e+00 : f32
      %229 = vector.broadcast %cst_107 : f32 to vector<1x128xf32>
      %230 = arith.maximumf %228, %229 : vector<1x128xf32>
      %231 = arith.mulf %230, %15 : vector<1x128xf32>
      %cst_108 = arith.constant dense<0.000000e+00> : vector<1xf32>
      %232 = vector.multi_reduction <add>, %231, %cst_108 [1] : vector<1x128xf32> to vector<1xf32>
      %233 = vector.shape_cast %232 : vector<1xf32> to vector<1x1xf32>
      %234 = vector.shape_cast %233 : vector<1x1xf32> to vector<1x1xf32>
      %235 = vector.broadcast %234 : vector<1x1xf32> to vector<1x128xf32>
      %236 = arith.mulf %230, %16 : vector<1x128xf32>
      %cst_109 = arith.constant dense<0.000000e+00> : vector<1xf32>
      %237 = vector.multi_reduction <add>, %236, %cst_109 [1] : vector<1x128xf32> to vector<1xf32>
      %238 = vector.shape_cast %237 : vector<1xf32> to vector<1x1xf32>
      %239 = vector.shape_cast %238 : vector<1x1xf32> to vector<1x1xf32>
      %240 = vector.broadcast %239 : vector<1x1xf32> to vector<1x128xf32>
      %241 = arith.addf %217, %235 : vector<1x128xf32>
      %242 = arith.addf %218, %240 : vector<1x128xf32>
      %c8_i32_110 = arith.constant 8 : i32
      %243 = arith.muli %arg9, %c8_i32_110 : i32
      %c7_i32 = arith.constant 7 : i32
      %244 = arith.addi %243, %c7_i32 : i32
      %245 = vector.broadcast %244 : i32 to vector<1x128xi32>
      %246 = arith.cmpi eq, %17, %245 : vector<1x128xi32>
      %247 = arith.select %246, %241, %223 : vector<1x128xi1>, vector<1x128xf32>
      %248 = arith.mulf %241, %13 : vector<1x128xf32>
      %249 = arith.mulf %242, %14 : vector<1x128xf32>
      %250 = arith.addf %248, %249 : vector<1x128xf32>
      %251 = vector.extract_strided_slice %74 {offsets = [7, 0], sizes = [1, 128], strides = [1, 1]} : vector<8x128xf32> to vector<1x128xf32>
      %252 = arith.addf %250, %251 : vector<1x128xf32>
      %cst_111 = arith.constant 0.000000e+00 : f32
      %253 = vector.broadcast %cst_111 : f32 to vector<1x128xf32>
      %254 = arith.maximumf %252, %253 : vector<1x128xf32>
      %255 = arith.mulf %254, %15 : vector<1x128xf32>
      %cst_112 = arith.constant dense<0.000000e+00> : vector<1xf32>
      %256 = vector.multi_reduction <add>, %255, %cst_112 [1] : vector<1x128xf32> to vector<1xf32>
      %257 = vector.shape_cast %256 : vector<1xf32> to vector<1x1xf32>
      %258 = vector.shape_cast %257 : vector<1x1xf32> to vector<1x1xf32>
      %259 = vector.broadcast %258 : vector<1x1xf32> to vector<1x128xf32>
      %260 = arith.mulf %254, %16 : vector<1x128xf32>
      %cst_113 = arith.constant dense<0.000000e+00> : vector<1xf32>
      %261 = vector.multi_reduction <add>, %260, %cst_113 [1] : vector<1x128xf32> to vector<1xf32>
      %262 = vector.shape_cast %261 : vector<1xf32> to vector<1x1xf32>
      %263 = vector.shape_cast %262 : vector<1x1xf32> to vector<1x1xf32>
      %264 = vector.broadcast %263 : vector<1x1xf32> to vector<1x128xf32>
      %265 = arith.addf %241, %259 : vector<1x128xf32>
      %266 = arith.addf %242, %264 : vector<1x128xf32>
      scf.yield %265, %266, %247 : vector<1x128xf32>, vector<1x128xf32>, vector<1x128xf32>
    }
    %c16_i32_44 = arith.constant 16 : i32
    %c0_45 = arith.constant 0 : index
    %c3 = arith.constant 3 : index
    %c0_46 = arith.constant 0 : index
    %41 = vector.load %arg6[%c0_45, %c3, %c0_46] : memref<1x8x128xf32, #tpu.memory_space<vmem>>, vector<1x1x128xf32>
    %42 = vector.shape_cast %41 : vector<1x1x128xf32> to vector<1x128xf32>
    %43 = vector.shape_cast %40#2 : vector<1x128xf32> to vector<1x1x128xf32>
    tpu.vector_store %arg6[%c0_45, %c3, %c0_46], %43 {strides = array<i32>} : memref<1x8x128xf32, #tpu.memory_space<vmem>>, vector<1x1x128xf32>,
    %cst_47 = arith.constant 0.000000e+00 : f32
    %44 = vector.broadcast %cst_47 : f32 to vector<1x128xf32>
    %c0_i32_48 = arith.constant 0 : i32
    %c16_i32_49 = arith.constant 16 : i32
    %45 = arith.addi %c0_i32_48, %c16_i32_49 : i32
    %c1_i32_50 = arith.constant 1 : i32
    %46:3 = scf.for %arg9 = %c0_i32_48 to %45 step %c1_i32_50 iter_args(%arg10 = %40#0, %arg11 = %40#1, %arg12 = %44) -> (vector<1x128xf32>, vector<1x128xf32>, vector<1x128xf32>)  : i32 {
      %c8_i32 = arith.constant 8 : i32
      %70 = arith.muli %arg9, %c8_i32 : i32
      %c512_i32 = arith.constant 512 : i32
      %71 = arith.addi %c512_i32, %70 : i32
      %72 = tpu.assume_multiple %71, 8 : i32
      %73 = arith.index_cast %72 : i32 to index
      %c0_79 = arith.constant 0 : index
      %74 = vector.load %arg7[%73, %c0_79] : memref<1024x128xf32, #tpu.memory_space<vmem>>, vector<8x128xf32>
      %c8_i32_80 = arith.constant 8 : i32
      %75 = arith.muli %arg9, %c8_i32_80 : i32
      %c0_i32_81 = arith.constant 0 : i32
      %76 = arith.addi %75, %c0_i32_81 : i32
      %77 = vector.broadcast %76 : i32 to vector<1x128xi32>
      %78 = arith.cmpi eq, %17, %77 : vector<1x128xi32>
      %79 = arith.select %78, %arg10, %arg12 : vector<1x128xi1>, vector<1x128xf32>
      %80 = arith.mulf %arg10, %13 : vector<1x128xf32>
      %81 = arith.mulf %arg11, %14 : vector<1x128xf32>
      %82 = arith.addf %80, %81 : vector<1x128xf32>
      %83 = vector.extract_strided_slice %74 {offsets = [0, 0], sizes = [1, 128], strides = [1, 1]} : vector<8x128xf32> to vector<1x128xf32>
      %84 = arith.addf %82, %83 : vector<1x128xf32>
      %cst_82 = arith.constant 0.000000e+00 : f32
      %85 = vector.broadcast %cst_82 : f32 to vector<1x128xf32>
      %86 = arith.maximumf %84, %85 : vector<1x128xf32>
      %87 = arith.mulf %86, %15 : vector<1x128xf32>
      %cst_83 = arith.constant dense<0.000000e+00> : vector<1xf32>
      %88 = vector.multi_reduction <add>, %87, %cst_83 [1] : vector<1x128xf32> to vector<1xf32>
      %89 = vector.shape_cast %88 : vector<1xf32> to vector<1x1xf32>
      %90 = vector.shape_cast %89 : vector<1x1xf32> to vector<1x1xf32>
      %91 = vector.broadcast %90 : vector<1x1xf32> to vector<1x128xf32>
      %92 = arith.mulf %86, %16 : vector<1x128xf32>
      %cst_84 = arith.constant dense<0.000000e+00> : vector<1xf32>
      %93 = vector.multi_reduction <add>, %92, %cst_84 [1] : vector<1x128xf32> to vector<1xf32>
      %94 = vector.shape_cast %93 : vector<1xf32> to vector<1x1xf32>
      %95 = vector.shape_cast %94 : vector<1x1xf32> to vector<1x1xf32>
      %96 = vector.broadcast %95 : vector<1x1xf32> to vector<1x128xf32>
      %97 = arith.addf %arg10, %91 : vector<1x128xf32>
      %98 = arith.addf %arg11, %96 : vector<1x128xf32>
      %c8_i32_85 = arith.constant 8 : i32
      %99 = arith.muli %arg9, %c8_i32_85 : i32
      %c1_i32_86 = arith.constant 1 : i32
      %100 = arith.addi %99, %c1_i32_86 : i32
      %101 = vector.broadcast %100 : i32 to vector<1x128xi32>
      %102 = arith.cmpi eq, %17, %101 : vector<1x128xi32>
      %103 = arith.select %102, %97, %79 : vector<1x128xi1>, vector<1x128xf32>
      %104 = arith.mulf %97, %13 : vector<1x128xf32>
      %105 = arith.mulf %98, %14 : vector<1x128xf32>
      %106 = arith.addf %104, %105 : vector<1x128xf32>
      %107 = vector.extract_strided_slice %74 {offsets = [1, 0], sizes = [1, 128], strides = [1, 1]} : vector<8x128xf32> to vector<1x128xf32>
      %108 = arith.addf %106, %107 : vector<1x128xf32>
      %cst_87 = arith.constant 0.000000e+00 : f32
      %109 = vector.broadcast %cst_87 : f32 to vector<1x128xf32>
      %110 = arith.maximumf %108, %109 : vector<1x128xf32>
      %111 = arith.mulf %110, %15 : vector<1x128xf32>
      %cst_88 = arith.constant dense<0.000000e+00> : vector<1xf32>
      %112 = vector.multi_reduction <add>, %111, %cst_88 [1] : vector<1x128xf32> to vector<1xf32>
      %113 = vector.shape_cast %112 : vector<1xf32> to vector<1x1xf32>
      %114 = vector.shape_cast %113 : vector<1x1xf32> to vector<1x1xf32>
      %115 = vector.broadcast %114 : vector<1x1xf32> to vector<1x128xf32>
      %116 = arith.mulf %110, %16 : vector<1x128xf32>
      %cst_89 = arith.constant dense<0.000000e+00> : vector<1xf32>
      %117 = vector.multi_reduction <add>, %116, %cst_89 [1] : vector<1x128xf32> to vector<1xf32>
      %118 = vector.shape_cast %117 : vector<1xf32> to vector<1x1xf32>
      %119 = vector.shape_cast %118 : vector<1x1xf32> to vector<1x1xf32>
      %120 = vector.broadcast %119 : vector<1x1xf32> to vector<1x128xf32>
      %121 = arith.addf %97, %115 : vector<1x128xf32>
      %122 = arith.addf %98, %120 : vector<1x128xf32>
      %c8_i32_90 = arith.constant 8 : i32
      %123 = arith.muli %arg9, %c8_i32_90 : i32
      %c2_i32 = arith.constant 2 : i32
      %124 = arith.addi %123, %c2_i32 : i32
      %125 = vector.broadcast %124 : i32 to vector<1x128xi32>
      %126 = arith.cmpi eq, %17, %125 : vector<1x128xi32>
      %127 = arith.select %126, %121, %103 : vector<1x128xi1>, vector<1x128xf32>
      %128 = arith.mulf %121, %13 : vector<1x128xf32>
      %129 = arith.mulf %122, %14 : vector<1x128xf32>
      %130 = arith.addf %128, %129 : vector<1x128xf32>
      %131 = vector.extract_strided_slice %74 {offsets = [2, 0], sizes = [1, 128], strides = [1, 1]} : vector<8x128xf32> to vector<1x128xf32>
      %132 = arith.addf %130, %131 : vector<1x128xf32>
      %cst_91 = arith.constant 0.000000e+00 : f32
      %133 = vector.broadcast %cst_91 : f32 to vector<1x128xf32>
      %134 = arith.maximumf %132, %133 : vector<1x128xf32>
      %135 = arith.mulf %134, %15 : vector<1x128xf32>
      %cst_92 = arith.constant dense<0.000000e+00> : vector<1xf32>
      %136 = vector.multi_reduction <add>, %135, %cst_92 [1] : vector<1x128xf32> to vector<1xf32>
      %137 = vector.shape_cast %136 : vector<1xf32> to vector<1x1xf32>
      %138 = vector.shape_cast %137 : vector<1x1xf32> to vector<1x1xf32>
      %139 = vector.broadcast %138 : vector<1x1xf32> to vector<1x128xf32>
      %140 = arith.mulf %134, %16 : vector<1x128xf32>
      %cst_93 = arith.constant dense<0.000000e+00> : vector<1xf32>
      %141 = vector.multi_reduction <add>, %140, %cst_93 [1] : vector<1x128xf32> to vector<1xf32>
      %142 = vector.shape_cast %141 : vector<1xf32> to vector<1x1xf32>
      %143 = vector.shape_cast %142 : vector<1x1xf32> to vector<1x1xf32>
      %144 = vector.broadcast %143 : vector<1x1xf32> to vector<1x128xf32>
      %145 = arith.addf %121, %139 : vector<1x128xf32>
      %146 = arith.addf %122, %144 : vector<1x128xf32>
      %c8_i32_94 = arith.constant 8 : i32
      %147 = arith.muli %arg9, %c8_i32_94 : i32
      %c3_i32 = arith.constant 3 : i32
      %148 = arith.addi %147, %c3_i32 : i32
      %149 = vector.broadcast %148 : i32 to vector<1x128xi32>
      %150 = arith.cmpi eq, %17, %149 : vector<1x128xi32>
      %151 = arith.select %150, %145, %127 : vector<1x128xi1>, vector<1x128xf32>
      %152 = arith.mulf %145, %13 : vector<1x128xf32>
      %153 = arith.mulf %146, %14 : vector<1x128xf32>
      %154 = arith.addf %152, %153 : vector<1x128xf32>
      %155 = vector.extract_strided_slice %74 {offsets = [3, 0], sizes = [1, 128], strides = [1, 1]} : vector<8x128xf32> to vector<1x128xf32>
      %156 = arith.addf %154, %155 : vector<1x128xf32>
      %cst_95 = arith.constant 0.000000e+00 : f32
      %157 = vector.broadcast %cst_95 : f32 to vector<1x128xf32>
      %158 = arith.maximumf %156, %157 : vector<1x128xf32>
      %159 = arith.mulf %158, %15 : vector<1x128xf32>
      %cst_96 = arith.constant dense<0.000000e+00> : vector<1xf32>
      %160 = vector.multi_reduction <add>, %159, %cst_96 [1] : vector<1x128xf32> to vector<1xf32>
      %161 = vector.shape_cast %160 : vector<1xf32> to vector<1x1xf32>
      %162 = vector.shape_cast %161 : vector<1x1xf32> to vector<1x1xf32>
      %163 = vector.broadcast %162 : vector<1x1xf32> to vector<1x128xf32>
      %164 = arith.mulf %158, %16 : vector<1x128xf32>
      %cst_97 = arith.constant dense<0.000000e+00> : vector<1xf32>
      %165 = vector.multi_reduction <add>, %164, %cst_97 [1] : vector<1x128xf32> to vector<1xf32>
      %166 = vector.shape_cast %165 : vector<1xf32> to vector<1x1xf32>
      %167 = vector.shape_cast %166 : vector<1x1xf32> to vector<1x1xf32>
      %168 = vector.broadcast %167 : vector<1x1xf32> to vector<1x128xf32>
      %169 = arith.addf %145, %163 : vector<1x128xf32>
      %170 = arith.addf %146, %168 : vector<1x128xf32>
      %c8_i32_98 = arith.constant 8 : i32
      %171 = arith.muli %arg9, %c8_i32_98 : i32
      %c4_i32 = arith.constant 4 : i32
      %172 = arith.addi %171, %c4_i32 : i32
      %173 = vector.broadcast %172 : i32 to vector<1x128xi32>
      %174 = arith.cmpi eq, %17, %173 : vector<1x128xi32>
      %175 = arith.select %174, %169, %151 : vector<1x128xi1>, vector<1x128xf32>
      %176 = arith.mulf %169, %13 : vector<1x128xf32>
      %177 = arith.mulf %170, %14 : vector<1x128xf32>
      %178 = arith.addf %176, %177 : vector<1x128xf32>
      %179 = vector.extract_strided_slice %74 {offsets = [4, 0], sizes = [1, 128], strides = [1, 1]} : vector<8x128xf32> to vector<1x128xf32>
      %180 = arith.addf %178, %179 : vector<1x128xf32>
      %cst_99 = arith.constant 0.000000e+00 : f32
      %181 = vector.broadcast %cst_99 : f32 to vector<1x128xf32>
      %182 = arith.maximumf %180, %181 : vector<1x128xf32>
      %183 = arith.mulf %182, %15 : vector<1x128xf32>
      %cst_100 = arith.constant dense<0.000000e+00> : vector<1xf32>
      %184 = vector.multi_reduction <add>, %183, %cst_100 [1] : vector<1x128xf32> to vector<1xf32>
      %185 = vector.shape_cast %184 : vector<1xf32> to vector<1x1xf32>
      %186 = vector.shape_cast %185 : vector<1x1xf32> to vector<1x1xf32>
      %187 = vector.broadcast %186 : vector<1x1xf32> to vector<1x128xf32>
      %188 = arith.mulf %182, %16 : vector<1x128xf32>
      %cst_101 = arith.constant dense<0.000000e+00> : vector<1xf32>
      %189 = vector.multi_reduction <add>, %188, %cst_101 [1] : vector<1x128xf32> to vector<1xf32>
      %190 = vector.shape_cast %189 : vector<1xf32> to vector<1x1xf32>
      %191 = vector.shape_cast %190 : vector<1x1xf32> to vector<1x1xf32>
      %192 = vector.broadcast %191 : vector<1x1xf32> to vector<1x128xf32>
      %193 = arith.addf %169, %187 : vector<1x128xf32>
      %194 = arith.addf %170, %192 : vector<1x128xf32>
      %c8_i32_102 = arith.constant 8 : i32
      %195 = arith.muli %arg9, %c8_i32_102 : i32
      %c5_i32 = arith.constant 5 : i32
      %196 = arith.addi %195, %c5_i32 : i32
      %197 = vector.broadcast %196 : i32 to vector<1x128xi32>
      %198 = arith.cmpi eq, %17, %197 : vector<1x128xi32>
      %199 = arith.select %198, %193, %175 : vector<1x128xi1>, vector<1x128xf32>
      %200 = arith.mulf %193, %13 : vector<1x128xf32>
      %201 = arith.mulf %194, %14 : vector<1x128xf32>
      %202 = arith.addf %200, %201 : vector<1x128xf32>
      %203 = vector.extract_strided_slice %74 {offsets = [5, 0], sizes = [1, 128], strides = [1, 1]} : vector<8x128xf32> to vector<1x128xf32>
      %204 = arith.addf %202, %203 : vector<1x128xf32>
      %cst_103 = arith.constant 0.000000e+00 : f32
      %205 = vector.broadcast %cst_103 : f32 to vector<1x128xf32>
      %206 = arith.maximumf %204, %205 : vector<1x128xf32>
      %207 = arith.mulf %206, %15 : vector<1x128xf32>
      %cst_104 = arith.constant dense<0.000000e+00> : vector<1xf32>
      %208 = vector.multi_reduction <add>, %207, %cst_104 [1] : vector<1x128xf32> to vector<1xf32>
      %209 = vector.shape_cast %208 : vector<1xf32> to vector<1x1xf32>
      %210 = vector.shape_cast %209 : vector<1x1xf32> to vector<1x1xf32>
      %211 = vector.broadcast %210 : vector<1x1xf32> to vector<1x128xf32>
      %212 = arith.mulf %206, %16 : vector<1x128xf32>
      %cst_105 = arith.constant dense<0.000000e+00> : vector<1xf32>
      %213 = vector.multi_reduction <add>, %212, %cst_105 [1] : vector<1x128xf32> to vector<1xf32>
      %214 = vector.shape_cast %213 : vector<1xf32> to vector<1x1xf32>
      %215 = vector.shape_cast %214 : vector<1x1xf32> to vector<1x1xf32>
      %216 = vector.broadcast %215 : vector<1x1xf32> to vector<1x128xf32>
      %217 = arith.addf %193, %211 : vector<1x128xf32>
      %218 = arith.addf %194, %216 : vector<1x128xf32>
      %c8_i32_106 = arith.constant 8 : i32
      %219 = arith.muli %arg9, %c8_i32_106 : i32
      %c6_i32 = arith.constant 6 : i32
      %220 = arith.addi %219, %c6_i32 : i32
      %221 = vector.broadcast %220 : i32 to vector<1x128xi32>
      %222 = arith.cmpi eq, %17, %221 : vector<1x128xi32>
      %223 = arith.select %222, %217, %199 : vector<1x128xi1>, vector<1x128xf32>
      %224 = arith.mulf %217, %13 : vector<1x128xf32>
      %225 = arith.mulf %218, %14 : vector<1x128xf32>
      %226 = arith.addf %224, %225 : vector<1x128xf32>
      %227 = vector.extract_strided_slice %74 {offsets = [6, 0], sizes = [1, 128], strides = [1, 1]} : vector<8x128xf32> to vector<1x128xf32>
      %228 = arith.addf %226, %227 : vector<1x128xf32>
      %cst_107 = arith.constant 0.000000e+00 : f32
      %229 = vector.broadcast %cst_107 : f32 to vector<1x128xf32>
      %230 = arith.maximumf %228, %229 : vector<1x128xf32>
      %231 = arith.mulf %230, %15 : vector<1x128xf32>
      %cst_108 = arith.constant dense<0.000000e+00> : vector<1xf32>
      %232 = vector.multi_reduction <add>, %231, %cst_108 [1] : vector<1x128xf32> to vector<1xf32>
      %233 = vector.shape_cast %232 : vector<1xf32> to vector<1x1xf32>
      %234 = vector.shape_cast %233 : vector<1x1xf32> to vector<1x1xf32>
      %235 = vector.broadcast %234 : vector<1x1xf32> to vector<1x128xf32>
      %236 = arith.mulf %230, %16 : vector<1x128xf32>
      %cst_109 = arith.constant dense<0.000000e+00> : vector<1xf32>
      %237 = vector.multi_reduction <add>, %236, %cst_109 [1] : vector<1x128xf32> to vector<1xf32>
      %238 = vector.shape_cast %237 : vector<1xf32> to vector<1x1xf32>
      %239 = vector.shape_cast %238 : vector<1x1xf32> to vector<1x1xf32>
      %240 = vector.broadcast %239 : vector<1x1xf32> to vector<1x128xf32>
      %241 = arith.addf %217, %235 : vector<1x128xf32>
      %242 = arith.addf %218, %240 : vector<1x128xf32>
      %c8_i32_110 = arith.constant 8 : i32
      %243 = arith.muli %arg9, %c8_i32_110 : i32
      %c7_i32 = arith.constant 7 : i32
      %244 = arith.addi %243, %c7_i32 : i32
      %245 = vector.broadcast %244 : i32 to vector<1x128xi32>
      %246 = arith.cmpi eq, %17, %245 : vector<1x128xi32>
      %247 = arith.select %246, %241, %223 : vector<1x128xi1>, vector<1x128xf32>
      %248 = arith.mulf %241, %13 : vector<1x128xf32>
      %249 = arith.mulf %242, %14 : vector<1x128xf32>
      %250 = arith.addf %248, %249 : vector<1x128xf32>
      %251 = vector.extract_strided_slice %74 {offsets = [7, 0], sizes = [1, 128], strides = [1, 1]} : vector<8x128xf32> to vector<1x128xf32>
      %252 = arith.addf %250, %251 : vector<1x128xf32>
      %cst_111 = arith.constant 0.000000e+00 : f32
      %253 = vector.broadcast %cst_111 : f32 to vector<1x128xf32>
      %254 = arith.maximumf %252, %253 : vector<1x128xf32>
      %255 = arith.mulf %254, %15 : vector<1x128xf32>
      %cst_112 = arith.constant dense<0.000000e+00> : vector<1xf32>
      %256 = vector.multi_reduction <add>, %255, %cst_112 [1] : vector<1x128xf32> to vector<1xf32>
      %257 = vector.shape_cast %256 : vector<1xf32> to vector<1x1xf32>
      %258 = vector.shape_cast %257 : vector<1x1xf32> to vector<1x1xf32>
      %259 = vector.broadcast %258 : vector<1x1xf32> to vector<1x128xf32>
      %260 = arith.mulf %254, %16 : vector<1x128xf32>
      %cst_113 = arith.constant dense<0.000000e+00> : vector<1xf32>
      %261 = vector.multi_reduction <add>, %260, %cst_113 [1] : vector<1x128xf32> to vector<1xf32>
      %262 = vector.shape_cast %261 : vector<1xf32> to vector<1x1xf32>
      %263 = vector.shape_cast %262 : vector<1x1xf32> to vector<1x1xf32>
      %264 = vector.broadcast %263 : vector<1x1xf32> to vector<1x128xf32>
      %265 = arith.addf %241, %259 : vector<1x128xf32>
      %266 = arith.addf %242, %264 : vector<1x128xf32>
      scf.yield %265, %266, %247 : vector<1x128xf32>, vector<1x128xf32>, vector<1x128xf32>
    }
    %c16_i32_51 = arith.constant 16 : i32
    %c0_52 = arith.constant 0 : index
    %c4 = arith.constant 4 : index
    %c0_53 = arith.constant 0 : index
    %47 = vector.load %arg6[%c0_52, %c4, %c0_53] : memref<1x8x128xf32, #tpu.memory_space<vmem>>, vector<1x1x128xf32>
    %48 = vector.shape_cast %47 : vector<1x1x128xf32> to vector<1x128xf32>
    %49 = vector.shape_cast %46#2 : vector<1x128xf32> to vector<1x1x128xf32>
    tpu.vector_store %arg6[%c0_52, %c4, %c0_53], %49 {strides = array<i32>} : memref<1x8x128xf32, #tpu.memory_space<vmem>>, vector<1x1x128xf32>,
    %cst_54 = arith.constant 0.000000e+00 : f32
    %50 = vector.broadcast %cst_54 : f32 to vector<1x128xf32>
    %c0_i32_55 = arith.constant 0 : i32
    %c16_i32_56 = arith.constant 16 : i32
    %51 = arith.addi %c0_i32_55, %c16_i32_56 : i32
    %c1_i32_57 = arith.constant 1 : i32
    %52:3 = scf.for %arg9 = %c0_i32_55 to %51 step %c1_i32_57 iter_args(%arg10 = %46#0, %arg11 = %46#1, %arg12 = %50) -> (vector<1x128xf32>, vector<1x128xf32>, vector<1x128xf32>)  : i32 {
      %c8_i32 = arith.constant 8 : i32
      %70 = arith.muli %arg9, %c8_i32 : i32
      %c640_i32 = arith.constant 640 : i32
      %71 = arith.addi %c640_i32, %70 : i32
      %72 = tpu.assume_multiple %71, 8 : i32
      %73 = arith.index_cast %72 : i32 to index
      %c0_79 = arith.constant 0 : index
      %74 = vector.load %arg7[%73, %c0_79] : memref<1024x128xf32, #tpu.memory_space<vmem>>, vector<8x128xf32>
      %c8_i32_80 = arith.constant 8 : i32
      %75 = arith.muli %arg9, %c8_i32_80 : i32
      %c0_i32_81 = arith.constant 0 : i32
      %76 = arith.addi %75, %c0_i32_81 : i32
      %77 = vector.broadcast %76 : i32 to vector<1x128xi32>
      %78 = arith.cmpi eq, %17, %77 : vector<1x128xi32>
      %79 = arith.select %78, %arg10, %arg12 : vector<1x128xi1>, vector<1x128xf32>
      %80 = arith.mulf %arg10, %13 : vector<1x128xf32>
      %81 = arith.mulf %arg11, %14 : vector<1x128xf32>
      %82 = arith.addf %80, %81 : vector<1x128xf32>
      %83 = vector.extract_strided_slice %74 {offsets = [0, 0], sizes = [1, 128], strides = [1, 1]} : vector<8x128xf32> to vector<1x128xf32>
      %84 = arith.addf %82, %83 : vector<1x128xf32>
      %cst_82 = arith.constant 0.000000e+00 : f32
      %85 = vector.broadcast %cst_82 : f32 to vector<1x128xf32>
      %86 = arith.maximumf %84, %85 : vector<1x128xf32>
      %87 = arith.mulf %86, %15 : vector<1x128xf32>
      %cst_83 = arith.constant dense<0.000000e+00> : vector<1xf32>
      %88 = vector.multi_reduction <add>, %87, %cst_83 [1] : vector<1x128xf32> to vector<1xf32>
      %89 = vector.shape_cast %88 : vector<1xf32> to vector<1x1xf32>
      %90 = vector.shape_cast %89 : vector<1x1xf32> to vector<1x1xf32>
      %91 = vector.broadcast %90 : vector<1x1xf32> to vector<1x128xf32>
      %92 = arith.mulf %86, %16 : vector<1x128xf32>
      %cst_84 = arith.constant dense<0.000000e+00> : vector<1xf32>
      %93 = vector.multi_reduction <add>, %92, %cst_84 [1] : vector<1x128xf32> to vector<1xf32>
      %94 = vector.shape_cast %93 : vector<1xf32> to vector<1x1xf32>
      %95 = vector.shape_cast %94 : vector<1x1xf32> to vector<1x1xf32>
      %96 = vector.broadcast %95 : vector<1x1xf32> to vector<1x128xf32>
      %97 = arith.addf %arg10, %91 : vector<1x128xf32>
      %98 = arith.addf %arg11, %96 : vector<1x128xf32>
      %c8_i32_85 = arith.constant 8 : i32
      %99 = arith.muli %arg9, %c8_i32_85 : i32
      %c1_i32_86 = arith.constant 1 : i32
      %100 = arith.addi %99, %c1_i32_86 : i32
      %101 = vector.broadcast %100 : i32 to vector<1x128xi32>
      %102 = arith.cmpi eq, %17, %101 : vector<1x128xi32>
      %103 = arith.select %102, %97, %79 : vector<1x128xi1>, vector<1x128xf32>
      %104 = arith.mulf %97, %13 : vector<1x128xf32>
      %105 = arith.mulf %98, %14 : vector<1x128xf32>
      %106 = arith.addf %104, %105 : vector<1x128xf32>
      %107 = vector.extract_strided_slice %74 {offsets = [1, 0], sizes = [1, 128], strides = [1, 1]} : vector<8x128xf32> to vector<1x128xf32>
      %108 = arith.addf %106, %107 : vector<1x128xf32>
      %cst_87 = arith.constant 0.000000e+00 : f32
      %109 = vector.broadcast %cst_87 : f32 to vector<1x128xf32>
      %110 = arith.maximumf %108, %109 : vector<1x128xf32>
      %111 = arith.mulf %110, %15 : vector<1x128xf32>
      %cst_88 = arith.constant dense<0.000000e+00> : vector<1xf32>
      %112 = vector.multi_reduction <add>, %111, %cst_88 [1] : vector<1x128xf32> to vector<1xf32>
      %113 = vector.shape_cast %112 : vector<1xf32> to vector<1x1xf32>
      %114 = vector.shape_cast %113 : vector<1x1xf32> to vector<1x1xf32>
      %115 = vector.broadcast %114 : vector<1x1xf32> to vector<1x128xf32>
      %116 = arith.mulf %110, %16 : vector<1x128xf32>
      %cst_89 = arith.constant dense<0.000000e+00> : vector<1xf32>
      %117 = vector.multi_reduction <add>, %116, %cst_89 [1] : vector<1x128xf32> to vector<1xf32>
      %118 = vector.shape_cast %117 : vector<1xf32> to vector<1x1xf32>
      %119 = vector.shape_cast %118 : vector<1x1xf32> to vector<1x1xf32>
      %120 = vector.broadcast %119 : vector<1x1xf32> to vector<1x128xf32>
      %121 = arith.addf %97, %115 : vector<1x128xf32>
      %122 = arith.addf %98, %120 : vector<1x128xf32>
      %c8_i32_90 = arith.constant 8 : i32
      %123 = arith.muli %arg9, %c8_i32_90 : i32
      %c2_i32 = arith.constant 2 : i32
      %124 = arith.addi %123, %c2_i32 : i32
      %125 = vector.broadcast %124 : i32 to vector<1x128xi32>
      %126 = arith.cmpi eq, %17, %125 : vector<1x128xi32>
      %127 = arith.select %126, %121, %103 : vector<1x128xi1>, vector<1x128xf32>
      %128 = arith.mulf %121, %13 : vector<1x128xf32>
      %129 = arith.mulf %122, %14 : vector<1x128xf32>
      %130 = arith.addf %128, %129 : vector<1x128xf32>
      %131 = vector.extract_strided_slice %74 {offsets = [2, 0], sizes = [1, 128], strides = [1, 1]} : vector<8x128xf32> to vector<1x128xf32>
      %132 = arith.addf %130, %131 : vector<1x128xf32>
      %cst_91 = arith.constant 0.000000e+00 : f32
      %133 = vector.broadcast %cst_91 : f32 to vector<1x128xf32>
      %134 = arith.maximumf %132, %133 : vector<1x128xf32>
      %135 = arith.mulf %134, %15 : vector<1x128xf32>
      %cst_92 = arith.constant dense<0.000000e+00> : vector<1xf32>
      %136 = vector.multi_reduction <add>, %135, %cst_92 [1] : vector<1x128xf32> to vector<1xf32>
      %137 = vector.shape_cast %136 : vector<1xf32> to vector<1x1xf32>
      %138 = vector.shape_cast %137 : vector<1x1xf32> to vector<1x1xf32>
      %139 = vector.broadcast %138 : vector<1x1xf32> to vector<1x128xf32>
      %140 = arith.mulf %134, %16 : vector<1x128xf32>
      %cst_93 = arith.constant dense<0.000000e+00> : vector<1xf32>
      %141 = vector.multi_reduction <add>, %140, %cst_93 [1] : vector<1x128xf32> to vector<1xf32>
      %142 = vector.shape_cast %141 : vector<1xf32> to vector<1x1xf32>
      %143 = vector.shape_cast %142 : vector<1x1xf32> to vector<1x1xf32>
      %144 = vector.broadcast %143 : vector<1x1xf32> to vector<1x128xf32>
      %145 = arith.addf %121, %139 : vector<1x128xf32>
      %146 = arith.addf %122, %144 : vector<1x128xf32>
      %c8_i32_94 = arith.constant 8 : i32
      %147 = arith.muli %arg9, %c8_i32_94 : i32
      %c3_i32 = arith.constant 3 : i32
      %148 = arith.addi %147, %c3_i32 : i32
      %149 = vector.broadcast %148 : i32 to vector<1x128xi32>
      %150 = arith.cmpi eq, %17, %149 : vector<1x128xi32>
      %151 = arith.select %150, %145, %127 : vector<1x128xi1>, vector<1x128xf32>
      %152 = arith.mulf %145, %13 : vector<1x128xf32>
      %153 = arith.mulf %146, %14 : vector<1x128xf32>
      %154 = arith.addf %152, %153 : vector<1x128xf32>
      %155 = vector.extract_strided_slice %74 {offsets = [3, 0], sizes = [1, 128], strides = [1, 1]} : vector<8x128xf32> to vector<1x128xf32>
      %156 = arith.addf %154, %155 : vector<1x128xf32>
      %cst_95 = arith.constant 0.000000e+00 : f32
      %157 = vector.broadcast %cst_95 : f32 to vector<1x128xf32>
      %158 = arith.maximumf %156, %157 : vector<1x128xf32>
      %159 = arith.mulf %158, %15 : vector<1x128xf32>
      %cst_96 = arith.constant dense<0.000000e+00> : vector<1xf32>
      %160 = vector.multi_reduction <add>, %159, %cst_96 [1] : vector<1x128xf32> to vector<1xf32>
      %161 = vector.shape_cast %160 : vector<1xf32> to vector<1x1xf32>
      %162 = vector.shape_cast %161 : vector<1x1xf32> to vector<1x1xf32>
      %163 = vector.broadcast %162 : vector<1x1xf32> to vector<1x128xf32>
      %164 = arith.mulf %158, %16 : vector<1x128xf32>
      %cst_97 = arith.constant dense<0.000000e+00> : vector<1xf32>
      %165 = vector.multi_reduction <add>, %164, %cst_97 [1] : vector<1x128xf32> to vector<1xf32>
      %166 = vector.shape_cast %165 : vector<1xf32> to vector<1x1xf32>
      %167 = vector.shape_cast %166 : vector<1x1xf32> to vector<1x1xf32>
      %168 = vector.broadcast %167 : vector<1x1xf32> to vector<1x128xf32>
      %169 = arith.addf %145, %163 : vector<1x128xf32>
      %170 = arith.addf %146, %168 : vector<1x128xf32>
      %c8_i32_98 = arith.constant 8 : i32
      %171 = arith.muli %arg9, %c8_i32_98 : i32
      %c4_i32 = arith.constant 4 : i32
      %172 = arith.addi %171, %c4_i32 : i32
      %173 = vector.broadcast %172 : i32 to vector<1x128xi32>
      %174 = arith.cmpi eq, %17, %173 : vector<1x128xi32>
      %175 = arith.select %174, %169, %151 : vector<1x128xi1>, vector<1x128xf32>
      %176 = arith.mulf %169, %13 : vector<1x128xf32>
      %177 = arith.mulf %170, %14 : vector<1x128xf32>
      %178 = arith.addf %176, %177 : vector<1x128xf32>
      %179 = vector.extract_strided_slice %74 {offsets = [4, 0], sizes = [1, 128], strides = [1, 1]} : vector<8x128xf32> to vector<1x128xf32>
      %180 = arith.addf %178, %179 : vector<1x128xf32>
      %cst_99 = arith.constant 0.000000e+00 : f32
      %181 = vector.broadcast %cst_99 : f32 to vector<1x128xf32>
      %182 = arith.maximumf %180, %181 : vector<1x128xf32>
      %183 = arith.mulf %182, %15 : vector<1x128xf32>
      %cst_100 = arith.constant dense<0.000000e+00> : vector<1xf32>
      %184 = vector.multi_reduction <add>, %183, %cst_100 [1] : vector<1x128xf32> to vector<1xf32>
      %185 = vector.shape_cast %184 : vector<1xf32> to vector<1x1xf32>
      %186 = vector.shape_cast %185 : vector<1x1xf32> to vector<1x1xf32>
      %187 = vector.broadcast %186 : vector<1x1xf32> to vector<1x128xf32>
      %188 = arith.mulf %182, %16 : vector<1x128xf32>
      %cst_101 = arith.constant dense<0.000000e+00> : vector<1xf32>
      %189 = vector.multi_reduction <add>, %188, %cst_101 [1] : vector<1x128xf32> to vector<1xf32>
      %190 = vector.shape_cast %189 : vector<1xf32> to vector<1x1xf32>
      %191 = vector.shape_cast %190 : vector<1x1xf32> to vector<1x1xf32>
      %192 = vector.broadcast %191 : vector<1x1xf32> to vector<1x128xf32>
      %193 = arith.addf %169, %187 : vector<1x128xf32>
      %194 = arith.addf %170, %192 : vector<1x128xf32>
      %c8_i32_102 = arith.constant 8 : i32
      %195 = arith.muli %arg9, %c8_i32_102 : i32
      %c5_i32 = arith.constant 5 : i32
      %196 = arith.addi %195, %c5_i32 : i32
      %197 = vector.broadcast %196 : i32 to vector<1x128xi32>
      %198 = arith.cmpi eq, %17, %197 : vector<1x128xi32>
      %199 = arith.select %198, %193, %175 : vector<1x128xi1>, vector<1x128xf32>
      %200 = arith.mulf %193, %13 : vector<1x128xf32>
      %201 = arith.mulf %194, %14 : vector<1x128xf32>
      %202 = arith.addf %200, %201 : vector<1x128xf32>
      %203 = vector.extract_strided_slice %74 {offsets = [5, 0], sizes = [1, 128], strides = [1, 1]} : vector<8x128xf32> to vector<1x128xf32>
      %204 = arith.addf %202, %203 : vector<1x128xf32>
      %cst_103 = arith.constant 0.000000e+00 : f32
      %205 = vector.broadcast %cst_103 : f32 to vector<1x128xf32>
      %206 = arith.maximumf %204, %205 : vector<1x128xf32>
      %207 = arith.mulf %206, %15 : vector<1x128xf32>
      %cst_104 = arith.constant dense<0.000000e+00> : vector<1xf32>
      %208 = vector.multi_reduction <add>, %207, %cst_104 [1] : vector<1x128xf32> to vector<1xf32>
      %209 = vector.shape_cast %208 : vector<1xf32> to vector<1x1xf32>
      %210 = vector.shape_cast %209 : vector<1x1xf32> to vector<1x1xf32>
      %211 = vector.broadcast %210 : vector<1x1xf32> to vector<1x128xf32>
      %212 = arith.mulf %206, %16 : vector<1x128xf32>
      %cst_105 = arith.constant dense<0.000000e+00> : vector<1xf32>
      %213 = vector.multi_reduction <add>, %212, %cst_105 [1] : vector<1x128xf32> to vector<1xf32>
      %214 = vector.shape_cast %213 : vector<1xf32> to vector<1x1xf32>
      %215 = vector.shape_cast %214 : vector<1x1xf32> to vector<1x1xf32>
      %216 = vector.broadcast %215 : vector<1x1xf32> to vector<1x128xf32>
      %217 = arith.addf %193, %211 : vector<1x128xf32>
      %218 = arith.addf %194, %216 : vector<1x128xf32>
      %c8_i32_106 = arith.constant 8 : i32
      %219 = arith.muli %arg9, %c8_i32_106 : i32
      %c6_i32 = arith.constant 6 : i32
      %220 = arith.addi %219, %c6_i32 : i32
      %221 = vector.broadcast %220 : i32 to vector<1x128xi32>
      %222 = arith.cmpi eq, %17, %221 : vector<1x128xi32>
      %223 = arith.select %222, %217, %199 : vector<1x128xi1>, vector<1x128xf32>
      %224 = arith.mulf %217, %13 : vector<1x128xf32>
      %225 = arith.mulf %218, %14 : vector<1x128xf32>
      %226 = arith.addf %224, %225 : vector<1x128xf32>
      %227 = vector.extract_strided_slice %74 {offsets = [6, 0], sizes = [1, 128], strides = [1, 1]} : vector<8x128xf32> to vector<1x128xf32>
      %228 = arith.addf %226, %227 : vector<1x128xf32>
      %cst_107 = arith.constant 0.000000e+00 : f32
      %229 = vector.broadcast %cst_107 : f32 to vector<1x128xf32>
      %230 = arith.maximumf %228, %229 : vector<1x128xf32>
      %231 = arith.mulf %230, %15 : vector<1x128xf32>
      %cst_108 = arith.constant dense<0.000000e+00> : vector<1xf32>
      %232 = vector.multi_reduction <add>, %231, %cst_108 [1] : vector<1x128xf32> to vector<1xf32>
      %233 = vector.shape_cast %232 : vector<1xf32> to vector<1x1xf32>
      %234 = vector.shape_cast %233 : vector<1x1xf32> to vector<1x1xf32>
      %235 = vector.broadcast %234 : vector<1x1xf32> to vector<1x128xf32>
      %236 = arith.mulf %230, %16 : vector<1x128xf32>
      %cst_109 = arith.constant dense<0.000000e+00> : vector<1xf32>
      %237 = vector.multi_reduction <add>, %236, %cst_109 [1] : vector<1x128xf32> to vector<1xf32>
      %238 = vector.shape_cast %237 : vector<1xf32> to vector<1x1xf32>
      %239 = vector.shape_cast %238 : vector<1x1xf32> to vector<1x1xf32>
      %240 = vector.broadcast %239 : vector<1x1xf32> to vector<1x128xf32>
      %241 = arith.addf %217, %235 : vector<1x128xf32>
      %242 = arith.addf %218, %240 : vector<1x128xf32>
      %c8_i32_110 = arith.constant 8 : i32
      %243 = arith.muli %arg9, %c8_i32_110 : i32
      %c7_i32 = arith.constant 7 : i32
      %244 = arith.addi %243, %c7_i32 : i32
      %245 = vector.broadcast %244 : i32 to vector<1x128xi32>
      %246 = arith.cmpi eq, %17, %245 : vector<1x128xi32>
      %247 = arith.select %246, %241, %223 : vector<1x128xi1>, vector<1x128xf32>
      %248 = arith.mulf %241, %13 : vector<1x128xf32>
      %249 = arith.mulf %242, %14 : vector<1x128xf32>
      %250 = arith.addf %248, %249 : vector<1x128xf32>
      %251 = vector.extract_strided_slice %74 {offsets = [7, 0], sizes = [1, 128], strides = [1, 1]} : vector<8x128xf32> to vector<1x128xf32>
      %252 = arith.addf %250, %251 : vector<1x128xf32>
      %cst_111 = arith.constant 0.000000e+00 : f32
      %253 = vector.broadcast %cst_111 : f32 to vector<1x128xf32>
      %254 = arith.maximumf %252, %253 : vector<1x128xf32>
      %255 = arith.mulf %254, %15 : vector<1x128xf32>
      %cst_112 = arith.constant dense<0.000000e+00> : vector<1xf32>
      %256 = vector.multi_reduction <add>, %255, %cst_112 [1] : vector<1x128xf32> to vector<1xf32>
      %257 = vector.shape_cast %256 : vector<1xf32> to vector<1x1xf32>
      %258 = vector.shape_cast %257 : vector<1x1xf32> to vector<1x1xf32>
      %259 = vector.broadcast %258 : vector<1x1xf32> to vector<1x128xf32>
      %260 = arith.mulf %254, %16 : vector<1x128xf32>
      %cst_113 = arith.constant dense<0.000000e+00> : vector<1xf32>
      %261 = vector.multi_reduction <add>, %260, %cst_113 [1] : vector<1x128xf32> to vector<1xf32>
      %262 = vector.shape_cast %261 : vector<1xf32> to vector<1x1xf32>
      %263 = vector.shape_cast %262 : vector<1x1xf32> to vector<1x1xf32>
      %264 = vector.broadcast %263 : vector<1x1xf32> to vector<1x128xf32>
      %265 = arith.addf %241, %259 : vector<1x128xf32>
      %266 = arith.addf %242, %264 : vector<1x128xf32>
      scf.yield %265, %266, %247 : vector<1x128xf32>, vector<1x128xf32>, vector<1x128xf32>
    }
    %c16_i32_58 = arith.constant 16 : i32
    %c0_59 = arith.constant 0 : index
    %c5 = arith.constant 5 : index
    %c0_60 = arith.constant 0 : index
    %53 = vector.load %arg6[%c0_59, %c5, %c0_60] : memref<1x8x128xf32, #tpu.memory_space<vmem>>, vector<1x1x128xf32>
    %54 = vector.shape_cast %53 : vector<1x1x128xf32> to vector<1x128xf32>
    %55 = vector.shape_cast %52#2 : vector<1x128xf32> to vector<1x1x128xf32>
    tpu.vector_store %arg6[%c0_59, %c5, %c0_60], %55 {strides = array<i32>} : memref<1x8x128xf32, #tpu.memory_space<vmem>>, vector<1x1x128xf32>,
    %cst_61 = arith.constant 0.000000e+00 : f32
    %56 = vector.broadcast %cst_61 : f32 to vector<1x128xf32>
    %c0_i32_62 = arith.constant 0 : i32
    %c16_i32_63 = arith.constant 16 : i32
    %57 = arith.addi %c0_i32_62, %c16_i32_63 : i32
    %c1_i32_64 = arith.constant 1 : i32
    %58:3 = scf.for %arg9 = %c0_i32_62 to %57 step %c1_i32_64 iter_args(%arg10 = %52#0, %arg11 = %52#1, %arg12 = %56) -> (vector<1x128xf32>, vector<1x128xf32>, vector<1x128xf32>)  : i32 {
      %c8_i32 = arith.constant 8 : i32
      %70 = arith.muli %arg9, %c8_i32 : i32
      %c768_i32 = arith.constant 768 : i32
      %71 = arith.addi %c768_i32, %70 : i32
      %72 = tpu.assume_multiple %71, 8 : i32
      %73 = arith.index_cast %72 : i32 to index
      %c0_79 = arith.constant 0 : index
      %74 = vector.load %arg7[%73, %c0_79] : memref<1024x128xf32, #tpu.memory_space<vmem>>, vector<8x128xf32>
      %c8_i32_80 = arith.constant 8 : i32
      %75 = arith.muli %arg9, %c8_i32_80 : i32
      %c0_i32_81 = arith.constant 0 : i32
      %76 = arith.addi %75, %c0_i32_81 : i32
      %77 = vector.broadcast %76 : i32 to vector<1x128xi32>
      %78 = arith.cmpi eq, %17, %77 : vector<1x128xi32>
      %79 = arith.select %78, %arg10, %arg12 : vector<1x128xi1>, vector<1x128xf32>
      %80 = arith.mulf %arg10, %13 : vector<1x128xf32>
      %81 = arith.mulf %arg11, %14 : vector<1x128xf32>
      %82 = arith.addf %80, %81 : vector<1x128xf32>
      %83 = vector.extract_strided_slice %74 {offsets = [0, 0], sizes = [1, 128], strides = [1, 1]} : vector<8x128xf32> to vector<1x128xf32>
      %84 = arith.addf %82, %83 : vector<1x128xf32>
      %cst_82 = arith.constant 0.000000e+00 : f32
      %85 = vector.broadcast %cst_82 : f32 to vector<1x128xf32>
      %86 = arith.maximumf %84, %85 : vector<1x128xf32>
      %87 = arith.mulf %86, %15 : vector<1x128xf32>
      %cst_83 = arith.constant dense<0.000000e+00> : vector<1xf32>
      %88 = vector.multi_reduction <add>, %87, %cst_83 [1] : vector<1x128xf32> to vector<1xf32>
      %89 = vector.shape_cast %88 : vector<1xf32> to vector<1x1xf32>
      %90 = vector.shape_cast %89 : vector<1x1xf32> to vector<1x1xf32>
      %91 = vector.broadcast %90 : vector<1x1xf32> to vector<1x128xf32>
      %92 = arith.mulf %86, %16 : vector<1x128xf32>
      %cst_84 = arith.constant dense<0.000000e+00> : vector<1xf32>
      %93 = vector.multi_reduction <add>, %92, %cst_84 [1] : vector<1x128xf32> to vector<1xf32>
      %94 = vector.shape_cast %93 : vector<1xf32> to vector<1x1xf32>
      %95 = vector.shape_cast %94 : vector<1x1xf32> to vector<1x1xf32>
      %96 = vector.broadcast %95 : vector<1x1xf32> to vector<1x128xf32>
      %97 = arith.addf %arg10, %91 : vector<1x128xf32>
      %98 = arith.addf %arg11, %96 : vector<1x128xf32>
      %c8_i32_85 = arith.constant 8 : i32
      %99 = arith.muli %arg9, %c8_i32_85 : i32
      %c1_i32_86 = arith.constant 1 : i32
      %100 = arith.addi %99, %c1_i32_86 : i32
      %101 = vector.broadcast %100 : i32 to vector<1x128xi32>
      %102 = arith.cmpi eq, %17, %101 : vector<1x128xi32>
      %103 = arith.select %102, %97, %79 : vector<1x128xi1>, vector<1x128xf32>
      %104 = arith.mulf %97, %13 : vector<1x128xf32>
      %105 = arith.mulf %98, %14 : vector<1x128xf32>
      %106 = arith.addf %104, %105 : vector<1x128xf32>
      %107 = vector.extract_strided_slice %74 {offsets = [1, 0], sizes = [1, 128], strides = [1, 1]} : vector<8x128xf32> to vector<1x128xf32>
      %108 = arith.addf %106, %107 : vector<1x128xf32>
      %cst_87 = arith.constant 0.000000e+00 : f32
      %109 = vector.broadcast %cst_87 : f32 to vector<1x128xf32>
      %110 = arith.maximumf %108, %109 : vector<1x128xf32>
      %111 = arith.mulf %110, %15 : vector<1x128xf32>
      %cst_88 = arith.constant dense<0.000000e+00> : vector<1xf32>
      %112 = vector.multi_reduction <add>, %111, %cst_88 [1] : vector<1x128xf32> to vector<1xf32>
      %113 = vector.shape_cast %112 : vector<1xf32> to vector<1x1xf32>
      %114 = vector.shape_cast %113 : vector<1x1xf32> to vector<1x1xf32>
      %115 = vector.broadcast %114 : vector<1x1xf32> to vector<1x128xf32>
      %116 = arith.mulf %110, %16 : vector<1x128xf32>
      %cst_89 = arith.constant dense<0.000000e+00> : vector<1xf32>
      %117 = vector.multi_reduction <add>, %116, %cst_89 [1] : vector<1x128xf32> to vector<1xf32>
      %118 = vector.shape_cast %117 : vector<1xf32> to vector<1x1xf32>
      %119 = vector.shape_cast %118 : vector<1x1xf32> to vector<1x1xf32>
      %120 = vector.broadcast %119 : vector<1x1xf32> to vector<1x128xf32>
      %121 = arith.addf %97, %115 : vector<1x128xf32>
      %122 = arith.addf %98, %120 : vector<1x128xf32>
      %c8_i32_90 = arith.constant 8 : i32
      %123 = arith.muli %arg9, %c8_i32_90 : i32
      %c2_i32 = arith.constant 2 : i32
      %124 = arith.addi %123, %c2_i32 : i32
      %125 = vector.broadcast %124 : i32 to vector<1x128xi32>
      %126 = arith.cmpi eq, %17, %125 : vector<1x128xi32>
      %127 = arith.select %126, %121, %103 : vector<1x128xi1>, vector<1x128xf32>
      %128 = arith.mulf %121, %13 : vector<1x128xf32>
      %129 = arith.mulf %122, %14 : vector<1x128xf32>
      %130 = arith.addf %128, %129 : vector<1x128xf32>
      %131 = vector.extract_strided_slice %74 {offsets = [2, 0], sizes = [1, 128], strides = [1, 1]} : vector<8x128xf32> to vector<1x128xf32>
      %132 = arith.addf %130, %131 : vector<1x128xf32>
      %cst_91 = arith.constant 0.000000e+00 : f32
      %133 = vector.broadcast %cst_91 : f32 to vector<1x128xf32>
      %134 = arith.maximumf %132, %133 : vector<1x128xf32>
      %135 = arith.mulf %134, %15 : vector<1x128xf32>
      %cst_92 = arith.constant dense<0.000000e+00> : vector<1xf32>
      %136 = vector.multi_reduction <add>, %135, %cst_92 [1] : vector<1x128xf32> to vector<1xf32>
      %137 = vector.shape_cast %136 : vector<1xf32> to vector<1x1xf32>
      %138 = vector.shape_cast %137 : vector<1x1xf32> to vector<1x1xf32>
      %139 = vector.broadcast %138 : vector<1x1xf32> to vector<1x128xf32>
      %140 = arith.mulf %134, %16 : vector<1x128xf32>
      %cst_93 = arith.constant dense<0.000000e+00> : vector<1xf32>
      %141 = vector.multi_reduction <add>, %140, %cst_93 [1] : vector<1x128xf32> to vector<1xf32>
      %142 = vector.shape_cast %141 : vector<1xf32> to vector<1x1xf32>
      %143 = vector.shape_cast %142 : vector<1x1xf32> to vector<1x1xf32>
      %144 = vector.broadcast %143 : vector<1x1xf32> to vector<1x128xf32>
      %145 = arith.addf %121, %139 : vector<1x128xf32>
      %146 = arith.addf %122, %144 : vector<1x128xf32>
      %c8_i32_94 = arith.constant 8 : i32
      %147 = arith.muli %arg9, %c8_i32_94 : i32
      %c3_i32 = arith.constant 3 : i32
      %148 = arith.addi %147, %c3_i32 : i32
      %149 = vector.broadcast %148 : i32 to vector<1x128xi32>
      %150 = arith.cmpi eq, %17, %149 : vector<1x128xi32>
      %151 = arith.select %150, %145, %127 : vector<1x128xi1>, vector<1x128xf32>
      %152 = arith.mulf %145, %13 : vector<1x128xf32>
      %153 = arith.mulf %146, %14 : vector<1x128xf32>
      %154 = arith.addf %152, %153 : vector<1x128xf32>
      %155 = vector.extract_strided_slice %74 {offsets = [3, 0], sizes = [1, 128], strides = [1, 1]} : vector<8x128xf32> to vector<1x128xf32>
      %156 = arith.addf %154, %155 : vector<1x128xf32>
      %cst_95 = arith.constant 0.000000e+00 : f32
      %157 = vector.broadcast %cst_95 : f32 to vector<1x128xf32>
      %158 = arith.maximumf %156, %157 : vector<1x128xf32>
      %159 = arith.mulf %158, %15 : vector<1x128xf32>
      %cst_96 = arith.constant dense<0.000000e+00> : vector<1xf32>
      %160 = vector.multi_reduction <add>, %159, %cst_96 [1] : vector<1x128xf32> to vector<1xf32>
      %161 = vector.shape_cast %160 : vector<1xf32> to vector<1x1xf32>
      %162 = vector.shape_cast %161 : vector<1x1xf32> to vector<1x1xf32>
      %163 = vector.broadcast %162 : vector<1x1xf32> to vector<1x128xf32>
      %164 = arith.mulf %158, %16 : vector<1x128xf32>
      %cst_97 = arith.constant dense<0.000000e+00> : vector<1xf32>
      %165 = vector.multi_reduction <add>, %164, %cst_97 [1] : vector<1x128xf32> to vector<1xf32>
      %166 = vector.shape_cast %165 : vector<1xf32> to vector<1x1xf32>
      %167 = vector.shape_cast %166 : vector<1x1xf32> to vector<1x1xf32>
      %168 = vector.broadcast %167 : vector<1x1xf32> to vector<1x128xf32>
      %169 = arith.addf %145, %163 : vector<1x128xf32>
      %170 = arith.addf %146, %168 : vector<1x128xf32>
      %c8_i32_98 = arith.constant 8 : i32
      %171 = arith.muli %arg9, %c8_i32_98 : i32
      %c4_i32 = arith.constant 4 : i32
      %172 = arith.addi %171, %c4_i32 : i32
      %173 = vector.broadcast %172 : i32 to vector<1x128xi32>
      %174 = arith.cmpi eq, %17, %173 : vector<1x128xi32>
      %175 = arith.select %174, %169, %151 : vector<1x128xi1>, vector<1x128xf32>
      %176 = arith.mulf %169, %13 : vector<1x128xf32>
      %177 = arith.mulf %170, %14 : vector<1x128xf32>
      %178 = arith.addf %176, %177 : vector<1x128xf32>
      %179 = vector.extract_strided_slice %74 {offsets = [4, 0], sizes = [1, 128], strides = [1, 1]} : vector<8x128xf32> to vector<1x128xf32>
      %180 = arith.addf %178, %179 : vector<1x128xf32>
      %cst_99 = arith.constant 0.000000e+00 : f32
      %181 = vector.broadcast %cst_99 : f32 to vector<1x128xf32>
      %182 = arith.maximumf %180, %181 : vector<1x128xf32>
      %183 = arith.mulf %182, %15 : vector<1x128xf32>
      %cst_100 = arith.constant dense<0.000000e+00> : vector<1xf32>
      %184 = vector.multi_reduction <add>, %183, %cst_100 [1] : vector<1x128xf32> to vector<1xf32>
      %185 = vector.shape_cast %184 : vector<1xf32> to vector<1x1xf32>
      %186 = vector.shape_cast %185 : vector<1x1xf32> to vector<1x1xf32>
      %187 = vector.broadcast %186 : vector<1x1xf32> to vector<1x128xf32>
      %188 = arith.mulf %182, %16 : vector<1x128xf32>
      %cst_101 = arith.constant dense<0.000000e+00> : vector<1xf32>
      %189 = vector.multi_reduction <add>, %188, %cst_101 [1] : vector<1x128xf32> to vector<1xf32>
      %190 = vector.shape_cast %189 : vector<1xf32> to vector<1x1xf32>
      %191 = vector.shape_cast %190 : vector<1x1xf32> to vector<1x1xf32>
      %192 = vector.broadcast %191 : vector<1x1xf32> to vector<1x128xf32>
      %193 = arith.addf %169, %187 : vector<1x128xf32>
      %194 = arith.addf %170, %192 : vector<1x128xf32>
      %c8_i32_102 = arith.constant 8 : i32
      %195 = arith.muli %arg9, %c8_i32_102 : i32
      %c5_i32 = arith.constant 5 : i32
      %196 = arith.addi %195, %c5_i32 : i32
      %197 = vector.broadcast %196 : i32 to vector<1x128xi32>
      %198 = arith.cmpi eq, %17, %197 : vector<1x128xi32>
      %199 = arith.select %198, %193, %175 : vector<1x128xi1>, vector<1x128xf32>
      %200 = arith.mulf %193, %13 : vector<1x128xf32>
      %201 = arith.mulf %194, %14 : vector<1x128xf32>
      %202 = arith.addf %200, %201 : vector<1x128xf32>
      %203 = vector.extract_strided_slice %74 {offsets = [5, 0], sizes = [1, 128], strides = [1, 1]} : vector<8x128xf32> to vector<1x128xf32>
      %204 = arith.addf %202, %203 : vector<1x128xf32>
      %cst_103 = arith.constant 0.000000e+00 : f32
      %205 = vector.broadcast %cst_103 : f32 to vector<1x128xf32>
      %206 = arith.maximumf %204, %205 : vector<1x128xf32>
      %207 = arith.mulf %206, %15 : vector<1x128xf32>
      %cst_104 = arith.constant dense<0.000000e+00> : vector<1xf32>
      %208 = vector.multi_reduction <add>, %207, %cst_104 [1] : vector<1x128xf32> to vector<1xf32>
      %209 = vector.shape_cast %208 : vector<1xf32> to vector<1x1xf32>
      %210 = vector.shape_cast %209 : vector<1x1xf32> to vector<1x1xf32>
      %211 = vector.broadcast %210 : vector<1x1xf32> to vector<1x128xf32>
      %212 = arith.mulf %206, %16 : vector<1x128xf32>
      %cst_105 = arith.constant dense<0.000000e+00> : vector<1xf32>
      %213 = vector.multi_reduction <add>, %212, %cst_105 [1] : vector<1x128xf32> to vector<1xf32>
      %214 = vector.shape_cast %213 : vector<1xf32> to vector<1x1xf32>
      %215 = vector.shape_cast %214 : vector<1x1xf32> to vector<1x1xf32>
      %216 = vector.broadcast %215 : vector<1x1xf32> to vector<1x128xf32>
      %217 = arith.addf %193, %211 : vector<1x128xf32>
      %218 = arith.addf %194, %216 : vector<1x128xf32>
      %c8_i32_106 = arith.constant 8 : i32
      %219 = arith.muli %arg9, %c8_i32_106 : i32
      %c6_i32 = arith.constant 6 : i32
      %220 = arith.addi %219, %c6_i32 : i32
      %221 = vector.broadcast %220 : i32 to vector<1x128xi32>
      %222 = arith.cmpi eq, %17, %221 : vector<1x128xi32>
      %223 = arith.select %222, %217, %199 : vector<1x128xi1>, vector<1x128xf32>
      %224 = arith.mulf %217, %13 : vector<1x128xf32>
      %225 = arith.mulf %218, %14 : vector<1x128xf32>
      %226 = arith.addf %224, %225 : vector<1x128xf32>
      %227 = vector.extract_strided_slice %74 {offsets = [6, 0], sizes = [1, 128], strides = [1, 1]} : vector<8x128xf32> to vector<1x128xf32>
      %228 = arith.addf %226, %227 : vector<1x128xf32>
      %cst_107 = arith.constant 0.000000e+00 : f32
      %229 = vector.broadcast %cst_107 : f32 to vector<1x128xf32>
      %230 = arith.maximumf %228, %229 : vector<1x128xf32>
      %231 = arith.mulf %230, %15 : vector<1x128xf32>
      %cst_108 = arith.constant dense<0.000000e+00> : vector<1xf32>
      %232 = vector.multi_reduction <add>, %231, %cst_108 [1] : vector<1x128xf32> to vector<1xf32>
      %233 = vector.shape_cast %232 : vector<1xf32> to vector<1x1xf32>
      %234 = vector.shape_cast %233 : vector<1x1xf32> to vector<1x1xf32>
      %235 = vector.broadcast %234 : vector<1x1xf32> to vector<1x128xf32>
      %236 = arith.mulf %230, %16 : vector<1x128xf32>
      %cst_109 = arith.constant dense<0.000000e+00> : vector<1xf32>
      %237 = vector.multi_reduction <add>, %236, %cst_109 [1] : vector<1x128xf32> to vector<1xf32>
      %238 = vector.shape_cast %237 : vector<1xf32> to vector<1x1xf32>
      %239 = vector.shape_cast %238 : vector<1x1xf32> to vector<1x1xf32>
      %240 = vector.broadcast %239 : vector<1x1xf32> to vector<1x128xf32>
      %241 = arith.addf %217, %235 : vector<1x128xf32>
      %242 = arith.addf %218, %240 : vector<1x128xf32>
      %c8_i32_110 = arith.constant 8 : i32
      %243 = arith.muli %arg9, %c8_i32_110 : i32
      %c7_i32 = arith.constant 7 : i32
      %244 = arith.addi %243, %c7_i32 : i32
      %245 = vector.broadcast %244 : i32 to vector<1x128xi32>
      %246 = arith.cmpi eq, %17, %245 : vector<1x128xi32>
      %247 = arith.select %246, %241, %223 : vector<1x128xi1>, vector<1x128xf32>
      %248 = arith.mulf %241, %13 : vector<1x128xf32>
      %249 = arith.mulf %242, %14 : vector<1x128xf32>
      %250 = arith.addf %248, %249 : vector<1x128xf32>
      %251 = vector.extract_strided_slice %74 {offsets = [7, 0], sizes = [1, 128], strides = [1, 1]} : vector<8x128xf32> to vector<1x128xf32>
      %252 = arith.addf %250, %251 : vector<1x128xf32>
      %cst_111 = arith.constant 0.000000e+00 : f32
      %253 = vector.broadcast %cst_111 : f32 to vector<1x128xf32>
      %254 = arith.maximumf %252, %253 : vector<1x128xf32>
      %255 = arith.mulf %254, %15 : vector<1x128xf32>
      %cst_112 = arith.constant dense<0.000000e+00> : vector<1xf32>
      %256 = vector.multi_reduction <add>, %255, %cst_112 [1] : vector<1x128xf32> to vector<1xf32>
      %257 = vector.shape_cast %256 : vector<1xf32> to vector<1x1xf32>
      %258 = vector.shape_cast %257 : vector<1x1xf32> to vector<1x1xf32>
      %259 = vector.broadcast %258 : vector<1x1xf32> to vector<1x128xf32>
      %260 = arith.mulf %254, %16 : vector<1x128xf32>
      %cst_113 = arith.constant dense<0.000000e+00> : vector<1xf32>
      %261 = vector.multi_reduction <add>, %260, %cst_113 [1] : vector<1x128xf32> to vector<1xf32>
      %262 = vector.shape_cast %261 : vector<1xf32> to vector<1x1xf32>
      %263 = vector.shape_cast %262 : vector<1x1xf32> to vector<1x1xf32>
      %264 = vector.broadcast %263 : vector<1x1xf32> to vector<1x128xf32>
      %265 = arith.addf %241, %259 : vector<1x128xf32>
      %266 = arith.addf %242, %264 : vector<1x128xf32>
      scf.yield %265, %266, %247 : vector<1x128xf32>, vector<1x128xf32>, vector<1x128xf32>
    }
    %c16_i32_65 = arith.constant 16 : i32
    %c0_66 = arith.constant 0 : index
    %c6 = arith.constant 6 : index
    %c0_67 = arith.constant 0 : index
    %59 = vector.load %arg6[%c0_66, %c6, %c0_67] : memref<1x8x128xf32, #tpu.memory_space<vmem>>, vector<1x1x128xf32>
    %60 = vector.shape_cast %59 : vector<1x1x128xf32> to vector<1x128xf32>
    %61 = vector.shape_cast %58#2 : vector<1x128xf32> to vector<1x1x128xf32>
    tpu.vector_store %arg6[%c0_66, %c6, %c0_67], %61 {strides = array<i32>} : memref<1x8x128xf32, #tpu.memory_space<vmem>>, vector<1x1x128xf32>,
    %cst_68 = arith.constant 0.000000e+00 : f32
    %62 = vector.broadcast %cst_68 : f32 to vector<1x128xf32>
    %c0_i32_69 = arith.constant 0 : i32
    %c16_i32_70 = arith.constant 16 : i32
    %63 = arith.addi %c0_i32_69, %c16_i32_70 : i32
    %c1_i32_71 = arith.constant 1 : i32
    %64:3 = scf.for %arg9 = %c0_i32_69 to %63 step %c1_i32_71 iter_args(%arg10 = %58#0, %arg11 = %58#1, %arg12 = %62) -> (vector<1x128xf32>, vector<1x128xf32>, vector<1x128xf32>)  : i32 {
      %c8_i32 = arith.constant 8 : i32
      %70 = arith.muli %arg9, %c8_i32 : i32
      %c896_i32 = arith.constant 896 : i32
      %71 = arith.addi %c896_i32, %70 : i32
      %72 = tpu.assume_multiple %71, 8 : i32
      %73 = arith.index_cast %72 : i32 to index
      %c0_79 = arith.constant 0 : index
      %74 = vector.load %arg7[%73, %c0_79] : memref<1024x128xf32, #tpu.memory_space<vmem>>, vector<8x128xf32>
      %c8_i32_80 = arith.constant 8 : i32
      %75 = arith.muli %arg9, %c8_i32_80 : i32
      %c0_i32_81 = arith.constant 0 : i32
      %76 = arith.addi %75, %c0_i32_81 : i32
      %77 = vector.broadcast %76 : i32 to vector<1x128xi32>
      %78 = arith.cmpi eq, %17, %77 : vector<1x128xi32>
      %79 = arith.select %78, %arg10, %arg12 : vector<1x128xi1>, vector<1x128xf32>
      %80 = arith.mulf %arg10, %13 : vector<1x128xf32>
      %81 = arith.mulf %arg11, %14 : vector<1x128xf32>
      %82 = arith.addf %80, %81 : vector<1x128xf32>
      %83 = vector.extract_strided_slice %74 {offsets = [0, 0], sizes = [1, 128], strides = [1, 1]} : vector<8x128xf32> to vector<1x128xf32>
      %84 = arith.addf %82, %83 : vector<1x128xf32>
      %cst_82 = arith.constant 0.000000e+00 : f32
      %85 = vector.broadcast %cst_82 : f32 to vector<1x128xf32>
      %86 = arith.maximumf %84, %85 : vector<1x128xf32>
      %87 = arith.mulf %86, %15 : vector<1x128xf32>
      %cst_83 = arith.constant dense<0.000000e+00> : vector<1xf32>
      %88 = vector.multi_reduction <add>, %87, %cst_83 [1] : vector<1x128xf32> to vector<1xf32>
      %89 = vector.shape_cast %88 : vector<1xf32> to vector<1x1xf32>
      %90 = vector.shape_cast %89 : vector<1x1xf32> to vector<1x1xf32>
      %91 = vector.broadcast %90 : vector<1x1xf32> to vector<1x128xf32>
      %92 = arith.mulf %86, %16 : vector<1x128xf32>
      %cst_84 = arith.constant dense<0.000000e+00> : vector<1xf32>
      %93 = vector.multi_reduction <add>, %92, %cst_84 [1] : vector<1x128xf32> to vector<1xf32>
      %94 = vector.shape_cast %93 : vector<1xf32> to vector<1x1xf32>
      %95 = vector.shape_cast %94 : vector<1x1xf32> to vector<1x1xf32>
      %96 = vector.broadcast %95 : vector<1x1xf32> to vector<1x128xf32>
      %97 = arith.addf %arg10, %91 : vector<1x128xf32>
      %98 = arith.addf %arg11, %96 : vector<1x128xf32>
      %c8_i32_85 = arith.constant 8 : i32
      %99 = arith.muli %arg9, %c8_i32_85 : i32
      %c1_i32_86 = arith.constant 1 : i32
      %100 = arith.addi %99, %c1_i32_86 : i32
      %101 = vector.broadcast %100 : i32 to vector<1x128xi32>
      %102 = arith.cmpi eq, %17, %101 : vector<1x128xi32>
      %103 = arith.select %102, %97, %79 : vector<1x128xi1>, vector<1x128xf32>
      %104 = arith.mulf %97, %13 : vector<1x128xf32>
      %105 = arith.mulf %98, %14 : vector<1x128xf32>
      %106 = arith.addf %104, %105 : vector<1x128xf32>
      %107 = vector.extract_strided_slice %74 {offsets = [1, 0], sizes = [1, 128], strides = [1, 1]} : vector<8x128xf32> to vector<1x128xf32>
      %108 = arith.addf %106, %107 : vector<1x128xf32>
      %cst_87 = arith.constant 0.000000e+00 : f32
      %109 = vector.broadcast %cst_87 : f32 to vector<1x128xf32>
      %110 = arith.maximumf %108, %109 : vector<1x128xf32>
      %111 = arith.mulf %110, %15 : vector<1x128xf32>
      %cst_88 = arith.constant dense<0.000000e+00> : vector<1xf32>
      %112 = vector.multi_reduction <add>, %111, %cst_88 [1] : vector<1x128xf32> to vector<1xf32>
      %113 = vector.shape_cast %112 : vector<1xf32> to vector<1x1xf32>
      %114 = vector.shape_cast %113 : vector<1x1xf32> to vector<1x1xf32>
      %115 = vector.broadcast %114 : vector<1x1xf32> to vector<1x128xf32>
      %116 = arith.mulf %110, %16 : vector<1x128xf32>
      %cst_89 = arith.constant dense<0.000000e+00> : vector<1xf32>
      %117 = vector.multi_reduction <add>, %116, %cst_89 [1] : vector<1x128xf32> to vector<1xf32>
      %118 = vector.shape_cast %117 : vector<1xf32> to vector<1x1xf32>
      %119 = vector.shape_cast %118 : vector<1x1xf32> to vector<1x1xf32>
      %120 = vector.broadcast %119 : vector<1x1xf32> to vector<1x128xf32>
      %121 = arith.addf %97, %115 : vector<1x128xf32>
      %122 = arith.addf %98, %120 : vector<1x128xf32>
      %c8_i32_90 = arith.constant 8 : i32
      %123 = arith.muli %arg9, %c8_i32_90 : i32
      %c2_i32 = arith.constant 2 : i32
      %124 = arith.addi %123, %c2_i32 : i32
      %125 = vector.broadcast %124 : i32 to vector<1x128xi32>
      %126 = arith.cmpi eq, %17, %125 : vector<1x128xi32>
      %127 = arith.select %126, %121, %103 : vector<1x128xi1>, vector<1x128xf32>
      %128 = arith.mulf %121, %13 : vector<1x128xf32>
      %129 = arith.mulf %122, %14 : vector<1x128xf32>
      %130 = arith.addf %128, %129 : vector<1x128xf32>
      %131 = vector.extract_strided_slice %74 {offsets = [2, 0], sizes = [1, 128], strides = [1, 1]} : vector<8x128xf32> to vector<1x128xf32>
      %132 = arith.addf %130, %131 : vector<1x128xf32>
      %cst_91 = arith.constant 0.000000e+00 : f32
      %133 = vector.broadcast %cst_91 : f32 to vector<1x128xf32>
      %134 = arith.maximumf %132, %133 : vector<1x128xf32>
      %135 = arith.mulf %134, %15 : vector<1x128xf32>
      %cst_92 = arith.constant dense<0.000000e+00> : vector<1xf32>
      %136 = vector.multi_reduction <add>, %135, %cst_92 [1] : vector<1x128xf32> to vector<1xf32>
      %137 = vector.shape_cast %136 : vector<1xf32> to vector<1x1xf32>
      %138 = vector.shape_cast %137 : vector<1x1xf32> to vector<1x1xf32>
      %139 = vector.broadcast %138 : vector<1x1xf32> to vector<1x128xf32>
      %140 = arith.mulf %134, %16 : vector<1x128xf32>
      %cst_93 = arith.constant dense<0.000000e+00> : vector<1xf32>
      %141 = vector.multi_reduction <add>, %140, %cst_93 [1] : vector<1x128xf32> to vector<1xf32>
      %142 = vector.shape_cast %141 : vector<1xf32> to vector<1x1xf32>
      %143 = vector.shape_cast %142 : vector<1x1xf32> to vector<1x1xf32>
      %144 = vector.broadcast %143 : vector<1x1xf32> to vector<1x128xf32>
      %145 = arith.addf %121, %139 : vector<1x128xf32>
      %146 = arith.addf %122, %144 : vector<1x128xf32>
      %c8_i32_94 = arith.constant 8 : i32
      %147 = arith.muli %arg9, %c8_i32_94 : i32
      %c3_i32 = arith.constant 3 : i32
      %148 = arith.addi %147, %c3_i32 : i32
      %149 = vector.broadcast %148 : i32 to vector<1x128xi32>
      %150 = arith.cmpi eq, %17, %149 : vector<1x128xi32>
      %151 = arith.select %150, %145, %127 : vector<1x128xi1>, vector<1x128xf32>
      %152 = arith.mulf %145, %13 : vector<1x128xf32>
      %153 = arith.mulf %146, %14 : vector<1x128xf32>
      %154 = arith.addf %152, %153 : vector<1x128xf32>
      %155 = vector.extract_strided_slice %74 {offsets = [3, 0], sizes = [1, 128], strides = [1, 1]} : vector<8x128xf32> to vector<1x128xf32>
      %156 = arith.addf %154, %155 : vector<1x128xf32>
      %cst_95 = arith.constant 0.000000e+00 : f32
      %157 = vector.broadcast %cst_95 : f32 to vector<1x128xf32>
      %158 = arith.maximumf %156, %157 : vector<1x128xf32>
      %159 = arith.mulf %158, %15 : vector<1x128xf32>
      %cst_96 = arith.constant dense<0.000000e+00> : vector<1xf32>
      %160 = vector.multi_reduction <add>, %159, %cst_96 [1] : vector<1x128xf32> to vector<1xf32>
      %161 = vector.shape_cast %160 : vector<1xf32> to vector<1x1xf32>
      %162 = vector.shape_cast %161 : vector<1x1xf32> to vector<1x1xf32>
      %163 = vector.broadcast %162 : vector<1x1xf32> to vector<1x128xf32>
      %164 = arith.mulf %158, %16 : vector<1x128xf32>
      %cst_97 = arith.constant dense<0.000000e+00> : vector<1xf32>
      %165 = vector.multi_reduction <add>, %164, %cst_97 [1] : vector<1x128xf32> to vector<1xf32>
      %166 = vector.shape_cast %165 : vector<1xf32> to vector<1x1xf32>
      %167 = vector.shape_cast %166 : vector<1x1xf32> to vector<1x1xf32>
      %168 = vector.broadcast %167 : vector<1x1xf32> to vector<1x128xf32>
      %169 = arith.addf %145, %163 : vector<1x128xf32>
      %170 = arith.addf %146, %168 : vector<1x128xf32>
      %c8_i32_98 = arith.constant 8 : i32
      %171 = arith.muli %arg9, %c8_i32_98 : i32
      %c4_i32 = arith.constant 4 : i32
      %172 = arith.addi %171, %c4_i32 : i32
      %173 = vector.broadcast %172 : i32 to vector<1x128xi32>
      %174 = arith.cmpi eq, %17, %173 : vector<1x128xi32>
      %175 = arith.select %174, %169, %151 : vector<1x128xi1>, vector<1x128xf32>
      %176 = arith.mulf %169, %13 : vector<1x128xf32>
      %177 = arith.mulf %170, %14 : vector<1x128xf32>
      %178 = arith.addf %176, %177 : vector<1x128xf32>
      %179 = vector.extract_strided_slice %74 {offsets = [4, 0], sizes = [1, 128], strides = [1, 1]} : vector<8x128xf32> to vector<1x128xf32>
      %180 = arith.addf %178, %179 : vector<1x128xf32>
      %cst_99 = arith.constant 0.000000e+00 : f32
      %181 = vector.broadcast %cst_99 : f32 to vector<1x128xf32>
      %182 = arith.maximumf %180, %181 : vector<1x128xf32>
      %183 = arith.mulf %182, %15 : vector<1x128xf32>
      %cst_100 = arith.constant dense<0.000000e+00> : vector<1xf32>
      %184 = vector.multi_reduction <add>, %183, %cst_100 [1] : vector<1x128xf32> to vector<1xf32>
      %185 = vector.shape_cast %184 : vector<1xf32> to vector<1x1xf32>
      %186 = vector.shape_cast %185 : vector<1x1xf32> to vector<1x1xf32>
      %187 = vector.broadcast %186 : vector<1x1xf32> to vector<1x128xf32>
      %188 = arith.mulf %182, %16 : vector<1x128xf32>
      %cst_101 = arith.constant dense<0.000000e+00> : vector<1xf32>
      %189 = vector.multi_reduction <add>, %188, %cst_101 [1] : vector<1x128xf32> to vector<1xf32>
      %190 = vector.shape_cast %189 : vector<1xf32> to vector<1x1xf32>
      %191 = vector.shape_cast %190 : vector<1x1xf32> to vector<1x1xf32>
      %192 = vector.broadcast %191 : vector<1x1xf32> to vector<1x128xf32>
      %193 = arith.addf %169, %187 : vector<1x128xf32>
      %194 = arith.addf %170, %192 : vector<1x128xf32>
      %c8_i32_102 = arith.constant 8 : i32
      %195 = arith.muli %arg9, %c8_i32_102 : i32
      %c5_i32 = arith.constant 5 : i32
      %196 = arith.addi %195, %c5_i32 : i32
      %197 = vector.broadcast %196 : i32 to vector<1x128xi32>
      %198 = arith.cmpi eq, %17, %197 : vector<1x128xi32>
      %199 = arith.select %198, %193, %175 : vector<1x128xi1>, vector<1x128xf32>
      %200 = arith.mulf %193, %13 : vector<1x128xf32>
      %201 = arith.mulf %194, %14 : vector<1x128xf32>
      %202 = arith.addf %200, %201 : vector<1x128xf32>
      %203 = vector.extract_strided_slice %74 {offsets = [5, 0], sizes = [1, 128], strides = [1, 1]} : vector<8x128xf32> to vector<1x128xf32>
      %204 = arith.addf %202, %203 : vector<1x128xf32>
      %cst_103 = arith.constant 0.000000e+00 : f32
      %205 = vector.broadcast %cst_103 : f32 to vector<1x128xf32>
      %206 = arith.maximumf %204, %205 : vector<1x128xf32>
      %207 = arith.mulf %206, %15 : vector<1x128xf32>
      %cst_104 = arith.constant dense<0.000000e+00> : vector<1xf32>
      %208 = vector.multi_reduction <add>, %207, %cst_104 [1] : vector<1x128xf32> to vector<1xf32>
      %209 = vector.shape_cast %208 : vector<1xf32> to vector<1x1xf32>
      %210 = vector.shape_cast %209 : vector<1x1xf32> to vector<1x1xf32>
      %211 = vector.broadcast %210 : vector<1x1xf32> to vector<1x128xf32>
      %212 = arith.mulf %206, %16 : vector<1x128xf32>
      %cst_105 = arith.constant dense<0.000000e+00> : vector<1xf32>
      %213 = vector.multi_reduction <add>, %212, %cst_105 [1] : vector<1x128xf32> to vector<1xf32>
      %214 = vector.shape_cast %213 : vector<1xf32> to vector<1x1xf32>
      %215 = vector.shape_cast %214 : vector<1x1xf32> to vector<1x1xf32>
      %216 = vector.broadcast %215 : vector<1x1xf32> to vector<1x128xf32>
      %217 = arith.addf %193, %211 : vector<1x128xf32>
      %218 = arith.addf %194, %216 : vector<1x128xf32>
      %c8_i32_106 = arith.constant 8 : i32
      %219 = arith.muli %arg9, %c8_i32_106 : i32
      %c6_i32 = arith.constant 6 : i32
      %220 = arith.addi %219, %c6_i32 : i32
      %221 = vector.broadcast %220 : i32 to vector<1x128xi32>
      %222 = arith.cmpi eq, %17, %221 : vector<1x128xi32>
      %223 = arith.select %222, %217, %199 : vector<1x128xi1>, vector<1x128xf32>
      %224 = arith.mulf %217, %13 : vector<1x128xf32>
      %225 = arith.mulf %218, %14 : vector<1x128xf32>
      %226 = arith.addf %224, %225 : vector<1x128xf32>
      %227 = vector.extract_strided_slice %74 {offsets = [6, 0], sizes = [1, 128], strides = [1, 1]} : vector<8x128xf32> to vector<1x128xf32>
      %228 = arith.addf %226, %227 : vector<1x128xf32>
      %cst_107 = arith.constant 0.000000e+00 : f32
      %229 = vector.broadcast %cst_107 : f32 to vector<1x128xf32>
      %230 = arith.maximumf %228, %229 : vector<1x128xf32>
      %231 = arith.mulf %230, %15 : vector<1x128xf32>
      %cst_108 = arith.constant dense<0.000000e+00> : vector<1xf32>
      %232 = vector.multi_reduction <add>, %231, %cst_108 [1] : vector<1x128xf32> to vector<1xf32>
      %233 = vector.shape_cast %232 : vector<1xf32> to vector<1x1xf32>
      %234 = vector.shape_cast %233 : vector<1x1xf32> to vector<1x1xf32>
      %235 = vector.broadcast %234 : vector<1x1xf32> to vector<1x128xf32>
      %236 = arith.mulf %230, %16 : vector<1x128xf32>
      %cst_109 = arith.constant dense<0.000000e+00> : vector<1xf32>
      %237 = vector.multi_reduction <add>, %236, %cst_109 [1] : vector<1x128xf32> to vector<1xf32>
      %238 = vector.shape_cast %237 : vector<1xf32> to vector<1x1xf32>
      %239 = vector.shape_cast %238 : vector<1x1xf32> to vector<1x1xf32>
      %240 = vector.broadcast %239 : vector<1x1xf32> to vector<1x128xf32>
      %241 = arith.addf %217, %235 : vector<1x128xf32>
      %242 = arith.addf %218, %240 : vector<1x128xf32>
      %c8_i32_110 = arith.constant 8 : i32
      %243 = arith.muli %arg9, %c8_i32_110 : i32
      %c7_i32 = arith.constant 7 : i32
      %244 = arith.addi %243, %c7_i32 : i32
      %245 = vector.broadcast %244 : i32 to vector<1x128xi32>
      %246 = arith.cmpi eq, %17, %245 : vector<1x128xi32>
      %247 = arith.select %246, %241, %223 : vector<1x128xi1>, vector<1x128xf32>
      %248 = arith.mulf %241, %13 : vector<1x128xf32>
      %249 = arith.mulf %242, %14 : vector<1x128xf32>
      %250 = arith.addf %248, %249 : vector<1x128xf32>
      %251 = vector.extract_strided_slice %74 {offsets = [7, 0], sizes = [1, 128], strides = [1, 1]} : vector<8x128xf32> to vector<1x128xf32>
      %252 = arith.addf %250, %251 : vector<1x128xf32>
      %cst_111 = arith.constant 0.000000e+00 : f32
      %253 = vector.broadcast %cst_111 : f32 to vector<1x128xf32>
      %254 = arith.maximumf %252, %253 : vector<1x128xf32>
      %255 = arith.mulf %254, %15 : vector<1x128xf32>
      %cst_112 = arith.constant dense<0.000000e+00> : vector<1xf32>
      %256 = vector.multi_reduction <add>, %255, %cst_112 [1] : vector<1x128xf32> to vector<1xf32>
      %257 = vector.shape_cast %256 : vector<1xf32> to vector<1x1xf32>
      %258 = vector.shape_cast %257 : vector<1x1xf32> to vector<1x1xf32>
      %259 = vector.broadcast %258 : vector<1x1xf32> to vector<1x128xf32>
      %260 = arith.mulf %254, %16 : vector<1x128xf32>
      %cst_113 = arith.constant dense<0.000000e+00> : vector<1xf32>
      %261 = vector.multi_reduction <add>, %260, %cst_113 [1] : vector<1x128xf32> to vector<1xf32>
      %262 = vector.shape_cast %261 : vector<1xf32> to vector<1x1xf32>
      %263 = vector.shape_cast %262 : vector<1x1xf32> to vector<1x1xf32>
      %264 = vector.broadcast %263 : vector<1x1xf32> to vector<1x128xf32>
      %265 = arith.addf %241, %259 : vector<1x128xf32>
      %266 = arith.addf %242, %264 : vector<1x128xf32>
      scf.yield %265, %266, %247 : vector<1x128xf32>, vector<1x128xf32>, vector<1x128xf32>
    }
    %c16_i32_72 = arith.constant 16 : i32
    %c0_73 = arith.constant 0 : index
    %c7 = arith.constant 7 : index
    %c0_74 = arith.constant 0 : index
    %65 = vector.load %arg6[%c0_73, %c7, %c0_74] : memref<1x8x128xf32, #tpu.memory_space<vmem>>, vector<1x1x128xf32>
    %66 = vector.shape_cast %65 : vector<1x1x128xf32> to vector<1x128xf32>
    %67 = vector.shape_cast %64#2 : vector<1x128xf32> to vector<1x1x128xf32>
    tpu.vector_store %arg6[%c0_73, %c7, %c0_74], %67 {strides = array<i32>} : memref<1x8x128xf32, #tpu.memory_space<vmem>>, vector<1x1x128xf32>,
    %c0_75 = arith.constant 0 : index
    %c0_76 = arith.constant 0 : index
    %68 = vector.load %arg8[%c0_75, %c0_76] : memref<2x128xf32, #tpu.memory_space<vmem>>, vector<1x128xf32>
    tpu.vector_store %arg8[%c0_75, %c0_76], %64#0 {strides = array<i32>} : memref<2x128xf32, #tpu.memory_space<vmem>>, vector<1x128xf32>,
    %c1_77 = arith.constant 1 : index
    %c0_78 = arith.constant 0 : index
    %69 = vector.load %arg8[%c1_77, %c0_78] : memref<2x128xf32, #tpu.memory_space<vmem>>, vector<1x128xf32>
    tpu.vector_store %arg8[%c1_77, %c0_78], %64#1 {strides = array<i32>} : memref<2x128xf32, #tpu.memory_space<vmem>>, vector<1x128xf32>,
    return
  }
  func.func @transform_0(%arg0: i32) -> (i32, i32, i32) {
    %c0_i32 = arith.constant 0 : i32
    %c0_i32_0 = arith.constant 0 : i32
    %c0_i32_1 = arith.constant 0 : i32
    return %arg0, %c0_i32, %c0_i32_0 : i32, i32, i32
  }
  func.func @transform_1(%arg0: i32) -> (i32, i32) {
    %c0_i32 = arith.constant 0 : i32
    %c0_i32_0 = arith.constant 0 : i32
    %c0_i32_1 = arith.constant 0 : i32
    return %c0_i32, %c0_i32_0 : i32, i32
  }
  func.func @transform_2(%arg0: i32) -> (i32, i32) {
    %c0_i32 = arith.constant 0 : i32
    %c0_i32_0 = arith.constant 0 : i32
    %c0_i32_1 = arith.constant 0 : i32
    return %c0_i32, %c0_i32_0 : i32, i32
  }
  func.func @transform_3(%arg0: i32) -> (i32, i32) {
    %c0_i32 = arith.constant 0 : i32
    %c0_i32_0 = arith.constant 0 : i32
    %c0_i32_1 = arith.constant 0 : i32
    return %c0_i32, %c0_i32_0 : i32, i32
  }
  func.func @transform_4(%arg0: i32) -> (i32, i32) {
    %c0_i32 = arith.constant 0 : i32
    %c0_i32_0 = arith.constant 0 : i32
    %c0_i32_1 = arith.constant 0 : i32
    return %c0_i32, %c0_i32_0 : i32, i32
  }
  func.func @transform_5(%arg0: i32) -> (i32, i32, i32) {
    %c0_i32 = arith.constant 0 : i32
    %c0_i32_0 = arith.constant 0 : i32
    %c0_i32_1 = arith.constant 0 : i32
    return %arg0, %c0_i32, %c0_i32_0 : i32, i32, i32
  }
}

</mosaic_0001>

<llo_original>
// kernel: tpu_custom_call.1
$region0: #{tpu_custom_call.1}
  #allocation0 [shape = 'u32[]', space=smem, size = 0x4, offset = 0x4, fixed_abs, tag = 'smem constant byte address 0x4 - core index']
  #allocation1 [shape = 'u32[144,128]{1,0:T(1,128)}', space=vmem, size = 0x12000, scoped, tag = 'internal scratch']
  #allocation2 [shape = 'f32[1024,128]{1,0:T(8,128)}', space=vmem, size = 0x80000, scoped, tag = 'scratch operand']
  #allocation3 [shape = 'f32[2,128]{1,0:T(2,128)}', space=vmem, size = 0x400, scoped, tag = 'scratch operand']
  %s0 = inlined_call_operand.vmem [shape: f32[1,1024,1], index: 0, kind: input, shape index: {}]
  %s1 = inlined_call_operand.vmem [shape: f32[2,128], index: 1, kind: input, shape index: {}]
  %s2 = inlined_call_operand.vmem [shape: f32[1,128], index: 2, kind: input, shape index: {}]
  %s3 = inlined_call_operand.vmem [shape: f32[1,128], index: 3, kind: input, shape index: {}]
  %s4 = inlined_call_operand.vmem [shape: f32[2,128], index: 4, kind: input, shape index: {}]
  %s5 = inlined_call_operand.hbm [shape: f32[1,8,128], index: 5, kind: output, shape index: {}]
  %s6 = sld [smem:[#allocation0]]
  $region90: #{tpu_custom_call.1} parent=0
    _
  %s8 = ssub.s32 1, %s6
  %s9 = scalar_select 0, %s8, %s6
  $region1: #{tpu_custom_call.1} parent=0
    #allocation4 [shape = 'u8[4096]{0}', space=vmem, size = 0x1000, scoped, tag = 'output window, operand 0, single buffered']
    #allocation5 [shape = 's32[1]{0}', space=sflag, size = 0x4, scoped, tag = 'scoped memory for tpu_custom_call.1']
    %10 = vsyncpa [#allocation5], 0
    // Predicated region
    $region2: #{tpu_custom_call.1} parent=1 // pred_check
      _
    $region3: #{tpu_custom_call.1} parent=1 // pred_check_branch
      %12 = sbr.rel (0) target = $region5
    $region4: #{tpu_custom_call.1} parent=1 // pred_region
      _
    $region5: #{tpu_custom_call.1} parent=1 // pred_fallthru
      _
    // Predicated region
    $region6: #{tpu_custom_call.1} parent=1 // pred_check
      _
    $region7: #{tpu_custom_call.1} parent=1 // pred_check_branch
      %14 = sbr.rel (0) target = $region9
    $region8: #{tpu_custom_call.1} parent=1 // pred_region
      _
    $region9: #{tpu_custom_call.1} parent=1 // pred_fallthru
      _
    // Predicated region
    $region10: #{tpu_custom_call.1} parent=1 // pred_check
      _
    $region11: #{tpu_custom_call.1} parent=1 // pred_check_branch
      %16 = sbr.rel (0) target = $region13
    $region12: #{tpu_custom_call.1} parent=1 // pred_region
      _
    $region13: #{tpu_custom_call.1} parent=1 // pred_fallthru
      _
    // Predicated region
    $region14: #{tpu_custom_call.1} parent=1 // pred_check
      _
    $region15: #{tpu_custom_call.1} parent=1 // pred_check_branch
      %18 = sbr.rel (0) target = $region17
    $region16: #{tpu_custom_call.1} parent=1 // pred_region
      _
    $region17: #{tpu_custom_call.1} parent=1 // pred_fallthru
      _
    // Predicated region
    $region18: #{tpu_custom_call.1} parent=1 // pred_check
      _
    $region19: #{tpu_custom_call.1} parent=1 // pred_check_branch
      %20 = sbr.rel (0) target = $region21
    $region20: #{tpu_custom_call.1} parent=1 // pred_region
      _
    $region21: #{tpu_custom_call.1} parent=1 // pred_fallthru
      _
    %p21 = scmp.eq.s32.totalorder 0, 0
    // Predicated region
    $region22: #{tpu_custom_call.1} parent=1 // pred_check
      %p22 = pneg %p21
    $region23: #{tpu_custom_call.1} parent=1 // pred_check_branch
      %24 = sbr.rel (%p22) target = $region25
    $region24: #{tpu_custom_call.1} parent=1 // pred_region
      %25 = vst [vmem:[#allocation3] sm:$0x3] 0.0
    $region25: #{tpu_custom_call.1} parent=1 // pred_fallthru
      _
    %v26 = vld [vmem:[%s0] sm:$0xff]
    %v27 = vld [vmem:[%s0 + $0x8] sm:$0xff]
    %v28 = vld [vmem:[%s0 + $0x10] sm:$0xff]
    %v29 = vld [vmem:[%s0 + $0x18] sm:$0xff]
    %v30 = vld [vmem:[%s0 + $0x20] sm:$0xff]
    %v31 = vld [vmem:[%s0 + $0x28] sm:$0xff]
    %v32 = vld [vmem:[%s0 + $0x30] sm:$0xff]
    %v33 = vld [vmem:[%s0 + $0x38] sm:$0xff]
    %v34 = vld [vmem:[%s0 + $0x40] sm:$0xff]
    %v35 = vld [vmem:[%s0 + $0x48] sm:$0xff]
    %v36 = vld [vmem:[%s0 + $0x50] sm:$0xff]
    %v37 = vld [vmem:[%s0 + $0x58] sm:$0xff]
    %v38 = vld [vmem:[%s0 + $0x60] sm:$0xff]
    %v39 = vld [vmem:[%s0 + $0x68] sm:$0xff]
    %v40 = vld [vmem:[%s0 + $0x70] sm:$0xff]
    %v41 = vld [vmem:[%s0 + $0x78] sm:$0xff]
    %v42 = vld [vmem:[%s0 + $0x80] sm:$0xff]
    %v43 = vld [vmem:[%s0 + $0x88] sm:$0xff]
    %v44 = vld [vmem:[%s0 + $0x90] sm:$0xff]
    %v45 = vld [vmem:[%s0 + $0x98] sm:$0xff]
    %v46 = vld [vmem:[%s0 + $0xa0] sm:$0xff]
    %v47 = vld [vmem:[%s0 + $0xa8] sm:$0xff]
    %v48 = vld [vmem:[%s0 + $0xb0] sm:$0xff]
    %v49 = vld [vmem:[%s0 + $0xb8] sm:$0xff]
    %v50 = vld [vmem:[%s0 + $0xc0] sm:$0xff]
    %v51 = vld [vmem:[%s0 + $0xc8] sm:$0xff]
    %v52 = vld [vmem:[%s0 + $0xd0] sm:$0xff]
    %v53 = vld [vmem:[%s0 + $0xd8] sm:$0xff]
    %v54 = vld [vmem:[%s0 + $0xe0] sm:$0xff]
    %v55 = vld [vmem:[%s0 + $0xe8] sm:$0xff]
    %v56 = vld [vmem:[%s0 + $0xf0] sm:$0xff]
    %v57 = vld [vmem:[%s0 + $0xf8] sm:$0xff]
    %v58 = vld [vmem:[%s0 + $0x100] sm:$0xff]
    %v59 = vld [vmem:[%s0 + $0x108] sm:$0xff]
    %v60 = vld [vmem:[%s0 + $0x110] sm:$0xff]
    %v61 = vld [vmem:[%s0 + $0x118] sm:$0xff]
    %v62 = vld [vmem:[%s0 + $0x120] sm:$0xff]
    %v63 = vld [vmem:[%s0 + $0x128] sm:$0xff]
    %v64 = vld [vmem:[%s0 + $0x130] sm:$0xff]
    %v65 = vld [vmem:[%s0 + $0x138] sm:$0xff]
    %v66 = vld [vmem:[%s0 + $0x140] sm:$0xff]
    %v67 = vld [vmem:[%s0 + $0x148] sm:$0xff]
    %v68 = vld [vmem:[%s0 + $0x150] sm:$0xff]
    %v69 = vld [vmem:[%s0 + $0x158] sm:$0xff]
    %v70 = vld [vmem:[%s0 + $0x160] sm:$0xff]
    %v71 = vld [vmem:[%s0 + $0x168] sm:$0xff]
    %v72 = vld [vmem:[%s0 + $0x170] sm:$0xff]
    %v73 = vld [vmem:[%s0 + $0x178] sm:$0xff]
    %v74 = vld [vmem:[%s0 + $0x180] sm:$0xff]
    %v75 = vld [vmem:[%s0 + $0x188] sm:$0xff]
    %v76 = vld [vmem:[%s0 + $0x190] sm:$0xff]
    %v77 = vld [vmem:[%s0 + $0x198] sm:$0xff]
    %v78 = vld [vmem:[%s0 + $0x1a0] sm:$0xff]
    %v79 = vld [vmem:[%s0 + $0x1a8] sm:$0xff]
    %v80 = vld [vmem:[%s0 + $0x1b0] sm:$0xff]
    %v81 = vld [vmem:[%s0 + $0x1b8] sm:$0xff]
    %v82 = vld [vmem:[%s0 + $0x1c0] sm:$0xff]
    %v83 = vld [vmem:[%s0 + $0x1c8] sm:$0xff]
    %v84 = vld [vmem:[%s0 + $0x1d0] sm:$0xff]
    %v85 = vld [vmem:[%s0 + $0x1d8] sm:$0xff]
    %v86 = vld [vmem:[%s0 + $0x1e0] sm:$0xff]
    %v87 = vld [vmem:[%s0 + $0x1e8] sm:$0xff]
    %v88 = vld [vmem:[%s0 + $0x1f0] sm:$0xff]
    %v89 = vld [vmem:[%s0 + $0x1f8] sm:$0xff]
    %v90 = vld [vmem:[%s0 + $0x200] sm:$0xff]
    %v91 = vld [vmem:[%s0 + $0x208] sm:$0xff]
    %v92 = vld [vmem:[%s0 + $0x210] sm:$0xff]
    %v93 = vld [vmem:[%s0 + $0x218] sm:$0xff]
    %v94 = vld [vmem:[%s0 + $0x220] sm:$0xff]
    %v95 = vld [vmem:[%s0 + $0x228] sm:$0xff]
    %v96 = vld [vmem:[%s0 + $0x230] sm:$0xff]
    %v97 = vld [vmem:[%s0 + $0x238] sm:$0xff]
    %v98 = vld [vmem:[%s0 + $0x240] sm:$0xff]
    %v99 = vld [vmem:[%s0 + $0x248] sm:$0xff]
    %v100 = vld [vmem:[%s0 + $0x250] sm:$0xff]
    %v101 = vld [vmem:[%s0 + $0x258] sm:$0xff]
    %v102 = vld [vmem:[%s0 + $0x260] sm:$0xff]
    %v103 = vld [vmem:[%s0 + $0x268] sm:$0xff]
    %v104 = vld [vmem:[%s0 + $0x270] sm:$0xff]
    %v105 = vld [vmem:[%s0 + $0x278] sm:$0xff]
    %v106 = vld [vmem:[%s0 + $0x280] sm:$0xff]
    %v107 = vld [vmem:[%s0 + $0x288] sm:$0xff]
    %v108 = vld [vmem:[%s0 + $0x290] sm:$0xff]
    %v109 = vld [vmem:[%s0 + $0x298] sm:$0xff]
    %v110 = vld [vmem:[%s0 + $0x2a0] sm:$0xff]
    %v111 = vld [vmem:[%s0 + $0x2a8] sm:$0xff]
    %v112 = vld [vmem:[%s0 + $0x2b0] sm:$0xff]
    %v113 = vld [vmem:[%s0 + $0x2b8] sm:$0xff]
    %v114 = vld [vmem:[%s0 + $0x2c0] sm:$0xff]
    %v115 = vld [vmem:[%s0 + $0x2c8] sm:$0xff]
    %v116 = vld [vmem:[%s0 + $0x2d0] sm:$0xff]
    %v117 = vld [vmem:[%s0 + $0x2d8] sm:$0xff]
    %v118 = vld [vmem:[%s0 + $0x2e0] sm:$0xff]
    %v119 = vld [vmem:[%s0 + $0x2e8] sm:$0xff]
    %v120 = vld [vmem:[%s0 + $0x2f0] sm:$0xff]
    %v121 = vld [vmem:[%s0 + $0x2f8] sm:$0xff]
    %v122 = vld [vmem:[%s0 + $0x300] sm:$0xff]
    %v123 = vld [vmem:[%s0 + $0x308] sm:$0xff]
    %v124 = vld [vmem:[%s0 + $0x310] sm:$0xff]
    %v125 = vld [vmem:[%s0 + $0x318] sm:$0xff]
    %v126 = vld [vmem:[%s0 + $0x320] sm:$0xff]
    %v127 = vld [vmem:[%s0 + $0x328] sm:$0xff]
    %v128 = vld [vmem:[%s0 + $0x330] sm:$0xff]
    %v129 = vld [vmem:[%s0 + $0x338] sm:$0xff]
    %v130 = vld [vmem:[%s0 + $0x340] sm:$0xff]
    %v131 = vld [vmem:[%s0 + $0x348] sm:$0xff]
    %v132 = vld [vmem:[%s0 + $0x350] sm:$0xff]
    %v133 = vld [vmem:[%s0 + $0x358] sm:$0xff]
    %v134 = vld [vmem:[%s0 + $0x360] sm:$0xff]
    %v135 = vld [vmem:[%s0 + $0x368] sm:$0xff]
    %v136 = vld [vmem:[%s0 + $0x370] sm:$0xff]
    %v137 = vld [vmem:[%s0 + $0x378] sm:$0xff]
    %v138 = vld [vmem:[%s0 + $0x380] sm:$0xff]
    %v139 = vld [vmem:[%s0 + $0x388] sm:$0xff]
    %v140 = vld [vmem:[%s0 + $0x390] sm:$0xff]
    %v141 = vld [vmem:[%s0 + $0x398] sm:$0xff]
    %v142 = vld [vmem:[%s0 + $0x3a0] sm:$0xff]
    %v143 = vld [vmem:[%s0 + $0x3a8] sm:$0xff]
    %v144 = vld [vmem:[%s0 + $0x3b0] sm:$0xff]
    %v145 = vld [vmem:[%s0 + $0x3b8] sm:$0xff]
    %v146 = vld [vmem:[%s0 + $0x3c0] sm:$0xff]
    %v147 = vld [vmem:[%s0 + $0x3c8] sm:$0xff]
    %v148 = vld [vmem:[%s0 + $0x3d0] sm:$0xff]
    %v149 = vld [vmem:[%s0 + $0x3d8] sm:$0xff]
    %v150 = vld [vmem:[%s0 + $0x3e0] sm:$0xff]
    %v151 = vld [vmem:[%s0 + $0x3e8] sm:$0xff]
    %v152 = vld [vmem:[%s0 + $0x3f0] sm:$0xff]
    %v153 = vld [vmem:[%s0 + $0x3f8] sm:$0xff]
    %v154 = vld [vmem:[%s2] sm:$0x1]
    %156 = vset.pattern.permute.xlu0 0
    %157 = vperm.xlu0 %156, %v26
    %v158 = vpop.permute.xlu0 %157
    %161 = vset.pattern.permute.xlu0 0
    %162 = vperm.xlu0 %161, %v27
    %v163 = vpop.permute.xlu0 %162
    %166 = vset.pattern.permute.xlu0 0
    %167 = vperm.xlu0 %166, %v28
    %v168 = vpop.permute.xlu0 %167
    %171 = vset.pattern.permute.xlu0 0
    %172 = vperm.xlu0 %171, %v29
    %v173 = vpop.permute.xlu0 %172
    %176 = vset.pattern.permute.xlu0 0
    %177 = vperm.xlu0 %176, %v30
    %v178 = vpop.permute.xlu0 %177
    %181 = vset.pattern.permute.xlu0 0
    %182 = vperm.xlu0 %181, %v31
    %v183 = vpop.permute.xlu0 %182
    %186 = vset.pattern.permute.xlu0 0
    %187 = vperm.xlu0 %186, %v32
    %v188 = vpop.permute.xlu0 %187
    %191 = vset.pattern.permute.xlu0 0
    %192 = vperm.xlu0 %191, %v33
    %v193 = vpop.permute.xlu0 %192
    %196 = vset.pattern.permute.xlu0 0
    %197 = vperm.xlu0 %196, %v34
    %v198 = vpop.permute.xlu0 %197
    %201 = vset.pattern.permute.xlu0 0
    %202 = vperm.xlu0 %201, %v35
    %v203 = vpop.permute.xlu0 %202
    %206 = vset.pattern.permute.xlu0 0
    %207 = vperm.xlu0 %206, %v36
    %v208 = vpop.permute.xlu0 %207
    %211 = vset.pattern.permute.xlu0 0
    %212 = vperm.xlu0 %211, %v37
    %v213 = vpop.permute.xlu0 %212
    %216 = vset.pattern.permute.xlu0 0
    %217 = vperm.xlu0 %216, %v38
    %v218 = vpop.permute.xlu0 %217
    %221 = vset.pattern.permute.xlu0 0
    %222 = vperm.xlu0 %221, %v39
    %v223 = vpop.permute.xlu0 %222
    %226 = vset.pattern.permute.xlu0 0
    %227 = vperm.xlu0 %226, %v40
    %v228 = vpop.permute.xlu0 %227
    %231 = vset.pattern.permute.xlu0 0
    %232 = vperm.xlu0 %231, %v41
    %v233 = vpop.permute.xlu0 %232
    %236 = vset.pattern.permute.xlu0 0
    %237 = vperm.xlu0 %236, %v42
    %v238 = vpop.permute.xlu0 %237
    %241 = vset.pattern.permute.xlu0 0
    %242 = vperm.xlu0 %241, %v43
    %v243 = vpop.permute.xlu0 %242
    %246 = vset.pattern.permute.xlu0 0
    %247 = vperm.xlu0 %246, %v44
    %v248 = vpop.permute.xlu0 %247
    %251 = vset.pattern.permute.xlu0 0
    %252 = vperm.xlu0 %251, %v45
    %v253 = vpop.permute.xlu0 %252
    %256 = vset.pattern.permute.xlu0 0
    %257 = vperm.xlu0 %256, %v46
    %v258 = vpop.permute.xlu0 %257
    %261 = vset.pattern.permute.xlu0 0
    %262 = vperm.xlu0 %261, %v47
    %v263 = vpop.permute.xlu0 %262
    %266 = vset.pattern.permute.xlu0 0
    %267 = vperm.xlu0 %266, %v48
    %v268 = vpop.permute.xlu0 %267
    %271 = vset.pattern.permute.xlu0 0
    %272 = vperm.xlu0 %271, %v49
    %v273 = vpop.permute.xlu0 %272
    %276 = vset.pattern.permute.xlu0 0
    %277 = vperm.xlu0 %276, %v50
    %v278 = vpop.permute.xlu0 %277
    %281 = vset.pattern.permute.xlu0 0
    %282 = vperm.xlu0 %281, %v51
    %v283 = vpop.permute.xlu0 %282
    %286 = vset.pattern.permute.xlu0 0
    %287 = vperm.xlu0 %286, %v52
    %v288 = vpop.permute.xlu0 %287
    %291 = vset.pattern.permute.xlu0 0
    %292 = vperm.xlu0 %291, %v53
    %v293 = vpop.permute.xlu0 %292
    %296 = vset.pattern.permute.xlu0 0
    %297 = vperm.xlu0 %296, %v54
    %v298 = vpop.permute.xlu0 %297
    %301 = vset.pattern.permute.xlu0 0
    %302 = vperm.xlu0 %301, %v55
    %v303 = vpop.permute.xlu0 %302
    %306 = vset.pattern.permute.xlu0 0
    %307 = vperm.xlu0 %306, %v56
    %v308 = vpop.permute.xlu0 %307
    %311 = vset.pattern.permute.xlu0 0
    %312 = vperm.xlu0 %311, %v57
    %v313 = vpop.permute.xlu0 %312
    %316 = vset.pattern.permute.xlu0 0
    %317 = vperm.xlu0 %316, %v58
    %v318 = vpop.permute.xlu0 %317
    %321 = vset.pattern.permute.xlu0 0
    %322 = vperm.xlu0 %321, %v59
    %v323 = vpop.permute.xlu0 %322
    %326 = vset.pattern.permute.xlu0 0
    %327 = vperm.xlu0 %326, %v60
    %v328 = vpop.permute.xlu0 %327
    %331 = vset.pattern.permute.xlu0 0
    %332 = vperm.xlu0 %331, %v61
    %v333 = vpop.permute.xlu0 %332
    %336 = vset.pattern.permute.xlu0 0
    %337 = vperm.xlu0 %336, %v62
    %v338 = vpop.permute.xlu0 %337
    %341 = vset.pattern.permute.xlu0 0
    %342 = vperm.xlu0 %341, %v63
    %v343 = vpop.permute.xlu0 %342
    %346 = vset.pattern.permute.xlu0 0
    %347 = vperm.xlu0 %346, %v64
    %v348 = vpop.permute.xlu0 %347
    %351 = vset.pattern.permute.xlu0 0
    %352 = vperm.xlu0 %351, %v65
    %v353 = vpop.permute.xlu0 %352
    %356 = vset.pattern.permute.xlu0 0
    %357 = vperm.xlu0 %356, %v66
    %v358 = vpop.permute.xlu0 %357
    %361 = vset.pattern.permute.xlu0 0
    %362 = vperm.xlu0 %361, %v67
    %v363 = vpop.permute.xlu0 %362
    %366 = vset.pattern.permute.xlu0 0
    %367 = vperm.xlu0 %366, %v68
    %v368 = vpop.permute.xlu0 %367
    %371 = vset.pattern.permute.xlu0 0
    %372 = vperm.xlu0 %371, %v69
    %v373 = vpop.permute.xlu0 %372
    %376 = vset.pattern.permute.xlu0 0
    %377 = vperm.xlu0 %376, %v70
    %v378 = vpop.permute.xlu0 %377
    %381 = vset.pattern.permute.xlu0 0
    %382 = vperm.xlu0 %381, %v71
    %v383 = vpop.permute.xlu0 %382
    %386 = vset.pattern.permute.xlu0 0
    %387 = vperm.xlu0 %386, %v72
    %v388 = vpop.permute.xlu0 %387
    %391 = vset.pattern.permute.xlu0 0
    %392 = vperm.xlu0 %391, %v73
    %v393 = vpop.permute.xlu0 %392
    %396 = vset.pattern.permute.xlu0 0
    %397 = vperm.xlu0 %396, %v74
    %v398 = vpop.permute.xlu0 %397
    %401 = vset.pattern.permute.xlu0 0
    %402 = vperm.xlu0 %401, %v75
    %v403 = vpop.permute.xlu0 %402
    %406 = vset.pattern.permute.xlu0 0
    %407 = vperm.xlu0 %406, %v76
    %v408 = vpop.permute.xlu0 %407
    %411 = vset.pattern.permute.xlu0 0
    %412 = vperm.xlu0 %411, %v77
    %v413 = vpop.permute.xlu0 %412
    %416 = vset.pattern.permute.xlu0 0
    %417 = vperm.xlu0 %416, %v78
    %v418 = vpop.permute.xlu0 %417
    %421 = vset.pattern.permute.xlu0 0
    %422 = vperm.xlu0 %421, %v79
    %v423 = vpop.permute.xlu0 %422
    %426 = vset.pattern.permute.xlu0 0
    %427 = vperm.xlu0 %426, %v80
    %v428 = vpop.permute.xlu0 %427
    %431 = vset.pattern.permute.xlu0 0
    %432 = vperm.xlu0 %431, %v81
    %v433 = vpop.permute.xlu0 %432
    %436 = vset.pattern.permute.xlu0 0
    %437 = vperm.xlu0 %436, %v82
    %v438 = vpop.permute.xlu0 %437
    %441 = vset.pattern.permute.xlu0 0
    %442 = vperm.xlu0 %441, %v83
    %v443 = vpop.permute.xlu0 %442
    %446 = vset.pattern.permute.xlu0 0
    %447 = vperm.xlu0 %446, %v84
    %v448 = vpop.permute.xlu0 %447
    %451 = vset.pattern.permute.xlu0 0
    %452 = vperm.xlu0 %451, %v85
    %v453 = vpop.permute.xlu0 %452
    %456 = vset.pattern.permute.xlu0 0
    %457 = vperm.xlu0 %456, %v86
    %v458 = vpop.permute.xlu0 %457
    %461 = vset.pattern.permute.xlu0 0
    %462 = vperm.xlu0 %461, %v87
    %v463 = vpop.permute.xlu0 %462
    %466 = vset.pattern.permute.xlu0 0
    %467 = vperm.xlu0 %466, %v88
    %v468 = vpop.permute.xlu0 %467
    %471 = vset.pattern.permute.xlu0 0
    %472 = vperm.xlu0 %471, %v89
    %v473 = vpop.permute.xlu0 %472
    %476 = vset.pattern.permute.xlu0 0
    %477 = vperm.xlu0 %476, %v90
    %v478 = vpop.permute.xlu0 %477
    %481 = vset.pattern.permute.xlu0 0
    %482 = vperm.xlu0 %481, %v91
    %v483 = vpop.permute.xlu0 %482
    %486 = vset.pattern.permute.xlu0 0
    %487 = vperm.xlu0 %486, %v92
    %v488 = vpop.permute.xlu0 %487
    %491 = vset.pattern.permute.xlu0 0
    %492 = vperm.xlu0 %491, %v93
    %v493 = vpop.permute.xlu0 %492
    %496 = vset.pattern.permute.xlu0 0
    %497 = vperm.xlu0 %496, %v94
    %v498 = vpop.permute.xlu0 %497
    %501 = vset.pattern.permute.xlu0 0
    %502 = vperm.xlu0 %501, %v95
    %v503 = vpop.permute.xlu0 %502
    %506 = vset.pattern.permute.xlu0 0
    %507 = vperm.xlu0 %506, %v96
    %v508 = vpop.permute.xlu0 %507
    %511 = vset.pattern.permute.xlu0 0
    %512 = vperm.xlu0 %511, %v97
    %v513 = vpop.permute.xlu0 %512
    %516 = vset.pattern.permute.xlu0 0
    %517 = vperm.xlu0 %516, %v98
    %v518 = vpop.permute.xlu0 %517
    %521 = vset.pattern.permute.xlu0 0
    %522 = vperm.xlu0 %521, %v99
    %v523 = vpop.permute.xlu0 %522
    %526 = vset.pattern.permute.xlu0 0
    %527 = vperm.xlu0 %526, %v100
    %v528 = vpop.permute.xlu0 %527
    %531 = vset.pattern.permute.xlu0 0
    %532 = vperm.xlu0 %531, %v101
    %v533 = vpop.permute.xlu0 %532
    %536 = vset.pattern.permute.xlu0 0
    %537 = vperm.xlu0 %536, %v102
    %v538 = vpop.permute.xlu0 %537
    %541 = vset.pattern.permute.xlu0 0
    %542 = vperm.xlu0 %541, %v103
    %v543 = vpop.permute.xlu0 %542
    %546 = vset.pattern.permute.xlu0 0
    %547 = vperm.xlu0 %546, %v104
    %v548 = vpop.permute.xlu0 %547
    %551 = vset.pattern.permute.xlu0 0
    %552 = vperm.xlu0 %551, %v105
    %v553 = vpop.permute.xlu0 %552
    %556 = vset.pattern.permute.xlu0 0
    %557 = vperm.xlu0 %556, %v106
    %v558 = vpop.permute.xlu0 %557
    %561 = vset.pattern.permute.xlu0 0
    %562 = vperm.xlu0 %561, %v107
    %v563 = vpop.permute.xlu0 %562
    %566 = vset.pattern.permute.xlu0 0
    %567 = vperm.xlu0 %566, %v108
    %v568 = vpop.permute.xlu0 %567
    %571 = vset.pattern.permute.xlu0 0
    %572 = vperm.xlu0 %571, %v109
    %v573 = vpop.permute.xlu0 %572
    %576 = vset.pattern.permute.xlu0 0
    %577 = vperm.xlu0 %576, %v110
    %v578 = vpop.permute.xlu0 %577
    %581 = vset.pattern.permute.xlu0 0
    %582 = vperm.xlu0 %581, %v111
    %v583 = vpop.permute.xlu0 %582
    %586 = vset.pattern.permute.xlu0 0
    %587 = vperm.xlu0 %586, %v112
    %v588 = vpop.permute.xlu0 %587
    %591 = vset.pattern.permute.xlu0 0
    %592 = vperm.xlu0 %591, %v113
    %v593 = vpop.permute.xlu0 %592
    %596 = vset.pattern.permute.xlu0 0
    %597 = vperm.xlu0 %596, %v114
    %v598 = vpop.permute.xlu0 %597
    %601 = vset.pattern.permute.xlu0 0
    %602 = vperm.xlu0 %601, %v115
    %v603 = vpop.permute.xlu0 %602
    %606 = vset.pattern.permute.xlu0 0
    %607 = vperm.xlu0 %606, %v116
    %v608 = vpop.permute.xlu0 %607
    %611 = vset.pattern.permute.xlu0 0
    %612 = vperm.xlu0 %611, %v117
    %v613 = vpop.permute.xlu0 %612
    %616 = vset.pattern.permute.xlu0 0
    %617 = vperm.xlu0 %616, %v118
    %v618 = vpop.permute.xlu0 %617
    %621 = vset.pattern.permute.xlu0 0
    %622 = vperm.xlu0 %621, %v119
    %v623 = vpop.permute.xlu0 %622
    %626 = vset.pattern.permute.xlu0 0
    %627 = vperm.xlu0 %626, %v120
    %v628 = vpop.permute.xlu0 %627
    %631 = vset.pattern.permute.xlu0 0
    %632 = vperm.xlu0 %631, %v121
    %v633 = vpop.permute.xlu0 %632
    %636 = vset.pattern.permute.xlu0 0
    %637 = vperm.xlu0 %636, %v122
    %v638 = vpop.permute.xlu0 %637
    %641 = vset.pattern.permute.xlu0 0
    %642 = vperm.xlu0 %641, %v123
    %v643 = vpop.permute.xlu0 %642
    %646 = vset.pattern.permute.xlu0 0
    %647 = vperm.xlu0 %646, %v124
    %v648 = vpop.permute.xlu0 %647
    %651 = vset.pattern.permute.xlu0 0
    %652 = vperm.xlu0 %651, %v125
    %v653 = vpop.permute.xlu0 %652
    %656 = vset.pattern.permute.xlu0 0
    %657 = vperm.xlu0 %656, %v126
    %v658 = vpop.permute.xlu0 %657
    %661 = vset.pattern.permute.xlu0 0
    %662 = vperm.xlu0 %661, %v127
    %v663 = vpop.permute.xlu0 %662
    %666 = vset.pattern.permute.xlu0 0
    %667 = vperm.xlu0 %666, %v128
    %v668 = vpop.permute.xlu0 %667
    %671 = vset.pattern.permute.xlu0 0
    %672 = vperm.xlu0 %671, %v129
    %v673 = vpop.permute.xlu0 %672
    %676 = vset.pattern.permute.xlu0 0
    %677 = vperm.xlu0 %676, %v130
    %v678 = vpop.permute.xlu0 %677
    %681 = vset.pattern.permute.xlu0 0
    %682 = vperm.xlu0 %681, %v131
    %v683 = vpop.permute.xlu0 %682
    %686 = vset.pattern.permute.xlu0 0
    %687 = vperm.xlu0 %686, %v132
    %v688 = vpop.permute.xlu0 %687
    %691 = vset.pattern.permute.xlu0 0
    %692 = vperm.xlu0 %691, %v133
    %v693 = vpop.permute.xlu0 %692
    %696 = vset.pattern.permute.xlu0 0
    %697 = vperm.xlu0 %696, %v134
    %v698 = vpop.permute.xlu0 %697
    %701 = vset.pattern.permute.xlu0 0
    %702 = vperm.xlu0 %701, %v135
    %v703 = vpop.permute.xlu0 %702
    %706 = vset.pattern.permute.xlu0 0
    %707 = vperm.xlu0 %706, %v136
    %v708 = vpop.permute.xlu0 %707
    %711 = vset.pattern.permute.xlu0 0
    %712 = vperm.xlu0 %711, %v137
    %v713 = vpop.permute.xlu0 %712
    %716 = vset.pattern.permute.xlu0 0
    %717 = vperm.xlu0 %716, %v138
    %v718 = vpop.permute.xlu0 %717
    %721 = vset.pattern.permute.xlu0 0
    %722 = vperm.xlu0 %721, %v139
    %v723 = vpop.permute.xlu0 %722
    %726 = vset.pattern.permute.xlu0 0
    %727 = vperm.xlu0 %726, %v140
    %v728 = vpop.permute.xlu0 %727
    %731 = vset.pattern.permute.xlu0 0
    %732 = vperm.xlu0 %731, %v141
    %v733 = vpop.permute.xlu0 %732
    %736 = vset.pattern.permute.xlu0 0
    %737 = vperm.xlu0 %736, %v142
    %v738 = vpop.permute.xlu0 %737
    %741 = vset.pattern.permute.xlu0 0
    %742 = vperm.xlu0 %741, %v143
    %v743 = vpop.permute.xlu0 %742
    %746 = vset.pattern.permute.xlu0 0
    %747 = vperm.xlu0 %746, %v144
    %v748 = vpop.permute.xlu0 %747
    %751 = vset.pattern.permute.xlu0 0
    %752 = vperm.xlu0 %751, %v145
    %v753 = vpop.permute.xlu0 %752
    %756 = vset.pattern.permute.xlu0 0
    %757 = vperm.xlu0 %756, %v146
    %v758 = vpop.permute.xlu0 %757
    %761 = vset.pattern.permute.xlu0 0
    %762 = vperm.xlu0 %761, %v147
    %v763 = vpop.permute.xlu0 %762
    %766 = vset.pattern.permute.xlu0 0
    %767 = vperm.xlu0 %766, %v148
    %v768 = vpop.permute.xlu0 %767
    %771 = vset.pattern.permute.xlu0 0
    %772 = vperm.xlu0 %771, %v149
    %v773 = vpop.permute.xlu0 %772
    %776 = vset.pattern.permute.xlu0 0
    %777 = vperm.xlu0 %776, %v150
    %v778 = vpop.permute.xlu0 %777
    %781 = vset.pattern.permute.xlu0 0
    %782 = vperm.xlu0 %781, %v151
    %v783 = vpop.permute.xlu0 %782
    %786 = vset.pattern.permute.xlu0 0
    %787 = vperm.xlu0 %786, %v152
    %v788 = vpop.permute.xlu0 %787
    %791 = vset.pattern.permute.xlu0 0
    %792 = vperm.xlu0 %791, %v153
    %v793 = vpop.permute.xlu0 %792
    %v796 = vlaneseq
    %v797 = vshrl.u32 %v796, 7
    %v798 = vsub.s32 0, %v797
    %v799 = vrot.slane %v154, %v798
    %v801 = vmul.f32 %v158, %v799
    %v802 = vmul.f32 %v163, %v799
    %v803 = vmul.f32 %v168, %v799
    %v804 = vmul.f32 %v173, %v799
    %v805 = vmul.f32 %v178, %v799
    %v806 = vmul.f32 %v183, %v799
    %v807 = vmul.f32 %v188, %v799
    %v808 = vmul.f32 %v193, %v799
    %v809 = vmul.f32 %v198, %v799
    %v810 = vmul.f32 %v203, %v799
    %v811 = vmul.f32 %v208, %v799
    %v812 = vmul.f32 %v213, %v799
    %v813 = vmul.f32 %v218, %v799
    %v814 = vmul.f32 %v223, %v799
    %v815 = vmul.f32 %v228, %v799
    %v816 = vmul.f32 %v233, %v799
    %v817 = vmul.f32 %v238, %v799
    %v818 = vmul.f32 %v243, %v799
    %v819 = vmul.f32 %v248, %v799
    %v820 = vmul.f32 %v253, %v799
    %v821 = vmul.f32 %v258, %v799
    %v822 = vmul.f32 %v263, %v799
    %v823 = vmul.f32 %v268, %v799
    %v824 = vmul.f32 %v273, %v799
    %v825 = vmul.f32 %v278, %v799
    %v826 = vmul.f32 %v283, %v799
    %v827 = vmul.f32 %v288, %v799
    %v828 = vmul.f32 %v293, %v799
    %v829 = vmul.f32 %v298, %v799
    %v830 = vmul.f32 %v303, %v799
    %v831 = vmul.f32 %v308, %v799
    %v832 = vmul.f32 %v313, %v799
    %v833 = vmul.f32 %v318, %v799
    %v834 = vmul.f32 %v323, %v799
    %v835 = vmul.f32 %v328, %v799
    %v836 = vmul.f32 %v333, %v799
    %v837 = vmul.f32 %v338, %v799
    %v838 = vmul.f32 %v343, %v799
    %v839 = vmul.f32 %v348, %v799
    %v840 = vmul.f32 %v353, %v799
    %v841 = vmul.f32 %v358, %v799
    %v842 = vmul.f32 %v363, %v799
    %v843 = vmul.f32 %v368, %v799
    %v844 = vmul.f32 %v373, %v799
    %v845 = vmul.f32 %v378, %v799
    %v846 = vmul.f32 %v383, %v799
    %v847 = vmul.f32 %v388, %v799
    %v848 = vmul.f32 %v393, %v799
    %v849 = vmul.f32 %v398, %v799
    %v850 = vmul.f32 %v403, %v799
    %v851 = vmul.f32 %v408, %v799
    %v852 = vmul.f32 %v413, %v799
    %v853 = vmul.f32 %v418, %v799
    %v854 = vmul.f32 %v423, %v799
    %v855 = vmul.f32 %v428, %v799
    %v856 = vmul.f32 %v433, %v799
    %v857 = vmul.f32 %v438, %v799
    %v858 = vmul.f32 %v443, %v799
    %v859 = vmul.f32 %v448, %v799
    %v860 = vmul.f32 %v453, %v799
    %v861 = vmul.f32 %v458, %v799
    %v862 = vmul.f32 %v463, %v799
    %v863 = vmul.f32 %v468, %v799
    %v864 = vmul.f32 %v473, %v799
    %v865 = vmul.f32 %v478, %v799
    %v866 = vmul.f32 %v483, %v799
    %v867 = vmul.f32 %v488, %v799
    %v868 = vmul.f32 %v493, %v799
    %v869 = vmul.f32 %v498, %v799
    %v870 = vmul.f32 %v503, %v799
    %v871 = vmul.f32 %v508, %v799
    %v872 = vmul.f32 %v513, %v799
    %v873 = vmul.f32 %v518, %v799
    %v874 = vmul.f32 %v523, %v799
    %v875 = vmul.f32 %v528, %v799
    %v876 = vmul.f32 %v533, %v799
    %v877 = vmul.f32 %v538, %v799
    %v878 = vmul.f32 %v543, %v799
    %v879 = vmul.f32 %v548, %v799
    %v880 = vmul.f32 %v553, %v799
    %v881 = vmul.f32 %v558, %v799
    %v882 = vmul.f32 %v563, %v799
    %v883 = vmul.f32 %v568, %v799
    %v884 = vmul.f32 %v573, %v799
    %v885 = vmul.f32 %v578, %v799
    %v886 = vmul.f32 %v583, %v799
    %v887 = vmul.f32 %v588, %v799
    %v888 = vmul.f32 %v593, %v799
    %v889 = vmul.f32 %v598, %v799
    %v890 = vmul.f32 %v603, %v799
    %v891 = vmul.f32 %v608, %v799
    %v892 = vmul.f32 %v613, %v799
    %v893 = vmul.f32 %v618, %v799
    %v894 = vmul.f32 %v623, %v799
    %v895 = vmul.f32 %v628, %v799
    %v896 = vmul.f32 %v633, %v799
    %v897 = vmul.f32 %v638, %v799
    %v898 = vmul.f32 %v643, %v799
    %v899 = vmul.f32 %v648, %v799
    %v900 = vmul.f32 %v653, %v799
    %v901 = vmul.f32 %v658, %v799
    %v902 = vmul.f32 %v663, %v799
    %v903 = vmul.f32 %v668, %v799
    %v904 = vmul.f32 %v673, %v799
    %v905 = vmul.f32 %v678, %v799
    %v906 = vmul.f32 %v683, %v799
    %v907 = vmul.f32 %v688, %v799
    %v908 = vmul.f32 %v693, %v799
    %v909 = vmul.f32 %v698, %v799
    %v910 = vmul.f32 %v703, %v799
    %v911 = vmul.f32 %v708, %v799
    %v912 = vmul.f32 %v713, %v799
    %v913 = vmul.f32 %v718, %v799
    %v914 = vmul.f32 %v723, %v799
    %v915 = vmul.f32 %v728, %v799
    %v916 = vmul.f32 %v733, %v799
    %v917 = vmul.f32 %v738, %v799
    %v918 = vmul.f32 %v743, %v799
    %v919 = vmul.f32 %v748, %v799
    %v920 = vmul.f32 %v753, %v799
    %v921 = vmul.f32 %v758, %v799
    %v922 = vmul.f32 %v763, %v799
    %v923 = vmul.f32 %v768, %v799
    %v924 = vmul.f32 %v773, %v799
    %v925 = vmul.f32 %v778, %v799
    %v926 = vmul.f32 %v783, %v799
    %v927 = vmul.f32 %v788, %v799
    %v928 = vmul.f32 %v793, %v799
    %v929 = vld [vmem:[%s3] sm:$0x1]
    %v931 = vlaneseq
    %v932 = vshrl.u32 %v931, 7
    %v933 = vsub.s32 0, %v932
    %v934 = vrot.slane %v929, %v933
    %v936 = vadd.f32 %v801, %v934
    %v937 = vadd.f32 %v802, %v934
    %v938 = vadd.f32 %v803, %v934
    %v939 = vadd.f32 %v804, %v934
    %v940 = vadd.f32 %v805, %v934
    %v941 = vadd.f32 %v806, %v934
    %v942 = vadd.f32 %v807, %v934
    %v943 = vadd.f32 %v808, %v934
    %v944 = vadd.f32 %v809, %v934
    %v945 = vadd.f32 %v810, %v934
    %v946 = vadd.f32 %v811, %v934
    %v947 = vadd.f32 %v812, %v934
    %v948 = vadd.f32 %v813, %v934
    %v949 = vadd.f32 %v814, %v934
    %v950 = vadd.f32 %v815, %v934
    %v951 = vadd.f32 %v816, %v934
    %v952 = vadd.f32 %v817, %v934
    %v953 = vadd.f32 %v818, %v934
    %v954 = vadd.f32 %v819, %v934
    %v955 = vadd.f32 %v820, %v934
    %v956 = vadd.f32 %v821, %v934
    %v957 = vadd.f32 %v822, %v934
    %v958 = vadd.f32 %v823, %v934
    %v959 = vadd.f32 %v824, %v934
    %v960 = vadd.f32 %v825, %v934
    %v961 = vadd.f32 %v826, %v934
    %v962 = vadd.f32 %v827, %v934
    %v963 = vadd.f32 %v828, %v934
    %v964 = vadd.f32 %v829, %v934
    %v965 = vadd.f32 %v830, %v934
    %v966 = vadd.f32 %v831, %v934
    %v967 = vadd.f32 %v832, %v934
    %v968 = vadd.f32 %v833, %v934
    %v969 = vadd.f32 %v834, %v934
    %v970 = vadd.f32 %v835, %v934
    %v971 = vadd.f32 %v836, %v934
    %v972 = vadd.f32 %v837, %v934
    %v973 = vadd.f32 %v838, %v934
    %v974 = vadd.f32 %v839, %v934
    %v975 = vadd.f32 %v840, %v934
    %v976 = vadd.f32 %v841, %v934
    %v977 = vadd.f32 %v842, %v934
    %v978 = vadd.f32 %v843, %v934
    %v979 = vadd.f32 %v844, %v934
    %v980 = vadd.f32 %v845, %v934
    %v981 = vadd.f32 %v846, %v934
    %v982 = vadd.f32 %v847, %v934
    %v983 = vadd.f32 %v848, %v934
    %v984 = vadd.f32 %v849, %v934
    %v985 = vadd.f32 %v850, %v934
    %v986 = vadd.f32 %v851, %v934
    %v987 = vadd.f32 %v852, %v934
    %v988 = vadd.f32 %v853, %v934
    %v989 = vadd.f32 %v854, %v934
    %v990 = vadd.f32 %v855, %v934
    %v991 = vadd.f32 %v856, %v934
    %v992 = vadd.f32 %v857, %v934
    %v993 = vadd.f32 %v858, %v934
    %v994 = vadd.f32 %v859, %v934
    %v995 = vadd.f32 %v860, %v934
    %v996 = vadd.f32 %v861, %v934
    %v997 = vadd.f32 %v862, %v934
    %v998 = vadd.f32 %v863, %v934
    %v999 = vadd.f32 %v864, %v934
    %v1000 = vadd.f32 %v865, %v934
    %v1001 = vadd.f32 %v866, %v934
    %v1002 = vadd.f32 %v867, %v934
    %v1003 = vadd.f32 %v868, %v934
    %v1004 = vadd.f32 %v869, %v934
    %v1005 = vadd.f32 %v870, %v934
    %v1006 = vadd.f32 %v871, %v934
    %v1007 = vadd.f32 %v872, %v934
    %v1008 = vadd.f32 %v873, %v934
    %v1009 = vadd.f32 %v874, %v934
    %v1010 = vadd.f32 %v875, %v934
    %v1011 = vadd.f32 %v876, %v934
    %v1012 = vadd.f32 %v877, %v934
    %v1013 = vadd.f32 %v878, %v934
    %v1014 = vadd.f32 %v879, %v934
    %v1015 = vadd.f32 %v880, %v934
    %v1016 = vadd.f32 %v881, %v934
    %v1017 = vadd.f32 %v882, %v934
    %v1018 = vadd.f32 %v883, %v934
    %v1019 = vadd.f32 %v884, %v934
    %v1020 = vadd.f32 %v885, %v934
    %v1021 = vadd.f32 %v886, %v934
    %v1022 = vadd.f32 %v887, %v934
    %v1023 = vadd.f32 %v888, %v934
    %v1024 = vadd.f32 %v889, %v934
    %v1025 = vadd.f32 %v890, %v934
    %v1026 = vadd.f32 %v891, %v934
    %v1027 = vadd.f32 %v892, %v934
    %v1028 = vadd.f32 %v893, %v934
    %v1029 = vadd.f32 %v894, %v934
    %v1030 = vadd.f32 %v895, %v934
    %v1031 = vadd.f32 %v896, %v934
    %v1032 = vadd.f32 %v897, %v934
    %v1033 = vadd.f32 %v898, %v934
    %v1034 = vadd.f32 %v899, %v934
    %v1035 = vadd.f32 %v900, %v934
    %v1036 = vadd.f32 %v901, %v934
    %v1037 = vadd.f32 %v902, %v934
    %v1038 = vadd.f32 %v903, %v934
    %v1039 = vadd.f32 %v904, %v934
    %v1040 = vadd.f32 %v905, %v934
    %v1041 = vadd.f32 %v906, %v934
    %v1042 = vadd.f32 %v907, %v934
    %v1043 = vadd.f32 %v908, %v934
    %v1044 = vadd.f32 %v909, %v934
    %v1045 = vadd.f32 %v910, %v934
    %v1046 = vadd.f32 %v911, %v934
    %v1047 = vadd.f32 %v912, %v934
    %v1048 = vadd.f32 %v913, %v934
    %v1049 = vadd.f32 %v914, %v934
    %v1050 = vadd.f32 %v915, %v934
    %v1051 = vadd.f32 %v916, %v934
    %v1052 = vadd.f32 %v917, %v934
    %v1053 = vadd.f32 %v918, %v934
    %v1054 = vadd.f32 %v919, %v934
    %v1055 = vadd.f32 %v920, %v934
    %v1056 = vadd.f32 %v921, %v934
    %v1057 = vadd.f32 %v922, %v934
    %v1058 = vadd.f32 %v923, %v934
    %v1059 = vadd.f32 %v924, %v934
    %v1060 = vadd.f32 %v925, %v934
    %v1061 = vadd.f32 %v926, %v934
    %v1062 = vadd.f32 %v927, %v934
    %v1063 = vadd.f32 %v928, %v934
    %1064 = vst [vmem:[#allocation2] sm:$0xff] %v936
    %1065 = vst [vmem:[#allocation2 + $0x8] sm:$0xff] %v937
    %1066 = vst [vmem:[#allocation2 + $0x10] sm:$0xff] %v938
    %1067 = vst [vmem:[#allocation2 + $0x18] sm:$0xff] %v939
    %1068 = vst [vmem:[#allocation2 + $0x20] sm:$0xff] %v940
    %1069 = vst [vmem:[#allocation2 + $0x28] sm:$0xff] %v941
    %1070 = vst [vmem:[#allocation2 + $0x30] sm:$0xff] %v942
    %1071 = vst [vmem:[#allocation2 + $0x38] sm:$0xff] %v943
    %1072 = vst [vmem:[#allocation2 + $0x40] sm:$0xff] %v944
    %1073 = vst [vmem:[#allocation2 + $0x48] sm:$0xff] %v945
    %1074 = vst [vmem:[#allocation2 + $0x50] sm:$0xff] %v946
    %1075 = vst [vmem:[#allocation2 + $0x58] sm:$0xff] %v947
    %1076 = vst [vmem:[#allocation2 + $0x60] sm:$0xff] %v948
    %1077 = vst [vmem:[#allocation2 + $0x68] sm:$0xff] %v949
    %1078 = vst [vmem:[#allocation2 + $0x70] sm:$0xff] %v950
    %1079 = vst [vmem:[#allocation2 + $0x78] sm:$0xff] %v951
    %1080 = vst [vmem:[#allocation2 + $0x80] sm:$0xff] %v952
    %1081 = vst [vmem:[#allocation2 + $0x88] sm:$0xff] %v953
    %1082 = vst [vmem:[#allocation2 + $0x90] sm:$0xff] %v954
    %1083 = vst [vmem:[#allocation2 + $0x98] sm:$0xff] %v955
    %1084 = vst [vmem:[#allocation2 + $0xa0] sm:$0xff] %v956
    %1085 = vst [vmem:[#allocation2 + $0xa8] sm:$0xff] %v957
    %1086 = vst [vmem:[#allocation2 + $0xb0] sm:$0xff] %v958
    %1087 = vst [vmem:[#allocation2 + $0xb8] sm:$0xff] %v959
    %1088 = vst [vmem:[#allocation2 + $0xc0] sm:$0xff] %v960
    %1089 = vst [vmem:[#allocation2 + $0xc8] sm:$0xff] %v961
    %1090 = vst [vmem:[#allocation2 + $0xd0] sm:$0xff] %v962
    %1091 = vst [vmem:[#allocation2 + $0xd8] sm:$0xff] %v963
    %1092 = vst [vmem:[#allocation2 + $0xe0] sm:$0xff] %v964
    %1093 = vst [vmem:[#allocation2 + $0xe8] sm:$0xff] %v965
    %1094 = vst [vmem:[#allocation2 + $0xf0] sm:$0xff] %v966
    %1095 = vst [vmem:[#allocation2 + $0xf8] sm:$0xff] %v967
    %1096 = vst [vmem:[#allocation2 + $0x100] sm:$0xff] %v968
    %1097 = vst [vmem:[#allocation2 + $0x108] sm:$0xff] %v969
    %1098 = vst [vmem:[#allocation2 + $0x110] sm:$0xff] %v970
    %1099 = vst [vmem:[#allocation2 + $0x118] sm:$0xff] %v971
    %1100 = vst [vmem:[#allocation2 + $0x120] sm:$0xff] %v972
    %1101 = vst [vmem:[#allocation2 + $0x128] sm:$0xff] %v973
    %1102 = vst [vmem:[#allocation2 + $0x130] sm:$0xff] %v974
    %1103 = vst [vmem:[#allocation2 + $0x138] sm:$0xff] %v975
    %1104 = vst [vmem:[#allocation2 + $0x140] sm:$0xff] %v976
    %1105 = vst [vmem:[#allocation2 + $0x148] sm:$0xff] %v977
    %1106 = vst [vmem:[#allocation2 + $0x150] sm:$0xff] %v978
    %1107 = vst [vmem:[#allocation2 + $0x158] sm:$0xff] %v979
    %1108 = vst [vmem:[#allocation2 + $0x160] sm:$0xff] %v980
    %1109 = vst [vmem:[#allocation2 + $0x168] sm:$0xff] %v981
    %1110 = vst [vmem:[#allocation2 + $0x170] sm:$0xff] %v982
    %1111 = vst [vmem:[#allocation2 + $0x178] sm:$0xff] %v983
    %1112 = vst [vmem:[#allocation2 + $0x180] sm:$0xff] %v984
    %1113 = vst [vmem:[#allocation2 + $0x188] sm:$0xff] %v985
    %1114 = vst [vmem:[#allocation2 + $0x190] sm:$0xff] %v986
    %1115 = vst [vmem:[#allocation2 + $0x198] sm:$0xff] %v987
    %1116 = vst [vmem:[#allocation2 + $0x1a0] sm:$0xff] %v988
    %1117 = vst [vmem:[#allocation2 + $0x1a8] sm:$0xff] %v989
    %1118 = vst [vmem:[#allocation2 + $0x1b0] sm:$0xff] %v990
    %1119 = vst [vmem:[#allocation2 + $0x1b8] sm:$0xff] %v991
    %1120 = vst [vmem:[#allocation2 + $0x1c0] sm:$0xff] %v992
    %1121 = vst [vmem:[#allocation2 + $0x1c8] sm:$0xff] %v993
    %1122 = vst [vmem:[#allocation2 + $0x1d0] sm:$0xff] %v994
    %1123 = vst [vmem:[#allocation2 + $0x1d8] sm:$0xff] %v995
    %1124 = vst [vmem:[#allocation2 + $0x1e0] sm:$0xff] %v996
    %1125 = vst [vmem:[#allocation2 + $0x1e8] sm:$0xff] %v997
    %1126 = vst [vmem:[#allocation2 + $0x1f0] sm:$0xff] %v998
    %1127 = vst [vmem:[#allocation2 + $0x1f8] sm:$0xff] %v999
    %1128 = vst [vmem:[#allocation2 + $0x200] sm:$0xff] %v1000
    %1129 = vst [vmem:[#allocation2 + $0x208] sm:$0xff] %v1001
    %1130 = vst [vmem:[#allocation2 + $0x210] sm:$0xff] %v1002
    %1131 = vst [vmem:[#allocation2 + $0x218] sm:$0xff] %v1003
    %1132 = vst [vmem:[#allocation2 + $0x220] sm:$0xff] %v1004
    %1133 = vst [vmem:[#allocation2 + $0x228] sm:$0xff] %v1005
    %1134 = vst [vmem:[#allocation2 + $0x230] sm:$0xff] %v1006
    %1135 = vst [vmem:[#allocation2 + $0x238] sm:$0xff] %v1007
    %1136 = vst [vmem:[#allocation2 + $0x240] sm:$0xff] %v1008
    %1137 = vst [vmem:[#allocation2 + $0x248] sm:$0xff] %v1009
    %1138 = vst [vmem:[#allocation2 + $0x250] sm:$0xff] %v1010
    %1139 = vst [vmem:[#allocation2 + $0x258] sm:$0xff] %v1011
    %1140 = vst [vmem:[#allocation2 + $0x260] sm:$0xff] %v1012
    %1141 = vst [vmem:[#allocation2 + $0x268] sm:$0xff] %v1013
    %1142 = vst [vmem:[#allocation2 + $0x270] sm:$0xff] %v1014
    %1143 = vst [vmem:[#allocation2 + $0x278] sm:$0xff] %v1015
    %1144 = vst [vmem:[#allocation2 + $0x280] sm:$0xff] %v1016
    %1145 = vst [vmem:[#allocation2 + $0x288] sm:$0xff] %v1017
    %1146 = vst [vmem:[#allocation2 + $0x290] sm:$0xff] %v1018
    %1147 = vst [vmem:[#allocation2 + $0x298] sm:$0xff] %v1019
    %1148 = vst [vmem:[#allocation2 + $0x2a0] sm:$0xff] %v1020
    %1149 = vst [vmem:[#allocation2 + $0x2a8] sm:$0xff] %v1021
    %1150 = vst [vmem:[#allocation2 + $0x2b0] sm:$0xff] %v1022
    %1151 = vst [vmem:[#allocation2 + $0x2b8] sm:$0xff] %v1023
    %1152 = vst [vmem:[#allocation2 + $0x2c0] sm:$0xff] %v1024
    %1153 = vst [vmem:[#allocation2 + $0x2c8] sm:$0xff] %v1025
    %1154 = vst [vmem:[#allocation2 + $0x2d0] sm:$0xff] %v1026
    %1155 = vst [vmem:[#allocation2 + $0x2d8] sm:$0xff] %v1027
    %1156 = vst [vmem:[#allocation2 + $0x2e0] sm:$0xff] %v1028
    %1157 = vst [vmem:[#allocation2 + $0x2e8] sm:$0xff] %v1029
    %1158 = vst [vmem:[#allocation2 + $0x2f0] sm:$0xff] %v1030
    %1159 = vst [vmem:[#allocation2 + $0x2f8] sm:$0xff] %v1031
    %1160 = vst [vmem:[#allocation2 + $0x300] sm:$0xff] %v1032
    %1161 = vst [vmem:[#allocation2 + $0x308] sm:$0xff] %v1033
    %1162 = vst [vmem:[#allocation2 + $0x310] sm:$0xff] %v1034
    %1163 = vst [vmem:[#allocation2 + $0x318] sm:$0xff] %v1035
    %1164 = vst [vmem:[#allocation2 + $0x320] sm:$0xff] %v1036
    %1165 = vst [vmem:[#allocation2 + $0x328] sm:$0xff] %v1037
    %1166 = vst [vmem:[#allocation2 + $0x330] sm:$0xff] %v1038
    %1167 = vst [vmem:[#allocation2 + $0x338] sm:$0xff] %v1039
    %1168 = vst [vmem:[#allocation2 + $0x340] sm:$0xff] %v1040
    %1169 = vst [vmem:[#allocation2 + $0x348] sm:$0xff] %v1041
    %1170 = vst [vmem:[#allocation2 + $0x350] sm:$0xff] %v1042
    %1171 = vst [vmem:[#allocation2 + $0x358] sm:$0xff] %v1043
    %1172 = vst [vmem:[#allocation2 + $0x360] sm:$0xff] %v1044
    %1173 = vst [vmem:[#allocation2 + $0x368] sm:$0xff] %v1045
    %1174 = vst [vmem:[#allocation2 + $0x370] sm:$0xff] %v1046
    %1175 = vst [vmem:[#allocation2 + $0x378] sm:$0xff] %v1047
    %1176 = vst [vmem:[#allocation2 + $0x380] sm:$0xff] %v1048
    %1177 = vst [vmem:[#allocation2 + $0x388] sm:$0xff] %v1049
    %1178 = vst [vmem:[#allocation2 + $0x390] sm:$0xff] %v1050
    %1179 = vst [vmem:[#allocation2 + $0x398] sm:$0xff] %v1051
    %1180 = vst [vmem:[#allocation2 + $0x3a0] sm:$0xff] %v1052
    %1181 = vst [vmem:[#allocation2 + $0x3a8] sm:$0xff] %v1053
    %1182 = vst [vmem:[#allocation2 + $0x3b0] sm:$0xff] %v1054
    %1183 = vst [vmem:[#allocation2 + $0x3b8] sm:$0xff] %v1055
    %1184 = vst [vmem:[#allocation2 + $0x3c0] sm:$0xff] %v1056
    %1185 = vst [vmem:[#allocation2 + $0x3c8] sm:$0xff] %v1057
    %1186 = vst [vmem:[#allocation2 + $0x3d0] sm:$0xff] %v1058
    %1187 = vst [vmem:[#allocation2 + $0x3d8] sm:$0xff] %v1059
    %1188 = vst [vmem:[#allocation2 + $0x3e0] sm:$0xff] %v1060
    %1189 = vst [vmem:[#allocation2 + $0x3e8] sm:$0xff] %v1061
    %1190 = vst [vmem:[#allocation2 + $0x3f0] sm:$0xff] %v1062
    %1191 = vst [vmem:[#allocation2 + $0x3f8] sm:$0xff] %v1063
    %v1192 = vld [vmem:[%s1] sm:$0x1]
    %v1193 = vld [vmem:[%s1 + $0x1] sm:$0x1]
    %v1194 = vld [vmem:[%s4] sm:$0x1]
    %v1195 = vld [vmem:[%s4 + $0x1] sm:$0x1]
    %v1196 = vlaneseq
    %v1197 = vand.u32 %v1196, 127
    %v1198 = vld [vmem:[#allocation3] sm:$0x1]
    %v1199 = vld [vmem:[#allocation3 + $0x1] sm:$0x1]
    loop: start=0, step=1, limit=16
    $region26: #{tpu_custom_call.1} parent=1 // loop_pre_header
      _
    $region27: #{tpu_custom_call.1} parent=1 // loop_header
      %s1201 = sphi 0, %s1205
      %p1202 = scmp.ge.s32.totalorder %s1201, 16
      %v1206 = vphi %v1198, %v1377
      %v1207 = vphi %v1199, %v1378
      %v1208 = vphi 0.0, %v1361
    $region28: #{tpu_custom_call.1} parent=1 // loop_header_branch
      %1204 = sbr.rel (%p1202) target = $region32
    $region29: #{tpu_custom_call.1} parent=1 // loop_body
      %s1209 = smul.u32 %s1201, 8
      %s1210 = scalar_lea.vmem [#allocation2], %s1209
      %v1211 = vld [vmem:[%s1210] sm:$0xff]
      %v1212 = vstv %s1209
      %vm1213 = vcmp.eq.s32.totalorder %v1197, %v1212
      %v1214 = vsel %vm1213, %v1206, %v1208
      %v1215 = vmul.f32 %v1206, %v1192
      %v1216 = vmul.f32 %v1207, %v1193
      %v1217 = vadd.f32 %v1215, %v1216
      %v1218 = vadd.f32 %v1217, %v1211
      %v1219 = vmax.f32 %v1218, 0.0
      %v1220 = vmul.f32 %v1219, %v1194
      %vm1221 = vcmask 1040384
      %v1222 = vsel %vm1221, %v1220, 0.0
      %1223 = vadd.xlane.f32.xlu0 %v1222
      %v1224 = vpop.xlane.xlu0 %1223
      %v1225 = vmul.f32 %v1219, %v1195
      %v1226 = vsel %vm1221, %v1225, 0.0
      %1227 = vadd.xlane.f32.xlu0 %v1226
      %v1228 = vpop.xlane.xlu0 %1227
      %v1229 = vadd.f32 %v1206, %v1224
      %v1230 = vadd.f32 %v1207, %v1228
      %s1231 = sadd.s32 %s1209, 1
      %v1232 = vstv %s1231
      %vm1233 = vcmp.eq.s32.totalorder %v1197, %v1232
      %v1234 = vsel %vm1233, %v1229, %v1214
      %v1235 = vmul.f32 %v1229, %v1192
      %v1236 = vmul.f32 %v1230, %v1193
      %v1237 = vadd.f32 %v1235, %v1236
      %v1239 = vrot.slane %v1211, 1
      %v1241 = vadd.f32 %v1237, %v1239
      %v1242 = vmax.f32 %v1241, 0.0
      %v1243 = vmul.f32 %v1242, %v1194
      %v1244 = vsel %vm1221, %v1243, 0.0
      %1245 = vadd.xlane.f32.xlu0 %v1244
      %v1246 = vpop.xlane.xlu0 %1245
      %v1247 = vmul.f32 %v1242, %v1195
      %v1248 = vsel %vm1221, %v1247, 0.0
      %1249 = vadd.xlane.f32.xlu0 %v1248
      %v1250 = vpop.xlane.xlu0 %1249
      %v1251 = vadd.f32 %v1229, %v1246
      %v1252 = vadd.f32 %v1230, %v1250
      %s1253 = sadd.s32 %s1209, 2
      %v1254 = vstv %s1253
      %vm1255 = vcmp.eq.s32.totalorder %v1197, %v1254
      %v1256 = vsel %vm1255, %v1251, %v1234
      %v1257 = vmul.f32 %v1251, %v1192
      %v1258 = vmul.f32 %v1252, %v1193
      %v1259 = vadd.f32 %v1257, %v1258
      %v1260 = vrot.slane %v1211, 2
      %v1262 = vadd.f32 %v1259, %v1260
      %v1263 = vmax.f32 %v1262, 0.0
      %v1264 = vmul.f32 %v1263, %v1194
      %v1265 = vsel %vm1221, %v1264, 0.0
      %1266 = vadd.xlane.f32.xlu0 %v1265
      %v1267 = vpop.xlane.xlu0 %1266
      %v1268 = vmul.f32 %v1263, %v1195
      %v1269 = vsel %vm1221, %v1268, 0.0
      %1270 = vadd.xlane.f32.xlu0 %v1269
      %v1271 = vpop.xlane.xlu0 %1270
      %v1272 = vadd.f32 %v1251, %v1267
      %v1273 = vadd.f32 %v1252, %v1271
      %s1274 = sadd.s32 %s1209, 3
      %v1275 = vstv %s1274
      %vm1276 = vcmp.eq.s32.totalorder %v1197, %v1275
      %v1277 = vsel %vm1276, %v1272, %v1256
      %v1278 = vmul.f32 %v1272, %v1192
      %v1279 = vmul.f32 %v1273, %v1193
      %v1280 = vadd.f32 %v1278, %v1279
      %v1281 = vrot.slane %v1211, 3
      %v1283 = vadd.f32 %v1280, %v1281
      %v1284 = vmax.f32 %v1283, 0.0
      %v1285 = vmul.f32 %v1284, %v1194
      %v1286 = vsel %vm1221, %v1285, 0.0
      %1287 = vadd.xlane.f32.xlu0 %v1286
      %v1288 = vpop.xlane.xlu0 %1287
      %v1289 = vmul.f32 %v1284, %v1195
      %v1290 = vsel %vm1221, %v1289, 0.0
      %1291 = vadd.xlane.f32.xlu0 %v1290
      %v1292 = vpop.xlane.xlu0 %1291
      %v1293 = vadd.f32 %v1272, %v1288
      %v1294 = vadd.f32 %v1273, %v1292
      %s1295 = sadd.s32 %s1209, 4
      %v1296 = vstv %s1295
      %vm1297 = vcmp.eq.s32.totalorder %v1197, %v1296
      %v1298 = vsel %vm1297, %v1293, %v1277
      %v1299 = vmul.f32 %v1293, %v1192
      %v1300 = vmul.f32 %v1294, %v1193
      %v1301 = vadd.f32 %v1299, %v1300
      %v1302 = vrot.slane %v1211, 4
      %v1304 = vadd.f32 %v1301, %v1302
      %v1305 = vmax.f32 %v1304, 0.0
      %v1306 = vmul.f32 %v1305, %v1194
      %v1307 = vsel %vm1221, %v1306, 0.0
      %1308 = vadd.xlane.f32.xlu0 %v1307
      %v1309 = vpop.xlane.xlu0 %1308
      %v1310 = vmul.f32 %v1305, %v1195
      %v1311 = vsel %vm1221, %v1310, 0.0
      %1312 = vadd.xlane.f32.xlu0 %v1311
      %v1313 = vpop.xlane.xlu0 %1312
      %v1314 = vadd.f32 %v1293, %v1309
      %v1315 = vadd.f32 %v1294, %v1313
      %s1316 = sadd.s32 %s1209, 5
      %v1317 = vstv %s1316
      %vm1318 = vcmp.eq.s32.totalorder %v1197, %v1317
      %v1319 = vsel %vm1318, %v1314, %v1298
      %v1320 = vmul.f32 %v1314, %v1192
      %v1321 = vmul.f32 %v1315, %v1193
      %v1322 = vadd.f32 %v1320, %v1321
      %v1323 = vrot.slane %v1211, 5
      %v1325 = vadd.f32 %v1322, %v1323
      %v1326 = vmax.f32 %v1325, 0.0
      %v1327 = vmul.f32 %v1326, %v1194
      %v1328 = vsel %vm1221, %v1327, 0.0
      %1329 = vadd.xlane.f32.xlu0 %v1328
      %v1330 = vpop.xlane.xlu0 %1329
      %v1331 = vmul.f32 %v1326, %v1195
      %v1332 = vsel %vm1221, %v1331, 0.0
      %1333 = vadd.xlane.f32.xlu0 %v1332
      %v1334 = vpop.xlane.xlu0 %1333
      %v1335 = vadd.f32 %v1314, %v1330
      %v1336 = vadd.f32 %v1315, %v1334
      %s1337 = sadd.s32 %s1209, 6
      %v1338 = vstv %s1337
      %vm1339 = vcmp.eq.s32.totalorder %v1197, %v1338
      %v1340 = vsel %vm1339, %v1335, %v1319
      %v1341 = vmul.f32 %v1335, %v1192
      %v1342 = vmul.f32 %v1336, %v1193
      %v1343 = vadd.f32 %v1341, %v1342
      %v1344 = vrot.slane %v1211, 6
      %v1346 = vadd.f32 %v1343, %v1344
      %v1347 = vmax.f32 %v1346, 0.0
      %v1348 = vmul.f32 %v1347, %v1194
      %v1349 = vsel %vm1221, %v1348, 0.0
      %1350 = vadd.xlane.f32.xlu0 %v1349
      %v1351 = vpop.xlane.xlu0 %1350
      %v1352 = vmul.f32 %v1347, %v1195
      %v1353 = vsel %vm1221, %v1352, 0.0
      %1354 = vadd.xlane.f32.xlu0 %v1353
      %v1355 = vpop.xlane.xlu0 %1354
      %v1356 = vadd.f32 %v1335, %v1351
      %v1357 = vadd.f32 %v1336, %v1355
      %s1358 = sadd.s32 %s1209, 7
      %v1359 = vstv %s1358
      %vm1360 = vcmp.eq.s32.totalorder %v1197, %v1359
      %v1361 = vsel %vm1360, %v1356, %v1340
      %v1362 = vmul.f32 %v1356, %v1192
      %v1363 = vmul.f32 %v1357, %v1193
      %v1364 = vadd.f32 %v1362, %v1363
      %v1365 = vrot.slane %v1211, 7
      %v1367 = vadd.f32 %v1364, %v1365
      %v1368 = vmax.f32 %v1367, 0.0
      %v1369 = vmul.f32 %v1368, %v1194
      %v1370 = vsel %vm1221, %v1369, 0.0
      %1371 = vadd.xlane.f32.xlu0 %v1370
      %v1372 = vpop.xlane.xlu0 %1371
      %v1373 = vmul.f32 %v1368, %v1195
      %v1374 = vsel %vm1221, %v1373, 0.0
      %1375 = vadd.xlane.f32.xlu0 %v1374
      %v1376 = vpop.xlane.xlu0 %1375
      %v1377 = vadd.f32 %v1356, %v1372
      %v1378 = vadd.f32 %v1357, %v1376
    $region30: #{tpu_custom_call.1} parent=1 // loop_footer
      %s1205 = sadd.s32 1, %s1201
    $region31: #{tpu_custom_call.1} parent=1 // loop_footer_branch
      %1200 = sbr.rel target = $region27
    $region32: #{tpu_custom_call.1} parent=1 // loop_exit
      _
    %1379 = vst [vmem:[#allocation4] sm:$0x1] %v1208
    loop: start=0, step=1, limit=16
    $region33: #{tpu_custom_call.1} parent=1 // loop_pre_header
      _
    $region34: #{tpu_custom_call.1} parent=1 // loop_header
      %s1381 = sphi 0, %s1385
      %p1382 = scmp.ge.s32.totalorder %s1381, 16
      %v1386 = vphi %v1206, %v1558
      %v1387 = vphi %v1207, %v1559
      %v1388 = vphi 0.0, %v1542
    $region35: #{tpu_custom_call.1} parent=1 // loop_header_branch
      %1384 = sbr.rel (%p1382) target = $region39
    $region36: #{tpu_custom_call.1} parent=1 // loop_body
      %s1389 = smul.u32 %s1381, 8
      %s1390 = sadd.s32 %s1389, 128
      %s1391 = scalar_lea.vmem [#allocation2], %s1390
      %v1392 = vld [vmem:[%s1391] sm:$0xff]
      %v1393 = vstv %s1389
      %vm1394 = vcmp.eq.s32.totalorder %v1197, %v1393
      %v1395 = vsel %vm1394, %v1386, %v1388
      %v1396 = vmul.f32 %v1386, %v1192
      %v1397 = vmul.f32 %v1387, %v1193
      %v1398 = vadd.f32 %v1396, %v1397
      %v1399 = vadd.f32 %v1398, %v1392
      %v1400 = vmax.f32 %v1399, 0.0
      %v1401 = vmul.f32 %v1400, %v1194
      %vm1402 = vcmask 1040384
      %v1403 = vsel %vm1402, %v1401, 0.0
      %1404 = vadd.xlane.f32.xlu0 %v1403
      %v1405 = vpop.xlane.xlu0 %1404
      %v1406 = vmul.f32 %v1400, %v1195
      %v1407 = vsel %vm1402, %v1406, 0.0
      %1408 = vadd.xlane.f32.xlu0 %v1407
      %v1409 = vpop.xlane.xlu0 %1408
      %v1410 = vadd.f32 %v1386, %v1405
      %v1411 = vadd.f32 %v1387, %v1409
      %s1412 = sadd.s32 %s1389, 1
      %v1413 = vstv %s1412
      %vm1414 = vcmp.eq.s32.totalorder %v1197, %v1413
      %v1415 = vsel %vm1414, %v1410, %v1395
      %v1416 = vmul.f32 %v1410, %v1192
      %v1417 = vmul.f32 %v1411, %v1193
      %v1418 = vadd.f32 %v1416, %v1417
      %v1420 = vrot.slane %v1392, 1
      %v1422 = vadd.f32 %v1418, %v1420
      %v1423 = vmax.f32 %v1422, 0.0
      %v1424 = vmul.f32 %v1423, %v1194
      %v1425 = vsel %vm1402, %v1424, 0.0
      %1426 = vadd.xlane.f32.xlu0 %v1425
      %v1427 = vpop.xlane.xlu0 %1426
      %v1428 = vmul.f32 %v1423, %v1195
      %v1429 = vsel %vm1402, %v1428, 0.0
      %1430 = vadd.xlane.f32.xlu0 %v1429
      %v1431 = vpop.xlane.xlu0 %1430
      %v1432 = vadd.f32 %v1410, %v1427
      %v1433 = vadd.f32 %v1411, %v1431
      %s1434 = sadd.s32 %s1389, 2
      %v1435 = vstv %s1434
      %vm1436 = vcmp.eq.s32.totalorder %v1197, %v1435
      %v1437 = vsel %vm1436, %v1432, %v1415
      %v1438 = vmul.f32 %v1432, %v1192
      %v1439 = vmul.f32 %v1433, %v1193
      %v1440 = vadd.f32 %v1438, %v1439
      %v1441 = vrot.slane %v1392, 2
      %v1443 = vadd.f32 %v1440, %v1441
      %v1444 = vmax.f32 %v1443, 0.0
      %v1445 = vmul.f32 %v1444, %v1194
      %v1446 = vsel %vm1402, %v1445, 0.0
      %1447 = vadd.xlane.f32.xlu0 %v1446
      %v1448 = vpop.xlane.xlu0 %1447
      %v1449 = vmul.f32 %v1444, %v1195
      %v1450 = vsel %vm1402, %v1449, 0.0
      %1451 = vadd.xlane.f32.xlu0 %v1450
      %v1452 = vpop.xlane.xlu0 %1451
      %v1453 = vadd.f32 %v1432, %v1448
      %v1454 = vadd.f32 %v1433, %v1452
      %s1455 = sadd.s32 %s1389, 3
      %v1456 = vstv %s1455
      %vm1457 = vcmp.eq.s32.totalorder %v1197, %v1456
      %v1458 = vsel %vm1457, %v1453, %v1437
      %v1459 = vmul.f32 %v1453, %v1192
      %v1460 = vmul.f32 %v1454, %v1193
      %v1461 = vadd.f32 %v1459, %v1460
      %v1462 = vrot.slane %v1392, 3
      %v1464 = vadd.f32 %v1461, %v1462
      %v1465 = vmax.f32 %v1464, 0.0
      %v1466 = vmul.f32 %v1465, %v1194
      %v1467 = vsel %vm1402, %v1466, 0.0
      %1468 = vadd.xlane.f32.xlu0 %v1467
      %v1469 = vpop.xlane.xlu0 %1468
      %v1470 = vmul.f32 %v1465, %v1195
      %v1471 = vsel %vm1402, %v1470, 0.0
      %1472 = vadd.xlane.f32.xlu0 %v1471
      %v1473 = vpop.xlane.xlu0 %1472
      %v1474 = vadd.f32 %v1453, %v1469
      %v1475 = vadd.f32 %v1454, %v1473
      %s1476 = sadd.s32 %s1389, 4
      %v1477 = vstv %s1476
      %vm1478 = vcmp.eq.s32.totalorder %v1197, %v1477
      %v1479 = vsel %vm1478, %v1474, %v1458
      %v1480 = vmul.f32 %v1474, %v1192
      %v1481 = vmul.f32 %v1475, %v1193
      %v1482 = vadd.f32 %v1480, %v1481
      %v1483 = vrot.slane %v1392, 4
      %v1485 = vadd.f32 %v1482, %v1483
      %v1486 = vmax.f32 %v1485, 0.0
      %v1487 = vmul.f32 %v1486, %v1194
      %v1488 = vsel %vm1402, %v1487, 0.0
      %1489 = vadd.xlane.f32.xlu0 %v1488
      %v1490 = vpop.xlane.xlu0 %1489
      %v1491 = vmul.f32 %v1486, %v1195
      %v1492 = vsel %vm1402, %v1491, 0.0
      %1493 = vadd.xlane.f32.xlu0 %v1492
      %v1494 = vpop.xlane.xlu0 %1493
      %v1495 = vadd.f32 %v1474, %v1490
      %v1496 = vadd.f32 %v1475, %v1494
      %s1497 = sadd.s32 %s1389, 5
      %v1498 = vstv %s1497
      %vm1499 = vcmp.eq.s32.totalorder %v1197, %v1498
      %v1500 = vsel %vm1499, %v1495, %v1479
      %v1501 = vmul.f32 %v1495, %v1192
      %v1502 = vmul.f32 %v1496, %v1193
      %v1503 = vadd.f32 %v1501, %v1502
      %v1504 = vrot.slane %v1392, 5
      %v1506 = vadd.f32 %v1503, %v1504
      %v1507 = vmax.f32 %v1506, 0.0
      %v1508 = vmul.f32 %v1507, %v1194
      %v1509 = vsel %vm1402, %v1508, 0.0
      %1510 = vadd.xlane.f32.xlu0 %v1509
      %v1511 = vpop.xlane.xlu0 %1510
      %v1512 = vmul.f32 %v1507, %v1195
      %v1513 = vsel %vm1402, %v1512, 0.0
      %1514 = vadd.xlane.f32.xlu0 %v1513
      %v1515 = vpop.xlane.xlu0 %1514
      %v1516 = vadd.f32 %v1495, %v1511
      %v1517 = vadd.f32 %v1496, %v1515
      %s1518 = sadd.s32 %s1389, 6
      %v1519 = vstv %s1518
      %vm1520 = vcmp.eq.s32.totalorder %v1197, %v1519
      %v1521 = vsel %vm1520, %v1516, %v1500
      %v1522 = vmul.f32 %v1516, %v1192
      %v1523 = vmul.f32 %v1517, %v1193
      %v1524 = vadd.f32 %v1522, %v1523
      %v1525 = vrot.slane %v1392, 6
      %v1527 = vadd.f32 %v1524, %v1525
      %v1528 = vmax.f32 %v1527, 0.0
      %v1529 = vmul.f32 %v1528, %v1194
      %v1530 = vsel %vm1402, %v1529, 0.0
      %1531 = vadd.xlane.f32.xlu0 %v1530
      %v1532 = vpop.xlane.xlu0 %1531
      %v1533 = vmul.f32 %v1528, %v1195
      %v1534 = vsel %vm1402, %v1533, 0.0
      %1535 = vadd.xlane.f32.xlu0 %v1534
      %v1536 = vpop.xlane.xlu0 %1535
      %v1537 = vadd.f32 %v1516, %v1532
      %v1538 = vadd.f32 %v1517, %v1536
      %s1539 = sadd.s32 %s1389, 7
      %v1540 = vstv %s1539
      %vm1541 = vcmp.eq.s32.totalorder %v1197, %v1540
      %v1542 = vsel %vm1541, %v1537, %v1521
      %v1543 = vmul.f32 %v1537, %v1192
      %v1544 = vmul.f32 %v1538, %v1193
      %v1545 = vadd.f32 %v1543, %v1544
      %v1546 = vrot.slane %v1392, 7
      %v1548 = vadd.f32 %v1545, %v1546
      %v1549 = vmax.f32 %v1548, 0.0
      %v1550 = vmul.f32 %v1549, %v1194
      %v1551 = vsel %vm1402, %v1550, 0.0
      %1552 = vadd.xlane.f32.xlu0 %v1551
      %v1553 = vpop.xlane.xlu0 %1552
      %v1554 = vmul.f32 %v1549, %v1195
      %v1555 = vsel %vm1402, %v1554, 0.0
      %1556 = vadd.xlane.f32.xlu0 %v1555
      %v1557 = vpop.xlane.xlu0 %1556
      %v1558 = vadd.f32 %v1537, %v1553
      %v1559 = vadd.f32 %v1538, %v1557
    $region37: #{tpu_custom_call.1} parent=1 // loop_footer
      %s1385 = sadd.s32 1, %s1381
    $region38: #{tpu_custom_call.1} parent=1 // loop_footer_branch
      %1380 = sbr.rel target = $region34
    $region39: #{tpu_custom_call.1} parent=1 // loop_exit
      _
    %1560 = vst [vmem:[#allocation4 + $0x1] sm:$0x1] %v1388
    loop: start=0, step=1, limit=16
    $region40: #{tpu_custom_call.1} parent=1 // loop_pre_header
      _
    $region41: #{tpu_custom_call.1} parent=1 // loop_header
      %s1562 = sphi 0, %s1566
      %p1563 = scmp.ge.s32.totalorder %s1562, 16
      %v1567 = vphi %v1386, %v1739
      %v1568 = vphi %v1387, %v1740
      %v1569 = vphi 0.0, %v1723
    $region42: #{tpu_custom_call.1} parent=1 // loop_header_branch
      %1565 = sbr.rel (%p1563) target = $region46
    $region43: #{tpu_custom_call.1} parent=1 // loop_body
      %s1570 = smul.u32 %s1562, 8
      %s1571 = sadd.s32 %s1570, 256
      %s1572 = scalar_lea.vmem [#allocation2], %s1571
      %v1573 = vld [vmem:[%s1572] sm:$0xff]
      %v1574 = vstv %s1570
      %vm1575 = vcmp.eq.s32.totalorder %v1197, %v1574
      %v1576 = vsel %vm1575, %v1567, %v1569
      %v1577 = vmul.f32 %v1567, %v1192
      %v1578 = vmul.f32 %v1568, %v1193
      %v1579 = vadd.f32 %v1577, %v1578
      %v1580 = vadd.f32 %v1579, %v1573
      %v1581 = vmax.f32 %v1580, 0.0
      %v1582 = vmul.f32 %v1581, %v1194
      %vm1583 = vcmask 1040384
      %v1584 = vsel %vm1583, %v1582, 0.0
      %1585 = vadd.xlane.f32.xlu0 %v1584
      %v1586 = vpop.xlane.xlu0 %1585
      %v1587 = vmul.f32 %v1581, %v1195
      %v1588 = vsel %vm1583, %v1587, 0.0
      %1589 = vadd.xlane.f32.xlu0 %v1588
      %v1590 = vpop.xlane.xlu0 %1589
      %v1591 = vadd.f32 %v1567, %v1586
      %v1592 = vadd.f32 %v1568, %v1590
      %s1593 = sadd.s32 %s1570, 1
      %v1594 = vstv %s1593
      %vm1595 = vcmp.eq.s32.totalorder %v1197, %v1594
      %v1596 = vsel %vm1595, %v1591, %v1576
      %v1597 = vmul.f32 %v1591, %v1192
      %v1598 = vmul.f32 %v1592, %v1193
      %v1599 = vadd.f32 %v1597, %v1598
      %v1601 = vrot.slane %v1573, 1
      %v1603 = vadd.f32 %v1599, %v1601
      %v1604 = vmax.f32 %v1603, 0.0
      %v1605 = vmul.f32 %v1604, %v1194
      %v1606 = vsel %vm1583, %v1605, 0.0
      %1607 = vadd.xlane.f32.xlu0 %v1606
      %v1608 = vpop.xlane.xlu0 %1607
      %v1609 = vmul.f32 %v1604, %v1195
      %v1610 = vsel %vm1583, %v1609, 0.0
      %1611 = vadd.xlane.f32.xlu0 %v1610
      %v1612 = vpop.xlane.xlu0 %1611
      %v1613 = vadd.f32 %v1591, %v1608
      %v1614 = vadd.f32 %v1592, %v1612
      %s1615 = sadd.s32 %s1570, 2
      %v1616 = vstv %s1615
      %vm1617 = vcmp.eq.s32.totalorder %v1197, %v1616
      %v1618 = vsel %vm1617, %v1613, %v1596
      %v1619 = vmul.f32 %v1613, %v1192
      %v1620 = vmul.f32 %v1614, %v1193
      %v1621 = vadd.f32 %v1619, %v1620
      %v1622 = vrot.slane %v1573, 2
      %v1624 = vadd.f32 %v1621, %v1622
      %v1625 = vmax.f32 %v1624, 0.0
      %v1626 = vmul.f32 %v1625, %v1194
      %v1627 = vsel %vm1583, %v1626, 0.0
      %1628 = vadd.xlane.f32.xlu0 %v1627
      %v1629 = vpop.xlane.xlu0 %1628
      %v1630 = vmul.f32 %v1625, %v1195
      %v1631 = vsel %vm1583, %v1630, 0.0
      %1632 = vadd.xlane.f32.xlu0 %v1631
      %v1633 = vpop.xlane.xlu0 %1632
      %v1634 = vadd.f32 %v1613, %v1629
      %v1635 = vadd.f32 %v1614, %v1633
      %s1636 = sadd.s32 %s1570, 3
      %v1637 = vstv %s1636
      %vm1638 = vcmp.eq.s32.totalorder %v1197, %v1637
      %v1639 = vsel %vm1638, %v1634, %v1618
      %v1640 = vmul.f32 %v1634, %v1192
      %v1641 = vmul.f32 %v1635, %v1193
      %v1642 = vadd.f32 %v1640, %v1641
      %v1643 = vrot.slane %v1573, 3
      %v1645 = vadd.f32 %v1642, %v1643
      %v1646 = vmax.f32 %v1645, 0.0
      %v1647 = vmul.f32 %v1646, %v1194
      %v1648 = vsel %vm1583, %v1647, 0.0
      %1649 = vadd.xlane.f32.xlu0 %v1648
      %v1650 = vpop.xlane.xlu0 %1649
      %v1651 = vmul.f32 %v1646, %v1195
      %v1652 = vsel %vm1583, %v1651, 0.0
      %1653 = vadd.xlane.f32.xlu0 %v1652
      %v1654 = vpop.xlane.xlu0 %1653
      %v1655 = vadd.f32 %v1634, %v1650
      %v1656 = vadd.f32 %v1635, %v1654
      %s1657 = sadd.s32 %s1570, 4
      %v1658 = vstv %s1657
      %vm1659 = vcmp.eq.s32.totalorder %v1197, %v1658
      %v1660 = vsel %vm1659, %v1655, %v1639
      %v1661 = vmul.f32 %v1655, %v1192
      %v1662 = vmul.f32 %v1656, %v1193
      %v1663 = vadd.f32 %v1661, %v1662
      %v1664 = vrot.slane %v1573, 4
      %v1666 = vadd.f32 %v1663, %v1664
      %v1667 = vmax.f32 %v1666, 0.0
      %v1668 = vmul.f32 %v1667, %v1194
      %v1669 = vsel %vm1583, %v1668, 0.0
      %1670 = vadd.xlane.f32.xlu0 %v1669
      %v1671 = vpop.xlane.xlu0 %1670
      %v1672 = vmul.f32 %v1667, %v1195
      %v1673 = vsel %vm1583, %v1672, 0.0
      %1674 = vadd.xlane.f32.xlu0 %v1673
      %v1675 = vpop.xlane.xlu0 %1674
      %v1676 = vadd.f32 %v1655, %v1671
      %v1677 = vadd.f32 %v1656, %v1675
      %s1678 = sadd.s32 %s1570, 5
      %v1679 = vstv %s1678
      %vm1680 = vcmp.eq.s32.totalorder %v1197, %v1679
      %v1681 = vsel %vm1680, %v1676, %v1660
      %v1682 = vmul.f32 %v1676, %v1192
      %v1683 = vmul.f32 %v1677, %v1193
      %v1684 = vadd.f32 %v1682, %v1683
      %v1685 = vrot.slane %v1573, 5
      %v1687 = vadd.f32 %v1684, %v1685
      %v1688 = vmax.f32 %v1687, 0.0
      %v1689 = vmul.f32 %v1688, %v1194
      %v1690 = vsel %vm1583, %v1689, 0.0
      %1691 = vadd.xlane.f32.xlu0 %v1690
      %v1692 = vpop.xlane.xlu0 %1691
      %v1693 = vmul.f32 %v1688, %v1195
      %v1694 = vsel %vm1583, %v1693, 0.0
      %1695 = vadd.xlane.f32.xlu0 %v1694
      %v1696 = vpop.xlane.xlu0 %1695
      %v1697 = vadd.f32 %v1676, %v1692
      %v1698 = vadd.f32 %v1677, %v1696
      %s1699 = sadd.s32 %s1570, 6
      %v1700 = vstv %s1699
      %vm1701 = vcmp.eq.s32.totalorder %v1197, %v1700
      %v1702 = vsel %vm1701, %v1697, %v1681
      %v1703 = vmul.f32 %v1697, %v1192
      %v1704 = vmul.f32 %v1698, %v1193
      %v1705 = vadd.f32 %v1703, %v1704
      %v1706 = vrot.slane %v1573, 6
      %v1708 = vadd.f32 %v1705, %v1706
      %v1709 = vmax.f32 %v1708, 0.0
      %v1710 = vmul.f32 %v1709, %v1194
      %v1711 = vsel %vm1583, %v1710, 0.0
      %1712 = vadd.xlane.f32.xlu0 %v1711
      %v1713 = vpop.xlane.xlu0 %1712
      %v1714 = vmul.f32 %v1709, %v1195
      %v1715 = vsel %vm1583, %v1714, 0.0
      %1716 = vadd.xlane.f32.xlu0 %v1715
      %v1717 = vpop.xlane.xlu0 %1716
      %v1718 = vadd.f32 %v1697, %v1713
      %v1719 = vadd.f32 %v1698, %v1717
      %s1720 = sadd.s32 %s1570, 7
      %v1721 = vstv %s1720
      %vm1722 = vcmp.eq.s32.totalorder %v1197, %v1721
      %v1723 = vsel %vm1722, %v1718, %v1702
      %v1724 = vmul.f32 %v1718, %v1192
      %v1725 = vmul.f32 %v1719, %v1193
      %v1726 = vadd.f32 %v1724, %v1725
      %v1727 = vrot.slane %v1573, 7
      %v1729 = vadd.f32 %v1726, %v1727
      %v1730 = vmax.f32 %v1729, 0.0
      %v1731 = vmul.f32 %v1730, %v1194
      %v1732 = vsel %vm1583, %v1731, 0.0
      %1733 = vadd.xlane.f32.xlu0 %v1732
      %v1734 = vpop.xlane.xlu0 %1733
      %v1735 = vmul.f32 %v1730, %v1195
      %v1736 = vsel %vm1583, %v1735, 0.0
      %1737 = vadd.xlane.f32.xlu0 %v1736
      %v1738 = vpop.xlane.xlu0 %1737
      %v1739 = vadd.f32 %v1718, %v1734
      %v1740 = vadd.f32 %v1719, %v1738
    $region44: #{tpu_custom_call.1} parent=1 // loop_footer
      %s1566 = sadd.s32 1, %s1562
    $region45: #{tpu_custom_call.1} parent=1 // loop_footer_branch
      %1561 = sbr.rel target = $region41
    $region46: #{tpu_custom_call.1} parent=1 // loop_exit
      _
    %1741 = vst [vmem:[#allocation4 + $0x2] sm:$0x1] %v1569
    loop: start=0, step=1, limit=16
    $region47: #{tpu_custom_call.1} parent=1 // loop_pre_header
      _
    $region48: #{tpu_custom_call.1} parent=1 // loop_header
      %s1743 = sphi 0, %s1747
      %p1744 = scmp.ge.s32.totalorder %s1743, 16
      %v1748 = vphi %v1567, %v1920
      %v1749 = vphi %v1568, %v1921
      %v1750 = vphi 0.0, %v1904
    $region49: #{tpu_custom_call.1} parent=1 // loop_header_branch
      %1746 = sbr.rel (%p1744) target = $region53
    $region50: #{tpu_custom_call.1} parent=1 // loop_body
      %s1751 = smul.u32 %s1743, 8
      %s1752 = sadd.s32 %s1751, 384
      %s1753 = scalar_lea.vmem [#allocation2], %s1752
      %v1754 = vld [vmem:[%s1753] sm:$0xff]
      %v1755 = vstv %s1751
      %vm1756 = vcmp.eq.s32.totalorder %v1197, %v1755
      %v1757 = vsel %vm1756, %v1748, %v1750
      %v1758 = vmul.f32 %v1748, %v1192
      %v1759 = vmul.f32 %v1749, %v1193
      %v1760 = vadd.f32 %v1758, %v1759
      %v1761 = vadd.f32 %v1760, %v1754
      %v1762 = vmax.f32 %v1761, 0.0
      %v1763 = vmul.f32 %v1762, %v1194
      %vm1764 = vcmask 1040384
      %v1765 = vsel %vm1764, %v1763, 0.0
      %1766 = vadd.xlane.f32.xlu0 %v1765
      %v1767 = vpop.xlane.xlu0 %1766
      %v1768 = vmul.f32 %v1762, %v1195
      %v1769 = vsel %vm1764, %v1768, 0.0
      %1770 = vadd.xlane.f32.xlu0 %v1769
      %v1771 = vpop.xlane.xlu0 %1770
      %v1772 = vadd.f32 %v1748, %v1767
      %v1773 = vadd.f32 %v1749, %v1771
      %s1774 = sadd.s32 %s1751, 1
      %v1775 = vstv %s1774
      %vm1776 = vcmp.eq.s32.totalorder %v1197, %v1775
      %v1777 = vsel %vm1776, %v1772, %v1757
      %v1778 = vmul.f32 %v1772, %v1192
      %v1779 = vmul.f32 %v1773, %v1193
      %v1780 = vadd.f32 %v1778, %v1779
      %v1782 = vrot.slane %v1754, 1
      %v1784 = vadd.f32 %v1780, %v1782
      %v1785 = vmax.f32 %v1784, 0.0
      %v1786 = vmul.f32 %v1785, %v1194
      %v1787 = vsel %vm1764, %v1786, 0.0
      %1788 = vadd.xlane.f32.xlu0 %v1787
      %v1789 = vpop.xlane.xlu0 %1788
      %v1790 = vmul.f32 %v1785, %v1195
      %v1791 = vsel %vm1764, %v1790, 0.0
      %1792 = vadd.xlane.f32.xlu0 %v1791
      %v1793 = vpop.xlane.xlu0 %1792
      %v1794 = vadd.f32 %v1772, %v1789
      %v1795 = vadd.f32 %v1773, %v1793
      %s1796 = sadd.s32 %s1751, 2
      %v1797 = vstv %s1796
      %vm1798 = vcmp.eq.s32.totalorder %v1197, %v1797
      %v1799 = vsel %vm1798, %v1794, %v1777
      %v1800 = vmul.f32 %v1794, %v1192
      %v1801 = vmul.f32 %v1795, %v1193
      %v1802 = vadd.f32 %v1800, %v1801
      %v1803 = vrot.slane %v1754, 2
      %v1805 = vadd.f32 %v1802, %v1803
      %v1806 = vmax.f32 %v1805, 0.0
      %v1807 = vmul.f32 %v1806, %v1194
      %v1808 = vsel %vm1764, %v1807, 0.0
      %1809 = vadd.xlane.f32.xlu0 %v1808
      %v1810 = vpop.xlane.xlu0 %1809
      %v1811 = vmul.f32 %v1806, %v1195
      %v1812 = vsel %vm1764, %v1811, 0.0
      %1813 = vadd.xlane.f32.xlu0 %v1812
      %v1814 = vpop.xlane.xlu0 %1813
      %v1815 = vadd.f32 %v1794, %v1810
      %v1816 = vadd.f32 %v1795, %v1814
      %s1817 = sadd.s32 %s1751, 3
      %v1818 = vstv %s1817
      %vm1819 = vcmp.eq.s32.totalorder %v1197, %v1818
      %v1820 = vsel %vm1819, %v1815, %v1799
      %v1821 = vmul.f32 %v1815, %v1192
      %v1822 = vmul.f32 %v1816, %v1193
      %v1823 = vadd.f32 %v1821, %v1822
      %v1824 = vrot.slane %v1754, 3
      %v1826 = vadd.f32 %v1823, %v1824
      %v1827 = vmax.f32 %v1826, 0.0
      %v1828 = vmul.f32 %v1827, %v1194
      %v1829 = vsel %vm1764, %v1828, 0.0
      %1830 = vadd.xlane.f32.xlu0 %v1829
      %v1831 = vpop.xlane.xlu0 %1830
      %v1832 = vmul.f32 %v1827, %v1195
      %v1833 = vsel %vm1764, %v1832, 0.0
      %1834 = vadd.xlane.f32.xlu0 %v1833
      %v1835 = vpop.xlane.xlu0 %1834
      %v1836 = vadd.f32 %v1815, %v1831
      %v1837 = vadd.f32 %v1816, %v1835
      %s1838 = sadd.s32 %s1751, 4
      %v1839 = vstv %s1838
      %vm1840 = vcmp.eq.s32.totalorder %v1197, %v1839
      %v1841 = vsel %vm1840, %v1836, %v1820
      %v1842 = vmul.f32 %v1836, %v1192
      %v1843 = vmul.f32 %v1837, %v1193
      %v1844 = vadd.f32 %v1842, %v1843
      %v1845 = vrot.slane %v1754, 4
      %v1847 = vadd.f32 %v1844, %v1845
      %v1848 = vmax.f32 %v1847, 0.0
      %v1849 = vmul.f32 %v1848, %v1194
      %v1850 = vsel %vm1764, %v1849, 0.0
      %1851 = vadd.xlane.f32.xlu0 %v1850
      %v1852 = vpop.xlane.xlu0 %1851
      %v1853 = vmul.f32 %v1848, %v1195
      %v1854 = vsel %vm1764, %v1853, 0.0
      %1855 = vadd.xlane.f32.xlu0 %v1854
      %v1856 = vpop.xlane.xlu0 %1855
      %v1857 = vadd.f32 %v1836, %v1852
      %v1858 = vadd.f32 %v1837, %v1856
      %s1859 = sadd.s32 %s1751, 5
      %v1860 = vstv %s1859
      %vm1861 = vcmp.eq.s32.totalorder %v1197, %v1860
      %v1862 = vsel %vm1861, %v1857, %v1841
      %v1863 = vmul.f32 %v1857, %v1192
      %v1864 = vmul.f32 %v1858, %v1193
      %v1865 = vadd.f32 %v1863, %v1864
      %v1866 = vrot.slane %v1754, 5
      %v1868 = vadd.f32 %v1865, %v1866
      %v1869 = vmax.f32 %v1868, 0.0
      %v1870 = vmul.f32 %v1869, %v1194
      %v1871 = vsel %vm1764, %v1870, 0.0
      %1872 = vadd.xlane.f32.xlu0 %v1871
      %v1873 = vpop.xlane.xlu0 %1872
      %v1874 = vmul.f32 %v1869, %v1195
      %v1875 = vsel %vm1764, %v1874, 0.0
      %1876 = vadd.xlane.f32.xlu0 %v1875
      %v1877 = vpop.xlane.xlu0 %1876
      %v1878 = vadd.f32 %v1857, %v1873
      %v1879 = vadd.f32 %v1858, %v1877
      %s1880 = sadd.s32 %s1751, 6
      %v1881 = vstv %s1880
      %vm1882 = vcmp.eq.s32.totalorder %v1197, %v1881
      %v1883 = vsel %vm1882, %v1878, %v1862
      %v1884 = vmul.f32 %v1878, %v1192
      %v1885 = vmul.f32 %v1879, %v1193
      %v1886 = vadd.f32 %v1884, %v1885
      %v1887 = vrot.slane %v1754, 6
      %v1889 = vadd.f32 %v1886, %v1887
      %v1890 = vmax.f32 %v1889, 0.0
      %v1891 = vmul.f32 %v1890, %v1194
      %v1892 = vsel %vm1764, %v1891, 0.0
      %1893 = vadd.xlane.f32.xlu0 %v1892
      %v1894 = vpop.xlane.xlu0 %1893
      %v1895 = vmul.f32 %v1890, %v1195
      %v1896 = vsel %vm1764, %v1895, 0.0
      %1897 = vadd.xlane.f32.xlu0 %v1896
      %v1898 = vpop.xlane.xlu0 %1897
      %v1899 = vadd.f32 %v1878, %v1894
      %v1900 = vadd.f32 %v1879, %v1898
      %s1901 = sadd.s32 %s1751, 7
      %v1902 = vstv %s1901
      %vm1903 = vcmp.eq.s32.totalorder %v1197, %v1902
      %v1904 = vsel %vm1903, %v1899, %v1883
      %v1905 = vmul.f32 %v1899, %v1192
      %v1906 = vmul.f32 %v1900, %v1193
      %v1907 = vadd.f32 %v1905, %v1906
      %v1908 = vrot.slane %v1754, 7
      %v1910 = vadd.f32 %v1907, %v1908
      %v1911 = vmax.f32 %v1910, 0.0
      %v1912 = vmul.f32 %v1911, %v1194
      %v1913 = vsel %vm1764, %v1912, 0.0
      %1914 = vadd.xlane.f32.xlu0 %v1913
      %v1915 = vpop.xlane.xlu0 %1914
      %v1916 = vmul.f32 %v1911, %v1195
      %v1917 = vsel %vm1764, %v1916, 0.0
      %1918 = vadd.xlane.f32.xlu0 %v1917
      %v1919 = vpop.xlane.xlu0 %1918
      %v1920 = vadd.f32 %v1899, %v1915
      %v1921 = vadd.f32 %v1900, %v1919
    $region51: #{tpu_custom_call.1} parent=1 // loop_footer
      %s1747 = sadd.s32 1, %s1743
    $region52: #{tpu_custom_call.1} parent=1 // loop_footer_branch
      %1742 = sbr.rel target = $region48
    $region53: #{tpu_custom_call.1} parent=1 // loop_exit
      _
    %1922 = vst [vmem:[#allocation4 + $0x3] sm:$0x1] %v1750
    loop: start=0, step=1, limit=16
    $region54: #{tpu_custom_call.1} parent=1 // loop_pre_header
      _
    $region55: #{tpu_custom_call.1} parent=1 // loop_header
      %s1924 = sphi 0, %s1928
      %p1925 = scmp.ge.s32.totalorder %s1924, 16
      %v1929 = vphi %v1748, %v2101
      %v1930 = vphi %v1749, %v2102
      %v1931 = vphi 0.0, %v2085
    $region56: #{tpu_custom_call.1} parent=1 // loop_header_branch
      %1927 = sbr.rel (%p1925) target = $region60
    $region57: #{tpu_custom_call.1} parent=1 // loop_body
      %s1932 = smul.u32 %s1924, 8
      %s1933 = sadd.s32 %s1932, 512
      %s1934 = scalar_lea.vmem [#allocation2], %s1933
      %v1935 = vld [vmem:[%s1934] sm:$0xff]
      %v1936 = vstv %s1932
      %vm1937 = vcmp.eq.s32.totalorder %v1197, %v1936
      %v1938 = vsel %vm1937, %v1929, %v1931
      %v1939 = vmul.f32 %v1929, %v1192
      %v1940 = vmul.f32 %v1930, %v1193
      %v1941 = vadd.f32 %v1939, %v1940
      %v1942 = vadd.f32 %v1941, %v1935
      %v1943 = vmax.f32 %v1942, 0.0
      %v1944 = vmul.f32 %v1943, %v1194
      %vm1945 = vcmask 1040384
      %v1946 = vsel %vm1945, %v1944, 0.0
      %1947 = vadd.xlane.f32.xlu0 %v1946
      %v1948 = vpop.xlane.xlu0 %1947
      %v1949 = vmul.f32 %v1943, %v1195
      %v1950 = vsel %vm1945, %v1949, 0.0
      %1951 = vadd.xlane.f32.xlu0 %v1950
      %v1952 = vpop.xlane.xlu0 %1951
      %v1953 = vadd.f32 %v1929, %v1948
      %v1954 = vadd.f32 %v1930, %v1952
      %s1955 = sadd.s32 %s1932, 1
      %v1956 = vstv %s1955
      %vm1957 = vcmp.eq.s32.totalorder %v1197, %v1956
      %v1958 = vsel %vm1957, %v1953, %v1938
      %v1959 = vmul.f32 %v1953, %v1192
      %v1960 = vmul.f32 %v1954, %v1193
      %v1961 = vadd.f32 %v1959, %v1960
      %v1963 = vrot.slane %v1935, 1
      %v1965 = vadd.f32 %v1961, %v1963
      %v1966 = vmax.f32 %v1965, 0.0
      %v1967 = vmul.f32 %v1966, %v1194
      %v1968 = vsel %vm1945, %v1967, 0.0
      %1969 = vadd.xlane.f32.xlu0 %v1968
      %v1970 = vpop.xlane.xlu0 %1969
      %v1971 = vmul.f32 %v1966, %v1195
      %v1972 = vsel %vm1945, %v1971, 0.0
      %1973 = vadd.xlane.f32.xlu0 %v1972
      %v1974 = vpop.xlane.xlu0 %1973
      %v1975 = vadd.f32 %v1953, %v1970
      %v1976 = vadd.f32 %v1954, %v1974
      %s1977 = sadd.s32 %s1932, 2
      %v1978 = vstv %s1977
      %vm1979 = vcmp.eq.s32.totalorder %v1197, %v1978
      %v1980 = vsel %vm1979, %v1975, %v1958
      %v1981 = vmul.f32 %v1975, %v1192
      %v1982 = vmul.f32 %v1976, %v1193
      %v1983 = vadd.f32 %v1981, %v1982
      %v1984 = vrot.slane %v1935, 2
      %v1986 = vadd.f32 %v1983, %v1984
      %v1987 = vmax.f32 %v1986, 0.0
      %v1988 = vmul.f32 %v1987, %v1194
      %v1989 = vsel %vm1945, %v1988, 0.0
      %1990 = vadd.xlane.f32.xlu0 %v1989
      %v1991 = vpop.xlane.xlu0 %1990
      %v1992 = vmul.f32 %v1987, %v1195
      %v1993 = vsel %vm1945, %v1992, 0.0
      %1994 = vadd.xlane.f32.xlu0 %v1993
      %v1995 = vpop.xlane.xlu0 %1994
      %v1996 = vadd.f32 %v1975, %v1991
      %v1997 = vadd.f32 %v1976, %v1995
      %s1998 = sadd.s32 %s1932, 3
      %v1999 = vstv %s1998
      %vm2000 = vcmp.eq.s32.totalorder %v1197, %v1999
      %v2001 = vsel %vm2000, %v1996, %v1980
      %v2002 = vmul.f32 %v1996, %v1192
      %v2003 = vmul.f32 %v1997, %v1193
      %v2004 = vadd.f32 %v2002, %v2003
      %v2005 = vrot.slane %v1935, 3
      %v2007 = vadd.f32 %v2004, %v2005
      %v2008 = vmax.f32 %v2007, 0.0
      %v2009 = vmul.f32 %v2008, %v1194
      %v2010 = vsel %vm1945, %v2009, 0.0
      %2011 = vadd.xlane.f32.xlu0 %v2010
      %v2012 = vpop.xlane.xlu0 %2011
      %v2013 = vmul.f32 %v2008, %v1195
      %v2014 = vsel %vm1945, %v2013, 0.0
      %2015 = vadd.xlane.f32.xlu0 %v2014
      %v2016 = vpop.xlane.xlu0 %2015
      %v2017 = vadd.f32 %v1996, %v2012
      %v2018 = vadd.f32 %v1997, %v2016
      %s2019 = sadd.s32 %s1932, 4
      %v2020 = vstv %s2019
      %vm2021 = vcmp.eq.s32.totalorder %v1197, %v2020
      %v2022 = vsel %vm2021, %v2017, %v2001
      %v2023 = vmul.f32 %v2017, %v1192
      %v2024 = vmul.f32 %v2018, %v1193
      %v2025 = vadd.f32 %v2023, %v2024
      %v2026 = vrot.slane %v1935, 4
      %v2028 = vadd.f32 %v2025, %v2026
      %v2029 = vmax.f32 %v2028, 0.0
      %v2030 = vmul.f32 %v2029, %v1194
      %v2031 = vsel %vm1945, %v2030, 0.0
      %2032 = vadd.xlane.f32.xlu0 %v2031
      %v2033 = vpop.xlane.xlu0 %2032
      %v2034 = vmul.f32 %v2029, %v1195
      %v2035 = vsel %vm1945, %v2034, 0.0
      %2036 = vadd.xlane.f32.xlu0 %v2035
      %v2037 = vpop.xlane.xlu0 %2036
      %v2038 = vadd.f32 %v2017, %v2033
      %v2039 = vadd.f32 %v2018, %v2037
      %s2040 = sadd.s32 %s1932, 5
      %v2041 = vstv %s2040
      %vm2042 = vcmp.eq.s32.totalorder %v1197, %v2041
      %v2043 = vsel %vm2042, %v2038, %v2022
      %v2044 = vmul.f32 %v2038, %v1192
      %v2045 = vmul.f32 %v2039, %v1193
      %v2046 = vadd.f32 %v2044, %v2045
      %v2047 = vrot.slane %v1935, 5
      %v2049 = vadd.f32 %v2046, %v2047
      %v2050 = vmax.f32 %v2049, 0.0
      %v2051 = vmul.f32 %v2050, %v1194
      %v2052 = vsel %vm1945, %v2051, 0.0
      %2053 = vadd.xlane.f32.xlu0 %v2052
      %v2054 = vpop.xlane.xlu0 %2053
      %v2055 = vmul.f32 %v2050, %v1195
      %v2056 = vsel %vm1945, %v2055, 0.0
      %2057 = vadd.xlane.f32.xlu0 %v2056
      %v2058 = vpop.xlane.xlu0 %2057
      %v2059 = vadd.f32 %v2038, %v2054
      %v2060 = vadd.f32 %v2039, %v2058
      %s2061 = sadd.s32 %s1932, 6
      %v2062 = vstv %s2061
      %vm2063 = vcmp.eq.s32.totalorder %v1197, %v2062
      %v2064 = vsel %vm2063, %v2059, %v2043
      %v2065 = vmul.f32 %v2059, %v1192
      %v2066 = vmul.f32 %v2060, %v1193
      %v2067 = vadd.f32 %v2065, %v2066
      %v2068 = vrot.slane %v1935, 6
      %v2070 = vadd.f32 %v2067, %v2068
      %v2071 = vmax.f32 %v2070, 0.0
      %v2072 = vmul.f32 %v2071, %v1194
      %v2073 = vsel %vm1945, %v2072, 0.0
      %2074 = vadd.xlane.f32.xlu0 %v2073
      %v2075 = vpop.xlane.xlu0 %2074
      %v2076 = vmul.f32 %v2071, %v1195
      %v2077 = vsel %vm1945, %v2076, 0.0
      %2078 = vadd.xlane.f32.xlu0 %v2077
      %v2079 = vpop.xlane.xlu0 %2078
      %v2080 = vadd.f32 %v2059, %v2075
      %v2081 = vadd.f32 %v2060, %v2079
      %s2082 = sadd.s32 %s1932, 7
      %v2083 = vstv %s2082
      %vm2084 = vcmp.eq.s32.totalorder %v1197, %v2083
      %v2085 = vsel %vm2084, %v2080, %v2064
      %v2086 = vmul.f32 %v2080, %v1192
      %v2087 = vmul.f32 %v2081, %v1193
      %v2088 = vadd.f32 %v2086, %v2087
      %v2089 = vrot.slane %v1935, 7
      %v2091 = vadd.f32 %v2088, %v2089
      %v2092 = vmax.f32 %v2091, 0.0
      %v2093 = vmul.f32 %v2092, %v1194
      %v2094 = vsel %vm1945, %v2093, 0.0
      %2095 = vadd.xlane.f32.xlu0 %v2094
      %v2096 = vpop.xlane.xlu0 %2095
      %v2097 = vmul.f32 %v2092, %v1195
      %v2098 = vsel %vm1945, %v2097, 0.0
      %2099 = vadd.xlane.f32.xlu0 %v2098
      %v2100 = vpop.xlane.xlu0 %2099
      %v2101 = vadd.f32 %v2080, %v2096
      %v2102 = vadd.f32 %v2081, %v2100
    $region58: #{tpu_custom_call.1} parent=1 // loop_footer
      %s1928 = sadd.s32 1, %s1924
    $region59: #{tpu_custom_call.1} parent=1 // loop_footer_branch
      %1923 = sbr.rel target = $region55
    $region60: #{tpu_custom_call.1} parent=1 // loop_exit
      _
    %2103 = vst [vmem:[#allocation4 + $0x4] sm:$0x1] %v1931
    loop: start=0, step=1, limit=16
    $region61: #{tpu_custom_call.1} parent=1 // loop_pre_header
      _
    $region62: #{tpu_custom_call.1} parent=1 // loop_header
      %s2105 = sphi 0, %s2109
      %p2106 = scmp.ge.s32.totalorder %s2105, 16
      %v2110 = vphi %v1929, %v2282
      %v2111 = vphi %v1930, %v2283
      %v2112 = vphi 0.0, %v2266
    $region63: #{tpu_custom_call.1} parent=1 // loop_header_branch
      %2108 = sbr.rel (%p2106) target = $region67
    $region64: #{tpu_custom_call.1} parent=1 // loop_body
      %s2113 = smul.u32 %s2105, 8
      %s2114 = sadd.s32 %s2113, 640
      %s2115 = scalar_lea.vmem [#allocation2], %s2114
      %v2116 = vld [vmem:[%s2115] sm:$0xff]
      %v2117 = vstv %s2113
      %vm2118 = vcmp.eq.s32.totalorder %v1197, %v2117
      %v2119 = vsel %vm2118, %v2110, %v2112
      %v2120 = vmul.f32 %v2110, %v1192
      %v2121 = vmul.f32 %v2111, %v1193
      %v2122 = vadd.f32 %v2120, %v2121
      %v2123 = vadd.f32 %v2122, %v2116
      %v2124 = vmax.f32 %v2123, 0.0
      %v2125 = vmul.f32 %v2124, %v1194
      %vm2126 = vcmask 1040384
      %v2127 = vsel %vm2126, %v2125, 0.0
      %2128 = vadd.xlane.f32.xlu0 %v2127
      %v2129 = vpop.xlane.xlu0 %2128
      %v2130 = vmul.f32 %v2124, %v1195
      %v2131 = vsel %vm2126, %v2130, 0.0
      %2132 = vadd.xlane.f32.xlu0 %v2131
      %v2133 = vpop.xlane.xlu0 %2132
      %v2134 = vadd.f32 %v2110, %v2129
      %v2135 = vadd.f32 %v2111, %v2133
      %s2136 = sadd.s32 %s2113, 1
      %v2137 = vstv %s2136
      %vm2138 = vcmp.eq.s32.totalorder %v1197, %v2137
      %v2139 = vsel %vm2138, %v2134, %v2119
      %v2140 = vmul.f32 %v2134, %v1192
      %v2141 = vmul.f32 %v2135, %v1193
      %v2142 = vadd.f32 %v2140, %v2141
      %v2144 = vrot.slane %v2116, 1
      %v2146 = vadd.f32 %v2142, %v2144
      %v2147 = vmax.f32 %v2146, 0.0
      %v2148 = vmul.f32 %v2147, %v1194
      %v2149 = vsel %vm2126, %v2148, 0.0
      %2150 = vadd.xlane.f32.xlu0 %v2149
      %v2151 = vpop.xlane.xlu0 %2150
      %v2152 = vmul.f32 %v2147, %v1195
      %v2153 = vsel %vm2126, %v2152, 0.0
      %2154 = vadd.xlane.f32.xlu0 %v2153
      %v2155 = vpop.xlane.xlu0 %2154
      %v2156 = vadd.f32 %v2134, %v2151
      %v2157 = vadd.f32 %v2135, %v2155
      %s2158 = sadd.s32 %s2113, 2
      %v2159 = vstv %s2158
      %vm2160 = vcmp.eq.s32.totalorder %v1197, %v2159
      %v2161 = vsel %vm2160, %v2156, %v2139
      %v2162 = vmul.f32 %v2156, %v1192
      %v2163 = vmul.f32 %v2157, %v1193
      %v2164 = vadd.f32 %v2162, %v2163
      %v2165 = vrot.slane %v2116, 2
      %v2167 = vadd.f32 %v2164, %v2165
      %v2168 = vmax.f32 %v2167, 0.0
      %v2169 = vmul.f32 %v2168, %v1194
      %v2170 = vsel %vm2126, %v2169, 0.0
      %2171 = vadd.xlane.f32.xlu0 %v2170
      %v2172 = vpop.xlane.xlu0 %2171
      %v2173 = vmul.f32 %v2168, %v1195
      %v2174 = vsel %vm2126, %v2173, 0.0
      %2175 = vadd.xlane.f32.xlu0 %v2174
      %v2176 = vpop.xlane.xlu0 %2175
      %v2177 = vadd.f32 %v2156, %v2172
      %v2178 = vadd.f32 %v2157, %v2176
      %s2179 = sadd.s32 %s2113, 3
      %v2180 = vstv %s2179
      %vm2181 = vcmp.eq.s32.totalorder %v1197, %v2180
      %v2182 = vsel %vm2181, %v2177, %v2161
      %v2183 = vmul.f32 %v2177, %v1192
      %v2184 = vmul.f32 %v2178, %v1193
      %v2185 = vadd.f32 %v2183, %v2184
      %v2186 = vrot.slane %v2116, 3
      %v2188 = vadd.f32 %v2185, %v2186
      %v2189 = vmax.f32 %v2188, 0.0
      %v2190 = vmul.f32 %v2189, %v1194
      %v2191 = vsel %vm2126, %v2190, 0.0
      %2192 = vadd.xlane.f32.xlu0 %v2191
      %v2193 = vpop.xlane.xlu0 %2192
      %v2194 = vmul.f32 %v2189, %v1195
      %v2195 = vsel %vm2126, %v2194, 0.0
      %2196 = vadd.xlane.f32.xlu0 %v2195
      %v2197 = vpop.xlane.xlu0 %2196
      %v2198 = vadd.f32 %v2177, %v2193
      %v2199 = vadd.f32 %v2178, %v2197
      %s2200 = sadd.s32 %s2113, 4
      %v2201 = vstv %s2200
      %vm2202 = vcmp.eq.s32.totalorder %v1197, %v2201
      %v2203 = vsel %vm2202, %v2198, %v2182
      %v2204 = vmul.f32 %v2198, %v1192
      %v2205 = vmul.f32 %v2199, %v1193
      %v2206 = vadd.f32 %v2204, %v2205
      %v2207 = vrot.slane %v2116, 4
      %v2209 = vadd.f32 %v2206, %v2207
      %v2210 = vmax.f32 %v2209, 0.0
      %v2211 = vmul.f32 %v2210, %v1194
      %v2212 = vsel %vm2126, %v2211, 0.0
      %2213 = vadd.xlane.f32.xlu0 %v2212
      %v2214 = vpop.xlane.xlu0 %2213
      %v2215 = vmul.f32 %v2210, %v1195
      %v2216 = vsel %vm2126, %v2215, 0.0
      %2217 = vadd.xlane.f32.xlu0 %v2216
      %v2218 = vpop.xlane.xlu0 %2217
      %v2219 = vadd.f32 %v2198, %v2214
      %v2220 = vadd.f32 %v2199, %v2218
      %s2221 = sadd.s32 %s2113, 5
      %v2222 = vstv %s2221
      %vm2223 = vcmp.eq.s32.totalorder %v1197, %v2222
      %v2224 = vsel %vm2223, %v2219, %v2203
      %v2225 = vmul.f32 %v2219, %v1192
      %v2226 = vmul.f32 %v2220, %v1193
      %v2227 = vadd.f32 %v2225, %v2226
      %v2228 = vrot.slane %v2116, 5
      %v2230 = vadd.f32 %v2227, %v2228
      %v2231 = vmax.f32 %v2230, 0.0
      %v2232 = vmul.f32 %v2231, %v1194
      %v2233 = vsel %vm2126, %v2232, 0.0
      %2234 = vadd.xlane.f32.xlu0 %v2233
      %v2235 = vpop.xlane.xlu0 %2234
      %v2236 = vmul.f32 %v2231, %v1195
      %v2237 = vsel %vm2126, %v2236, 0.0
      %2238 = vadd.xlane.f32.xlu0 %v2237
      %v2239 = vpop.xlane.xlu0 %2238
      %v2240 = vadd.f32 %v2219, %v2235
      %v2241 = vadd.f32 %v2220, %v2239
      %s2242 = sadd.s32 %s2113, 6
      %v2243 = vstv %s2242
      %vm2244 = vcmp.eq.s32.totalorder %v1197, %v2243
      %v2245 = vsel %vm2244, %v2240, %v2224
      %v2246 = vmul.f32 %v2240, %v1192
      %v2247 = vmul.f32 %v2241, %v1193
      %v2248 = vadd.f32 %v2246, %v2247
      %v2249 = vrot.slane %v2116, 6
      %v2251 = vadd.f32 %v2248, %v2249
      %v2252 = vmax.f32 %v2251, 0.0
      %v2253 = vmul.f32 %v2252, %v1194
      %v2254 = vsel %vm2126, %v2253, 0.0
      %2255 = vadd.xlane.f32.xlu0 %v2254
      %v2256 = vpop.xlane.xlu0 %2255
      %v2257 = vmul.f32 %v2252, %v1195
      %v2258 = vsel %vm2126, %v2257, 0.0
      %2259 = vadd.xlane.f32.xlu0 %v2258
      %v2260 = vpop.xlane.xlu0 %2259
      %v2261 = vadd.f32 %v2240, %v2256
      %v2262 = vadd.f32 %v2241, %v2260
      %s2263 = sadd.s32 %s2113, 7
      %v2264 = vstv %s2263
      %vm2265 = vcmp.eq.s32.totalorder %v1197, %v2264
      %v2266 = vsel %vm2265, %v2261, %v2245
      %v2267 = vmul.f32 %v2261, %v1192
      %v2268 = vmul.f32 %v2262, %v1193
      %v2269 = vadd.f32 %v2267, %v2268
      %v2270 = vrot.slane %v2116, 7
      %v2272 = vadd.f32 %v2269, %v2270
      %v2273 = vmax.f32 %v2272, 0.0
      %v2274 = vmul.f32 %v2273, %v1194
      %v2275 = vsel %vm2126, %v2274, 0.0
      %2276 = vadd.xlane.f32.xlu0 %v2275
      %v2277 = vpop.xlane.xlu0 %2276
      %v2278 = vmul.f32 %v2273, %v1195
      %v2279 = vsel %vm2126, %v2278, 0.0
      %2280 = vadd.xlane.f32.xlu0 %v2279
      %v2281 = vpop.xlane.xlu0 %2280
      %v2282 = vadd.f32 %v2261, %v2277
      %v2283 = vadd.f32 %v2262, %v2281
    $region65: #{tpu_custom_call.1} parent=1 // loop_footer
      %s2109 = sadd.s32 1, %s2105
    $region66: #{tpu_custom_call.1} parent=1 // loop_footer_branch
      %2104 = sbr.rel target = $region62
    $region67: #{tpu_custom_call.1} parent=1 // loop_exit
      _
    %2284 = vst [vmem:[#allocation4 + $0x5] sm:$0x1] %v2112
    loop: start=0, step=1, limit=16
    $region68: #{tpu_custom_call.1} parent=1 // loop_pre_header
      _
    $region69: #{tpu_custom_call.1} parent=1 // loop_header
      %s2286 = sphi 0, %s2290
      %p2287 = scmp.ge.s32.totalorder %s2286, 16
      %v2291 = vphi %v2110, %v2463
      %v2292 = vphi %v2111, %v2464
      %v2293 = vphi 0.0, %v2447
    $region70: #{tpu_custom_call.1} parent=1 // loop_header_branch
      %2289 = sbr.rel (%p2287) target = $region74
    $region71: #{tpu_custom_call.1} parent=1 // loop_body
      %s2294 = smul.u32 %s2286, 8
      %s2295 = sadd.s32 %s2294, 768
      %s2296 = scalar_lea.vmem [#allocation2], %s2295
      %v2297 = vld [vmem:[%s2296] sm:$0xff]
      %v2298 = vstv %s2294
      %vm2299 = vcmp.eq.s32.totalorder %v1197, %v2298
      %v2300 = vsel %vm2299, %v2291, %v2293
      %v2301 = vmul.f32 %v2291, %v1192
      %v2302 = vmul.f32 %v2292, %v1193
      %v2303 = vadd.f32 %v2301, %v2302
      %v2304 = vadd.f32 %v2303, %v2297
      %v2305 = vmax.f32 %v2304, 0.0
      %v2306 = vmul.f32 %v2305, %v1194
      %vm2307 = vcmask 1040384
      %v2308 = vsel %vm2307, %v2306, 0.0
      %2309 = vadd.xlane.f32.xlu0 %v2308
      %v2310 = vpop.xlane.xlu0 %2309
      %v2311 = vmul.f32 %v2305, %v1195
      %v2312 = vsel %vm2307, %v2311, 0.0
      %2313 = vadd.xlane.f32.xlu0 %v2312
      %v2314 = vpop.xlane.xlu0 %2313
      %v2315 = vadd.f32 %v2291, %v2310
      %v2316 = vadd.f32 %v2292, %v2314
      %s2317 = sadd.s32 %s2294, 1
      %v2318 = vstv %s2317
      %vm2319 = vcmp.eq.s32.totalorder %v1197, %v2318
      %v2320 = vsel %vm2319, %v2315, %v2300
      %v2321 = vmul.f32 %v2315, %v1192
      %v2322 = vmul.f32 %v2316, %v1193
      %v2323 = vadd.f32 %v2321, %v2322
      %v2325 = vrot.slane %v2297, 1
      %v2327 = vadd.f32 %v2323, %v2325
      %v2328 = vmax.f32 %v2327, 0.0
      %v2329 = vmul.f32 %v2328, %v1194
      %v2330 = vsel %vm2307, %v2329, 0.0
      %2331 = vadd.xlane.f32.xlu0 %v2330
      %v2332 = vpop.xlane.xlu0 %2331
      %v2333 = vmul.f32 %v2328, %v1195
      %v2334 = vsel %vm2307, %v2333, 0.0
      %2335 = vadd.xlane.f32.xlu0 %v2334
      %v2336 = vpop.xlane.xlu0 %2335
      %v2337 = vadd.f32 %v2315, %v2332
      %v2338 = vadd.f32 %v2316, %v2336
      %s2339 = sadd.s32 %s2294, 2
      %v2340 = vstv %s2339
      %vm2341 = vcmp.eq.s32.totalorder %v1197, %v2340
      %v2342 = vsel %vm2341, %v2337, %v2320
      %v2343 = vmul.f32 %v2337, %v1192
      %v2344 = vmul.f32 %v2338, %v1193
      %v2345 = vadd.f32 %v2343, %v2344
      %v2346 = vrot.slane %v2297, 2
      %v2348 = vadd.f32 %v2345, %v2346
      %v2349 = vmax.f32 %v2348, 0.0
      %v2350 = vmul.f32 %v2349, %v1194
      %v2351 = vsel %vm2307, %v2350, 0.0
      %2352 = vadd.xlane.f32.xlu0 %v2351
      %v2353 = vpop.xlane.xlu0 %2352
      %v2354 = vmul.f32 %v2349, %v1195
      %v2355 = vsel %vm2307, %v2354, 0.0
      %2356 = vadd.xlane.f32.xlu0 %v2355
      %v2357 = vpop.xlane.xlu0 %2356
      %v2358 = vadd.f32 %v2337, %v2353
      %v2359 = vadd.f32 %v2338, %v2357
      %s2360 = sadd.s32 %s2294, 3
      %v2361 = vstv %s2360
      %vm2362 = vcmp.eq.s32.totalorder %v1197, %v2361
      %v2363 = vsel %vm2362, %v2358, %v2342
      %v2364 = vmul.f32 %v2358, %v1192
      %v2365 = vmul.f32 %v2359, %v1193
      %v2366 = vadd.f32 %v2364, %v2365
      %v2367 = vrot.slane %v2297, 3
      %v2369 = vadd.f32 %v2366, %v2367
      %v2370 = vmax.f32 %v2369, 0.0
      %v2371 = vmul.f32 %v2370, %v1194
      %v2372 = vsel %vm2307, %v2371, 0.0
      %2373 = vadd.xlane.f32.xlu0 %v2372
      %v2374 = vpop.xlane.xlu0 %2373
      %v2375 = vmul.f32 %v2370, %v1195
      %v2376 = vsel %vm2307, %v2375, 0.0
      %2377 = vadd.xlane.f32.xlu0 %v2376
      %v2378 = vpop.xlane.xlu0 %2377
      %v2379 = vadd.f32 %v2358, %v2374
      %v2380 = vadd.f32 %v2359, %v2378
      %s2381 = sadd.s32 %s2294, 4
      %v2382 = vstv %s2381
      %vm2383 = vcmp.eq.s32.totalorder %v1197, %v2382
      %v2384 = vsel %vm2383, %v2379, %v2363
      %v2385 = vmul.f32 %v2379, %v1192
      %v2386 = vmul.f32 %v2380, %v1193
      %v2387 = vadd.f32 %v2385, %v2386
      %v2388 = vrot.slane %v2297, 4
      %v2390 = vadd.f32 %v2387, %v2388
      %v2391 = vmax.f32 %v2390, 0.0
      %v2392 = vmul.f32 %v2391, %v1194
      %v2393 = vsel %vm2307, %v2392, 0.0
      %2394 = vadd.xlane.f32.xlu0 %v2393
      %v2395 = vpop.xlane.xlu0 %2394
      %v2396 = vmul.f32 %v2391, %v1195
      %v2397 = vsel %vm2307, %v2396, 0.0
      %2398 = vadd.xlane.f32.xlu0 %v2397
      %v2399 = vpop.xlane.xlu0 %2398
      %v2400 = vadd.f32 %v2379, %v2395
      %v2401 = vadd.f32 %v2380, %v2399
      %s2402 = sadd.s32 %s2294, 5
      %v2403 = vstv %s2402
      %vm2404 = vcmp.eq.s32.totalorder %v1197, %v2403
      %v2405 = vsel %vm2404, %v2400, %v2384
      %v2406 = vmul.f32 %v2400, %v1192
      %v2407 = vmul.f32 %v2401, %v1193
      %v2408 = vadd.f32 %v2406, %v2407
      %v2409 = vrot.slane %v2297, 5
      %v2411 = vadd.f32 %v2408, %v2409
      %v2412 = vmax.f32 %v2411, 0.0
      %v2413 = vmul.f32 %v2412, %v1194
      %v2414 = vsel %vm2307, %v2413, 0.0
      %2415 = vadd.xlane.f32.xlu0 %v2414
      %v2416 = vpop.xlane.xlu0 %2415
      %v2417 = vmul.f32 %v2412, %v1195
      %v2418 = vsel %vm2307, %v2417, 0.0
      %2419 = vadd.xlane.f32.xlu0 %v2418
      %v2420 = vpop.xlane.xlu0 %2419
      %v2421 = vadd.f32 %v2400, %v2416
      %v2422 = vadd.f32 %v2401, %v2420
      %s2423 = sadd.s32 %s2294, 6
      %v2424 = vstv %s2423
      %vm2425 = vcmp.eq.s32.totalorder %v1197, %v2424
      %v2426 = vsel %vm2425, %v2421, %v2405
      %v2427 = vmul.f32 %v2421, %v1192
      %v2428 = vmul.f32 %v2422, %v1193
      %v2429 = vadd.f32 %v2427, %v2428
      %v2430 = vrot.slane %v2297, 6
      %v2432 = vadd.f32 %v2429, %v2430
      %v2433 = vmax.f32 %v2432, 0.0
      %v2434 = vmul.f32 %v2433, %v1194
      %v2435 = vsel %vm2307, %v2434, 0.0
      %2436 = vadd.xlane.f32.xlu0 %v2435
      %v2437 = vpop.xlane.xlu0 %2436
      %v2438 = vmul.f32 %v2433, %v1195
      %v2439 = vsel %vm2307, %v2438, 0.0
      %2440 = vadd.xlane.f32.xlu0 %v2439
      %v2441 = vpop.xlane.xlu0 %2440
      %v2442 = vadd.f32 %v2421, %v2437
      %v2443 = vadd.f32 %v2422, %v2441
      %s2444 = sadd.s32 %s2294, 7
      %v2445 = vstv %s2444
      %vm2446 = vcmp.eq.s32.totalorder %v1197, %v2445
      %v2447 = vsel %vm2446, %v2442, %v2426
      %v2448 = vmul.f32 %v2442, %v1192
      %v2449 = vmul.f32 %v2443, %v1193
      %v2450 = vadd.f32 %v2448, %v2449
      %v2451 = vrot.slane %v2297, 7
      %v2453 = vadd.f32 %v2450, %v2451
      %v2454 = vmax.f32 %v2453, 0.0
      %v2455 = vmul.f32 %v2454, %v1194
      %v2456 = vsel %vm2307, %v2455, 0.0
      %2457 = vadd.xlane.f32.xlu0 %v2456
      %v2458 = vpop.xlane.xlu0 %2457
      %v2459 = vmul.f32 %v2454, %v1195
      %v2460 = vsel %vm2307, %v2459, 0.0
      %2461 = vadd.xlane.f32.xlu0 %v2460
      %v2462 = vpop.xlane.xlu0 %2461
      %v2463 = vadd.f32 %v2442, %v2458
      %v2464 = vadd.f32 %v2443, %v2462
    $region72: #{tpu_custom_call.1} parent=1 // loop_footer
      %s2290 = sadd.s32 1, %s2286
    $region73: #{tpu_custom_call.1} parent=1 // loop_footer_branch
      %2285 = sbr.rel target = $region69
    $region74: #{tpu_custom_call.1} parent=1 // loop_exit
      _
    %2465 = vst [vmem:[#allocation4 + $0x6] sm:$0x1] %v2293
    loop: start=0, step=1, limit=16
    $region75: #{tpu_custom_call.1} parent=1 // loop_pre_header
      _
    $region76: #{tpu_custom_call.1} parent=1 // loop_header
      %s2467 = sphi 0, %s2471
      %p2468 = scmp.ge.s32.totalorder %s2467, 16
      %v2472 = vphi %v2291, %v2644
      %v2473 = vphi %v2292, %v2645
      %v2474 = vphi 0.0, %v2628
    $region77: #{tpu_custom_call.1} parent=1 // loop_header_branch
      %2470 = sbr.rel (%p2468) target = $region81
    $region78: #{tpu_custom_call.1} parent=1 // loop_body
      %s2475 = smul.u32 %s2467, 8
      %s2476 = sadd.s32 %s2475, 896
      %s2477 = scalar_lea.vmem [#allocation2], %s2476
      %v2478 = vld [vmem:[%s2477] sm:$0xff]
      %v2479 = vstv %s2475
      %vm2480 = vcmp.eq.s32.totalorder %v1197, %v2479
      %v2481 = vsel %vm2480, %v2472, %v2474
      %v2482 = vmul.f32 %v2472, %v1192
      %v2483 = vmul.f32 %v2473, %v1193
      %v2484 = vadd.f32 %v2482, %v2483
      %v2485 = vadd.f32 %v2484, %v2478
      %v2486 = vmax.f32 %v2485, 0.0
      %v2487 = vmul.f32 %v2486, %v1194
      %vm2488 = vcmask 1040384
      %v2489 = vsel %vm2488, %v2487, 0.0
      %2490 = vadd.xlane.f32.xlu0 %v2489
      %v2491 = vpop.xlane.xlu0 %2490
      %v2492 = vmul.f32 %v2486, %v1195
      %v2493 = vsel %vm2488, %v2492, 0.0
      %2494 = vadd.xlane.f32.xlu0 %v2493
      %v2495 = vpop.xlane.xlu0 %2494
      %v2496 = vadd.f32 %v2472, %v2491
      %v2497 = vadd.f32 %v2473, %v2495
      %s2498 = sadd.s32 %s2475, 1
      %v2499 = vstv %s2498
      %vm2500 = vcmp.eq.s32.totalorder %v1197, %v2499
      %v2501 = vsel %vm2500, %v2496, %v2481
      %v2502 = vmul.f32 %v2496, %v1192
      %v2503 = vmul.f32 %v2497, %v1193
      %v2504 = vadd.f32 %v2502, %v2503
      %v2506 = vrot.slane %v2478, 1
      %v2508 = vadd.f32 %v2504, %v2506
      %v2509 = vmax.f32 %v2508, 0.0
      %v2510 = vmul.f32 %v2509, %v1194
      %v2511 = vsel %vm2488, %v2510, 0.0
      %2512 = vadd.xlane.f32.xlu0 %v2511
      %v2513 = vpop.xlane.xlu0 %2512
      %v2514 = vmul.f32 %v2509, %v1195
      %v2515 = vsel %vm2488, %v2514, 0.0
      %2516 = vadd.xlane.f32.xlu0 %v2515
      %v2517 = vpop.xlane.xlu0 %2516
      %v2518 = vadd.f32 %v2496, %v2513
      %v2519 = vadd.f32 %v2497, %v2517
      %s2520 = sadd.s32 %s2475, 2
      %v2521 = vstv %s2520
      %vm2522 = vcmp.eq.s32.totalorder %v1197, %v2521
      %v2523 = vsel %vm2522, %v2518, %v2501
      %v2524 = vmul.f32 %v2518, %v1192
      %v2525 = vmul.f32 %v2519, %v1193
      %v2526 = vadd.f32 %v2524, %v2525
      %v2527 = vrot.slane %v2478, 2
      %v2529 = vadd.f32 %v2526, %v2527
      %v2530 = vmax.f32 %v2529, 0.0
      %v2531 = vmul.f32 %v2530, %v1194
      %v2532 = vsel %vm2488, %v2531, 0.0
      %2533 = vadd.xlane.f32.xlu0 %v2532
      %v2534 = vpop.xlane.xlu0 %2533
      %v2535 = vmul.f32 %v2530, %v1195
      %v2536 = vsel %vm2488, %v2535, 0.0
      %2537 = vadd.xlane.f32.xlu0 %v2536
      %v2538 = vpop.xlane.xlu0 %2537
      %v2539 = vadd.f32 %v2518, %v2534
      %v2540 = vadd.f32 %v2519, %v2538
      %s2541 = sadd.s32 %s2475, 3
      %v2542 = vstv %s2541
      %vm2543 = vcmp.eq.s32.totalorder %v1197, %v2542
      %v2544 = vsel %vm2543, %v2539, %v2523
      %v2545 = vmul.f32 %v2539, %v1192
      %v2546 = vmul.f32 %v2540, %v1193
      %v2547 = vadd.f32 %v2545, %v2546
      %v2548 = vrot.slane %v2478, 3
      %v2550 = vadd.f32 %v2547, %v2548
      %v2551 = vmax.f32 %v2550, 0.0
      %v2552 = vmul.f32 %v2551, %v1194
      %v2553 = vsel %vm2488, %v2552, 0.0
      %2554 = vadd.xlane.f32.xlu0 %v2553
      %v2555 = vpop.xlane.xlu0 %2554
      %v2556 = vmul.f32 %v2551, %v1195
      %v2557 = vsel %vm2488, %v2556, 0.0
      %2558 = vadd.xlane.f32.xlu0 %v2557
      %v2559 = vpop.xlane.xlu0 %2558
      %v2560 = vadd.f32 %v2539, %v2555
      %v2561 = vadd.f32 %v2540, %v2559
      %s2562 = sadd.s32 %s2475, 4
      %v2563 = vstv %s2562
      %vm2564 = vcmp.eq.s32.totalorder %v1197, %v2563
      %v2565 = vsel %vm2564, %v2560, %v2544
      %v2566 = vmul.f32 %v2560, %v1192
      %v2567 = vmul.f32 %v2561, %v1193
      %v2568 = vadd.f32 %v2566, %v2567
      %v2569 = vrot.slane %v2478, 4
      %v2571 = vadd.f32 %v2568, %v2569
      %v2572 = vmax.f32 %v2571, 0.0
      %v2573 = vmul.f32 %v2572, %v1194
      %v2574 = vsel %vm2488, %v2573, 0.0
      %2575 = vadd.xlane.f32.xlu0 %v2574
      %v2576 = vpop.xlane.xlu0 %2575
      %v2577 = vmul.f32 %v2572, %v1195
      %v2578 = vsel %vm2488, %v2577, 0.0
      %2579 = vadd.xlane.f32.xlu0 %v2578
      %v2580 = vpop.xlane.xlu0 %2579
      %v2581 = vadd.f32 %v2560, %v2576
      %v2582 = vadd.f32 %v2561, %v2580
      %s2583 = sadd.s32 %s2475, 5
      %v2584 = vstv %s2583
      %vm2585 = vcmp.eq.s32.totalorder %v1197, %v2584
      %v2586 = vsel %vm2585, %v2581, %v2565
      %v2587 = vmul.f32 %v2581, %v1192
      %v2588 = vmul.f32 %v2582, %v1193
      %v2589 = vadd.f32 %v2587, %v2588
      %v2590 = vrot.slane %v2478, 5
      %v2592 = vadd.f32 %v2589, %v2590
      %v2593 = vmax.f32 %v2592, 0.0
      %v2594 = vmul.f32 %v2593, %v1194
      %v2595 = vsel %vm2488, %v2594, 0.0
      %2596 = vadd.xlane.f32.xlu0 %v2595
      %v2597 = vpop.xlane.xlu0 %2596
      %v2598 = vmul.f32 %v2593, %v1195
      %v2599 = vsel %vm2488, %v2598, 0.0
      %2600 = vadd.xlane.f32.xlu0 %v2599
      %v2601 = vpop.xlane.xlu0 %2600
      %v2602 = vadd.f32 %v2581, %v2597
      %v2603 = vadd.f32 %v2582, %v2601
      %s2604 = sadd.s32 %s2475, 6
      %v2605 = vstv %s2604
      %vm2606 = vcmp.eq.s32.totalorder %v1197, %v2605
      %v2607 = vsel %vm2606, %v2602, %v2586
      %v2608 = vmul.f32 %v2602, %v1192
      %v2609 = vmul.f32 %v2603, %v1193
      %v2610 = vadd.f32 %v2608, %v2609
      %v2611 = vrot.slane %v2478, 6
      %v2613 = vadd.f32 %v2610, %v2611
      %v2614 = vmax.f32 %v2613, 0.0
      %v2615 = vmul.f32 %v2614, %v1194
      %v2616 = vsel %vm2488, %v2615, 0.0
      %2617 = vadd.xlane.f32.xlu0 %v2616
      %v2618 = vpop.xlane.xlu0 %2617
      %v2619 = vmul.f32 %v2614, %v1195
      %v2620 = vsel %vm2488, %v2619, 0.0
      %2621 = vadd.xlane.f32.xlu0 %v2620
      %v2622 = vpop.xlane.xlu0 %2621
      %v2623 = vadd.f32 %v2602, %v2618
      %v2624 = vadd.f32 %v2603, %v2622
      %s2625 = sadd.s32 %s2475, 7
      %v2626 = vstv %s2625
      %vm2627 = vcmp.eq.s32.totalorder %v1197, %v2626
      %v2628 = vsel %vm2627, %v2623, %v2607
      %v2629 = vmul.f32 %v2623, %v1192
      %v2630 = vmul.f32 %v2624, %v1193
      %v2631 = vadd.f32 %v2629, %v2630
      %v2632 = vrot.slane %v2478, 7
      %v2634 = vadd.f32 %v2631, %v2632
      %v2635 = vmax.f32 %v2634, 0.0
      %v2636 = vmul.f32 %v2635, %v1194
      %v2637 = vsel %vm2488, %v2636, 0.0
      %2638 = vadd.xlane.f32.xlu0 %v2637
      %v2639 = vpop.xlane.xlu0 %2638
      %v2640 = vmul.f32 %v2635, %v1195
      %v2641 = vsel %vm2488, %v2640, 0.0
      %2642 = vadd.xlane.f32.xlu0 %v2641
      %v2643 = vpop.xlane.xlu0 %2642
      %v2644 = vadd.f32 %v2623, %v2639
      %v2645 = vadd.f32 %v2624, %v2643
    $region79: #{tpu_custom_call.1} parent=1 // loop_footer
      %s2471 = sadd.s32 1, %s2467
    $region80: #{tpu_custom_call.1} parent=1 // loop_footer_branch
      %2466 = sbr.rel target = $region76
    $region81: #{tpu_custom_call.1} parent=1 // loop_exit
      _
    %2646 = vst [vmem:[#allocation4 + $0x7] sm:$0x1] %v2474
    %2647 = vst [vmem:[#allocation3] sm:$0x1] %v2472
    %2648 = vst [vmem:[#allocation3 + $0x1] sm:$0x1] %v2473
    // Predicated region
    $region82: #{tpu_custom_call.1} parent=1 // pred_check
      _
    $region83: #{tpu_custom_call.1} parent=1 // pred_check_branch
      %2650 = sbr.rel (0) target = $region85
    $region84: #{tpu_custom_call.1} parent=1 // pred_region
      %s2652 = ssub.s32 128, 128
      %2653 = vsyncadd [#allocation5], %s2652
      %s2655 = sshll.u32 [#allocation4], 4
      %s2656 = int_to_ptr.vmem [resolvable:$true] %s2655
      %2658 = dma.vmem_to_hbm [thread:$0]  %s2656, 128, %s5, [#allocation5]
    $region85: #{tpu_custom_call.1} parent=1 // pred_fallthru
      _
    // Predicated region
    $region86: #{tpu_custom_call.1} parent=1 // pred_check
      _
    $region87: #{tpu_custom_call.1} parent=1 // pred_check_branch
      %2660 = sbr.rel (0) target = $region89
    $region88: #{tpu_custom_call.1} parent=1 // pred_region
      %2661 = dma.done [#allocation5], 128
    $region89: #{tpu_custom_call.1} parent=1 // pred_fallthru
      _
    %2662 = vsyncpa [#allocation5], 1

</llo_original>
